<compile_context>
chip_gen: v7x
topology: tpu7x:2x2x1
jax: 0.10.0
libtpu: 0.0.40
codegen_flags: <defaults>
</compile_context>

<pallas_src>
import functools
import math

import jax
import jax.numpy as jnp
from jax.experimental import pallas as pl
from jax.experimental.pallas import tpu as pltpu

PATCH = 8          # fixed by the module (self.patch_size = 8)
NUM_HEADS = 16     # fixed by the module (self.num_heads = 16)
LN_EPS = 1e-5      # torch.nn.LayerNorm default


# ---------------------------------------------------------------- helpers ---
def _layernorm(x, g, b):
    """torch.nn.LayerNorm over the last axis (biased variance, eps inside sqrt)."""
    mu = jnp.mean(x, axis=-1, keepdims=True)
    xc = x - mu
    var = jnp.mean(xc * xc, axis=-1, keepdims=True)
    return xc * jax.lax.rsqrt(var + LN_EPS) * g + b


def _gelu_exact(x):
    """torch.nn.GELU() default = exact erf-based GELU (kept in f32)."""
    return 0.5 * x * (1.0 + jax.lax.erf(x * (1.0 / math.sqrt(2.0))))


# ----------------------------------------------------------------- kernel ---
def vit_kernel(xp_ref, bias_ref, w_in_ref, b_in_ref,
               ln1g_ref, ln1b_ref, wqkv_ref, wout_ref, bout_ref,
               ln2g_ref, ln2b_ref, w1_ref, b1_ref, w2_ref, b2_ref,
               ng_ref, nb_ref,
               o_ref, acc_ref, *, dim, num_heads):
    """Fused ViT: patch-embed (l==0) + one transformer block per grid step
    (depth axis, innermost, 'arbitrary') + final LayerNorm (l==last).
    Activation stays resident in the f32 VMEM scratch `acc_ref`."""
    l = pl.program_id(1)
    depth = pl.num_programs(1)
    dh = dim // num_heads
    scale = dh ** (-0.5)
    bf16 = jnp.bfloat16

    # ----------------------- patch embedding (only on the first layer step) -
    @pl.when(l == 0)
    def _():
        xp = xp_ref[0].astype(bf16)                                  # (N, P) bf16
        acc_ref[...] = (jnp.dot(xp, w_in_ref[...],
                                preferred_element_type=jnp.float32)
                        + b_in_ref[...])

    x = acc_ref[...]                                                 # (N, dim) f32

    # ---------------- Attention (pre-LN, qkv no bias, additive attn bias) ---
    xn = _layernorm(x, ln1g_ref[0], ln1b_ref[0]).astype(bf16)
    qkv = jnp.dot(xn, wqkv_ref[0],
                  preferred_element_type=jnp.float32)                # (N, 3*dim) f32

    # Pre-scale q (cheaper than scaling the (N, N) scores).
    q_all = (qkv[:, 0:dim] * scale).astype(bf16)
    k_all = qkv[:, dim:2 * dim].astype(bf16)
    v_all = qkv[:, 2 * dim:3 * dim].astype(bf16)

    # Per-head score/softmax/value (inherently small-K per-head matmuls), then
    # a SINGLE (N, dim) @ (dim, dim) output projection.
    ctx_parts = []
    for h in range(num_heads):
        sl = slice(h * dh, (h + 1) * dh)
        q_h = q_all[:, sl]                                           # (N, dh)
        k_h = k_all[:, sl]
        v_h = v_all[:, sl]

        s_h = jax.lax.dot_general(q_h, k_h, (((1,), (1,)), ((), ())),
                                  preferred_element_type=jnp.float32)  # (N, N) f32
        s_h = s_h + bias_ref[0, h]                                   # rel-pos bias

        m = jnp.max(s_h, axis=-1, keepdims=True)                     # softmax(-1)
        e = jnp.exp(s_h - m)
        p_h = e * pl.reciprocal(jnp.sum(e, axis=-1, keepdims=True), approx=True)

        ctx_parts.append(jnp.dot(p_h.astype(bf16), v_h,
                                 preferred_element_type=jnp.float32))  # (N, dh)

    ctx = jnp.concatenate(ctx_parts, axis=-1).astype(bf16)           # (N, dim)
    attn_out = (jnp.dot(ctx, wout_ref[0],
                        preferred_element_type=jnp.float32)
                + bout_ref[0])
    x = x + attn_out                                                 # residual

    # ---------------- FFN (pre-LN, Linear -> GELU -> Linear) ----------------
    xn2 = _layernorm(x, ln2g_ref[0], ln2b_ref[0]).astype(bf16)
    hdd = jnp.dot(xn2, w1_ref[0], preferred_element_type=jnp.float32) + b1_ref[0]
    hdd = _gelu_exact(hdd).astype(bf16)                              # (N, 4*dim)
    ff = jnp.dot(hdd, w2_ref[0], preferred_element_type=jnp.float32) + b2_ref[0]
    x = x + ff                                                       # residual

    acc_ref[...] = x

    # ----------------------- final LayerNorm + writeback on the last layer --
    @pl.when(l == depth - 1)
    def _():
        o_ref[0] = _layernorm(x, ng_ref[...], nb_ref[...])

    # TODO(synk): for v7x with tiny batch, add a token-tile "parallel" grid
    # axis (flash-style online softmax) so both TensorCores stay busy.


# ------------------------------------------------------------- pallas_call --
def vit_forward(imgs, attn_bias, params, *, dim, depth, in_channels):
    """imgs: (B, C, H, W) NCHW float32; attn_bias: (B, 16, N, N) float32."""
    B, C, H, W = imgs.shape
    assert C == in_channels
    assert dim % NUM_HEADS == 0
    ph, pw = H // PATCH, W // PATCH
    N = ph * pw
    P = PATCH * PATCH * C
    Hh = NUM_HEADS

    # glue: 'b c (h i) (w j) -> b (h w) (c i j)'; ship patches as bf16 (matmul
    # input dtype) to halve the per-batch patch DMA bytes.
    xp = imgs.reshape(B, C, ph, PATCH, pw, PATCH)
    xp = xp.transpose(0, 2, 4, 1, 3, 5).reshape(B, N, P).astype(jnp.bfloat16)

    def const_spec(shape):
        zeros = (0,) * len(shape)
        return pl.BlockSpec(shape, lambda b, l, z=zeros: z)

    def layer_spec(tail):
        zeros = (0,) * len(tail)
        return pl.BlockSpec((1,) + tail, lambda b, l, z=zeros: (l,) + z)

    kern = functools.partial(vit_kernel, dim=dim, num_heads=Hh)

    return pl.pallas_call(
        kern,
        out_shape=jax.ShapeDtypeStruct((B, N, dim), jnp.float32),
        grid=(B, depth),
        in_specs=[
            pl.BlockSpec((1, N, P), lambda b, l: (b, 0, 0)),          # patches
            pl.BlockSpec((1, Hh, N, N), lambda b, l: (b, 0, 0, 0)),   # attn bias
            const_spec((P, dim)), const_spec((1, dim)),               # w_in, b_in
            layer_spec((1, dim)), layer_spec((1, dim)),               # ln1 g, b
            layer_spec((dim, 3 * dim)),                               # Wqkv
            layer_spec((dim, dim)), layer_spec((1, dim)),             # Wout, bout
            layer_spec((1, dim)), layer_spec((1, dim)),               # ln2 g, b
            layer_spec((dim, 4 * dim)), layer_spec((1, 4 * dim)),     # W1, b1
            layer_spec((4 * dim, dim)), layer_spec((1, dim)),         # W2, b2
            const_spec((1, dim)), const_spec((1, dim)),               # final norm g, b
        ],
        out_specs=pl.BlockSpec((1, N, dim), lambda b, l: (b, 0, 0)),
        scratch_shapes=[pltpu.VMEM((N, dim), jnp.float32)],
        compiler_params=pltpu.CompilerParams(
            dimension_semantics=("parallel", "arbitrary"),
            # 48 MiB: above the scoped defaults, below v7x's 64 MiB physical.
            vmem_limit_bytes=48 * 1024 * 1024),
    )(xp, attn_bias,
      params['w_in'], params['b_in'],
      params['ln1g'], params['ln1b'], params['wqkv'], params['wout'], params['bout'],
      params['ln2g'], params['ln2b'], params['w1'], params['b1'], params['w2'], params['b2'],
      params['ng'], params['nb'])


# ------------------------------------------------------------- parameters ---
def init_params(key, *, dim, depth, in_channels):
    P = PATCH * PATCH * in_channels
    inner = 4 * dim
    keys = jax.random.split(key, 5)

    def w(k, shape):
        # weights stored in bf16 (matmul inputs); accumulation stays f32
        return (jax.random.normal(k, shape, jnp.float32) * 0.02).astype(jnp.bfloat16)

    return {
        'w_in': w(keys[0], (P, dim)),
        'b_in': jnp.zeros((1, dim), jnp.float32),
        'ln1g': jnp.ones((depth, 1, dim), jnp.float32),
        'ln1b': jnp.zeros((depth, 1, dim), jnp.float32),
        'wqkv': w(keys[1], (depth, dim, 3 * dim)),      # create_qkv (no bias)
        'wout': w(keys[2], (depth, dim, dim)),
        'bout': jnp.zeros((depth, 1, dim), jnp.float32),
        'ln2g': jnp.ones((depth, 1, dim), jnp.float32),
        'ln2b': jnp.zeros((depth, 1, dim), jnp.float32),
        'w1': w(keys[3], (depth, dim, inner)),
        'b1': jnp.zeros((depth, 1, inner), jnp.float32),
        'w2': w(keys[4], (depth, inner, dim)),
        'b2': jnp.zeros((depth, 1, dim), jnp.float32),
        'ng': jnp.ones((1, dim), jnp.float32),
        'nb': jnp.zeros((1, dim), jnp.float32),
    }


# -------------------------------------------------------------------- main --
if __name__ == "__main__":
    dim, depth, in_channels = 128, 2, 4          # dim multiple of 128 (lane-aligned)
    B, Himg, Wimg = 2, 32, 32
    N = (Himg // PATCH) * (Wimg // PATCH)        # 16 patches

    key = jax.random.PRNGKey(0)
    k_img, k_bias, k_par = jax.random.split(key, 3)

    imgs = jax.random.normal(k_img, (B, in_channels, Himg, Wimg), jnp.float32)
    attn_bias = jax.random.normal(k_bias, (B, NUM_HEADS, N, N), jnp.float32) * 0.1
    params = init_params(k_par, dim=dim, depth=depth, in_channels=in_channels)

    out = vit_forward(imgs, attn_bias, params,
                      dim=dim, depth=depth, in_channels=in_channels)
    jax.block_until_ready(out)
    assert out.shape == (B, N, dim) and out.dtype == jnp.float32
    assert bool(jnp.all(jnp.isfinite(out)))
    print("KERNEL_OK")
</pallas_src>

<mosaic_0001>
module attributes {stable_mosaic.version = 11 : i64} {
  func.func @vit_kernel(%arg0: i32, %arg1: i32, %arg2: memref<1x16x256xbf16, #tpu.memory_space<vmem>>, %arg3: memref<1x16x16x16xf32, #tpu.memory_space<vmem>>, %arg4: memref<256x128xbf16, #tpu.memory_space<vmem>>, %arg5: memref<1x128xf32, #tpu.memory_space<vmem>>, %arg6: memref<1x1x128xf32, #tpu.memory_space<vmem>>, %arg7: memref<1x1x128xf32, #tpu.memory_space<vmem>>, %arg8: memref<1x128x384xbf16, #tpu.memory_space<vmem>>, %arg9: memref<1x128x128xbf16, #tpu.memory_space<vmem>>, %arg10: memref<1x1x128xf32, #tpu.memory_space<vmem>>, %arg11: memref<1x1x128xf32, #tpu.memory_space<vmem>>, %arg12: memref<1x1x128xf32, #tpu.memory_space<vmem>>, %arg13: memref<1x128x512xbf16, #tpu.memory_space<vmem>>, %arg14: memref<1x1x512xf32, #tpu.memory_space<vmem>>, %arg15: memref<1x512x128xbf16, #tpu.memory_space<vmem>>, %arg16: memref<1x1x128xf32, #tpu.memory_space<vmem>>, %arg17: memref<1x128xf32, #tpu.memory_space<vmem>>, %arg18: memref<1x128xf32, #tpu.memory_space<vmem>>, %arg19: memref<1x16x128xf32, #tpu.memory_space<vmem>>, %arg20: memref<16x128xf32, #tpu.memory_space<vmem>>) attributes {dimension_semantics = [#tpu.dimension_semantics<parallel>, #tpu.dimension_semantics<arbitrary>], iteration_bounds = array<i64: 2, 2>, scalar_prefetch = 0 : i64, scratch_operands = 1 : i64, tpu.core_type = #tpu.core_type<tc>, window_params = [{transform_indices = @transform_0, window_bounds = array<i64: 1, 16, 256>}, {transform_indices = @transform_1, window_bounds = array<i64: 1, 16, 16, 16>}, {pipeline_mode = #tpu.pipeline_mode<synchronous>, transform_indices = @transform_2, window_bounds = array<i64: 256, 128>}, {pipeline_mode = #tpu.pipeline_mode<synchronous>, transform_indices = @transform_3, window_bounds = array<i64: 1, 128>}, {transform_indices = @transform_4, window_bounds = array<i64: 1, 1, 128>}, {transform_indices = @transform_5, window_bounds = array<i64: 1, 1, 128>}, {transform_indices = @transform_6, window_bounds = array<i64: 1, 128, 384>}, {transform_indices = @transform_7, window_bounds = array<i64: 1, 128, 128>}, {transform_indices = @transform_8, window_bounds = array<i64: 1, 1, 128>}, {transform_indices = @transform_9, window_bounds = array<i64: 1, 1, 128>}, {transform_indices = @transform_10, window_bounds = array<i64: 1, 1, 128>}, {transform_indices = @transform_11, window_bounds = array<i64: 1, 128, 512>}, {transform_indices = @transform_12, window_bounds = array<i64: 1, 1, 512>}, {transform_indices = @transform_13, window_bounds = array<i64: 1, 512, 128>}, {transform_indices = @transform_14, window_bounds = array<i64: 1, 1, 128>}, {pipeline_mode = #tpu.pipeline_mode<synchronous>, transform_indices = @transform_15, window_bounds = array<i64: 1, 128>}, {pipeline_mode = #tpu.pipeline_mode<synchronous>, transform_indices = @transform_16, window_bounds = array<i64: 1, 128>}, {transform_indices = @transform_17, window_bounds = array<i64: 1, 16, 128>}]} {
    %c0_i32 = arith.constant 0 : i32
    %0 = arith.cmpi eq, %arg1, %c0_i32 : i32
    %1 = arith.extui %0 : i1 to i32
    %c0_i32_0 = arith.constant 0 : i32
    %2 = arith.cmpi ne, %1, %c0_i32_0 : i32
    scf.if %2 {
      %c0_168 = arith.constant 0 : index
      %c0_169 = arith.constant 0 : index
      %c0_170 = arith.constant 0 : index
      %407 = vector.load %arg2[%c0_168, %c0_169, %c0_170] : memref<1x16x256xbf16, #tpu.memory_space<vmem>>, vector<1x16x256xbf16>
      %408 = vector.shape_cast %407 : vector<1x16x256xbf16> to vector<16x256xbf16>
      %c0_171 = arith.constant 0 : index
      %c0_172 = arith.constant 0 : index
      %409 = vector.load %arg4[%c0_171, %c0_172] : memref<256x128xbf16, #tpu.memory_space<vmem>>, vector<256x128xbf16>
      %cst_173 = arith.constant dense<0.000000e+00> : vector<16x128xf32>
      %410 = tpu.matmul %408, %409, %cst_173 {dimension_numbers = #tpu.dot_dimension_numbers<[1], [0], [0], [1], [0, 0, 1, 1], [], []>} : vector<16x256xbf16>, vector<256x128xbf16>, vector<16x128xf32> -> vector<16x128xf32>
      %c0_174 = arith.constant 0 : index
      %c0_175 = arith.constant 0 : index
      %411 = vector.load %arg5[%c0_174, %c0_175] : memref<1x128xf32, #tpu.memory_space<vmem>>, vector<1x128xf32>
      %412 = vector.broadcast %411 : vector<1x128xf32> to vector<16x128xf32>
      %413 = arith.addf %410, %412 : vector<16x128xf32>
      %c0_176 = arith.constant 0 : index
      %c0_177 = arith.constant 0 : index
      %414 = vector.load %arg20[%c0_176, %c0_177] : memref<16x128xf32, #tpu.memory_space<vmem>>, vector<16x128xf32>
      tpu.vector_store %arg20[%c0_176, %c0_177], %413 {strides = array<i32>} : memref<16x128xf32, #tpu.memory_space<vmem>>, vector<16x128xf32>,
    } else {
    }
    %c0 = arith.constant 0 : index
    %c0_1 = arith.constant 0 : index
    %3 = vector.load %arg20[%c0, %c0_1] : memref<16x128xf32, #tpu.memory_space<vmem>>, vector<16x128xf32>
    %c0_2 = arith.constant 0 : index
    %c0_3 = arith.constant 0 : index
    %c0_4 = arith.constant 0 : index
    %4 = vector.load %arg6[%c0_2, %c0_3, %c0_4] : memref<1x1x128xf32, #tpu.memory_space<vmem>>, vector<1x1x128xf32>
    %5 = vector.shape_cast %4 : vector<1x1x128xf32> to vector<1x128xf32>
    %c0_5 = arith.constant 0 : index
    %c0_6 = arith.constant 0 : index
    %c0_7 = arith.constant 0 : index
    %6 = vector.load %arg7[%c0_5, %c0_6, %c0_7] : memref<1x1x128xf32, #tpu.memory_space<vmem>>, vector<1x1x128xf32>
    %7 = vector.shape_cast %6 : vector<1x1x128xf32> to vector<1x128xf32>
    %cst = arith.constant dense<0.000000e+00> : vector<16xf32>
    %8 = vector.multi_reduction <add>, %3, %cst [1] : vector<16x128xf32> to vector<16xf32>
    %9 = vector.shape_cast %8 : vector<16xf32> to vector<16x1xf32>
    %cst_8 = arith.constant 1.280000e+02 : f32
    %10 = vector.broadcast %cst_8 : f32 to vector<16x1xf32>
    %11 = arith.divf %9, %10 : vector<16x1xf32>
    %12 = vector.broadcast %11 : vector<16x1xf32> to vector<16x128xf32>
    %13 = arith.subf %3, %12 : vector<16x128xf32>
    %14 = arith.mulf %13, %13 : vector<16x128xf32>
    %cst_9 = arith.constant dense<0.000000e+00> : vector<16xf32>
    %15 = vector.multi_reduction <add>, %14, %cst_9 [1] : vector<16x128xf32> to vector<16xf32>
    %16 = vector.shape_cast %15 : vector<16xf32> to vector<16x1xf32>
    %cst_10 = arith.constant 1.280000e+02 : f32
    %17 = vector.broadcast %cst_10 : f32 to vector<16x1xf32>
    %18 = arith.divf %16, %17 : vector<16x1xf32>
    %cst_11 = arith.constant 9.99999974E-6 : f32
    %19 = vector.broadcast %cst_11 : f32 to vector<16x1xf32>
    %20 = arith.addf %18, %19 : vector<16x1xf32>
    %21 = math.rsqrt %20 : vector<16x1xf32>
    %22 = vector.broadcast %21 : vector<16x1xf32> to vector<16x128xf32>
    %23 = arith.mulf %13, %22 : vector<16x128xf32>
    %24 = vector.broadcast %5 : vector<1x128xf32> to vector<16x128xf32>
    %25 = arith.mulf %23, %24 : vector<16x128xf32>
    %26 = vector.broadcast %7 : vector<1x128xf32> to vector<16x128xf32>
    %27 = arith.addf %25, %26 : vector<16x128xf32>
    %28 = arith.truncf %27 : vector<16x128xf32> to vector<16x128xbf16>
    %c0_12 = arith.constant 0 : index
    %c0_13 = arith.constant 0 : index
    %c0_14 = arith.constant 0 : index
    %29 = vector.load %arg8[%c0_12, %c0_13, %c0_14] : memref<1x128x384xbf16, #tpu.memory_space<vmem>>, vector<1x128x384xbf16>
    %30 = vector.shape_cast %29 : vector<1x128x384xbf16> to vector<128x384xbf16>
    %cst_15 = arith.constant dense<0.000000e+00> : vector<16x384xf32>
    %31 = tpu.matmul %28, %30, %cst_15 {dimension_numbers = #tpu.dot_dimension_numbers<[1], [0], [0], [1], [0, 0, 1, 1], [], []>} : vector<16x128xbf16>, vector<128x384xbf16>, vector<16x384xf32> -> vector<16x384xf32>
    %32 = vector.extract_strided_slice %31 {offsets = [0, 0], sizes = [16, 128], strides = [1, 1]} : vector<16x384xf32> to vector<16x128xf32>
    %cst_16 = arith.constant 0.353553385 : f32
    %33 = vector.broadcast %cst_16 : f32 to vector<16x128xf32>
    %34 = arith.mulf %32, %33 : vector<16x128xf32>
    %35 = arith.truncf %34 : vector<16x128xf32> to vector<16x128xbf16>
    %36 = vector.extract_strided_slice %31 {offsets = [0, 128], sizes = [16, 128], strides = [1, 1]} : vector<16x384xf32> to vector<16x128xf32>
    %37 = arith.truncf %36 : vector<16x128xf32> to vector<16x128xbf16>
    %38 = vector.extract_strided_slice %31 {offsets = [0, 256], sizes = [16, 128], strides = [1, 1]} : vector<16x384xf32> to vector<16x128xf32>
    %39 = arith.truncf %38 : vector<16x128xf32> to vector<16x128xbf16>
    %40 = vector.extract_strided_slice %35 {offsets = [0, 0], sizes = [16, 8], strides = [1, 1]} : vector<16x128xbf16> to vector<16x8xbf16>
    %41 = vector.extract_strided_slice %37 {offsets = [0, 0], sizes = [16, 8], strides = [1, 1]} : vector<16x128xbf16> to vector<16x8xbf16>
    %42 = vector.extract_strided_slice %39 {offsets = [0, 0], sizes = [16, 8], strides = [1, 1]} : vector<16x128xbf16> to vector<16x8xbf16>
    %cst_17 = arith.constant dense<0.000000e+00> : vector<16x16xf32>
    %43 = tpu.matmul %40, %41, %cst_17 {dimension_numbers = #tpu.dot_dimension_numbers<[1], [1], [0], [0], [0, 0, 1, 0], [], []>} : vector<16x8xbf16>, vector<16x8xbf16>, vector<16x16xf32> -> vector<16x16xf32>
    %c0_18 = arith.constant 0 : index
    %c0_19 = arith.constant 0 : index
    %c0_20 = arith.constant 0 : index
    %c0_21 = arith.constant 0 : index
    %44 = vector.load %arg3[%c0_18, %c0_19, %c0_20, %c0_21] : memref<1x16x16x16xf32, #tpu.memory_space<vmem>>, vector<1x1x16x16xf32>
    %45 = vector.shape_cast %44 : vector<1x1x16x16xf32> to vector<16x16xf32>
    %46 = arith.addf %43, %45 : vector<16x16xf32>
    %cst_22 = arith.constant dense<0xFF800000> : vector<16xf32>
    %47 = vector.multi_reduction <maximumf>, %46, %cst_22 [1] : vector<16x16xf32> to vector<16xf32>
    %48 = vector.shape_cast %47 : vector<16xf32> to vector<16x1xf32>
    %49 = vector.broadcast %48 : vector<16x1xf32> to vector<16x16xf32>
    %50 = arith.subf %46, %49 : vector<16x16xf32>
    %51 = math.exp %50 : vector<16x16xf32>
    %cst_23 = arith.constant dense<0.000000e+00> : vector<16xf32>
    %52 = vector.multi_reduction <add>, %51, %cst_23 [1] : vector<16x16xf32> to vector<16xf32>
    %53 = vector.shape_cast %52 : vector<16xf32> to vector<16x1xf32>
    %54 = tpu.reciprocal %53 {approx = true} : vector<16x1xf32> -> vector<16x1xf32>
    %55 = vector.broadcast %54 : vector<16x1xf32> to vector<16x16xf32>
    %56 = arith.mulf %51, %55 : vector<16x16xf32>
    %57 = arith.truncf %56 : vector<16x16xf32> to vector<16x16xbf16>
    %cst_24 = arith.constant dense<0.000000e+00> : vector<16x8xf32>
    %58 = tpu.matmul %57, %42, %cst_24 {dimension_numbers = #tpu.dot_dimension_numbers<[1], [0], [0], [1], [0, 0, 1, 1], [], []>} : vector<16x16xbf16>, vector<16x8xbf16>, vector<16x8xf32> -> vector<16x8xf32>
    %59 = vector.extract_strided_slice %35 {offsets = [0, 8], sizes = [16, 8], strides = [1, 1]} : vector<16x128xbf16> to vector<16x8xbf16>
    %60 = vector.extract_strided_slice %37 {offsets = [0, 8], sizes = [16, 8], strides = [1, 1]} : vector<16x128xbf16> to vector<16x8xbf16>
    %61 = vector.extract_strided_slice %39 {offsets = [0, 8], sizes = [16, 8], strides = [1, 1]} : vector<16x128xbf16> to vector<16x8xbf16>
    %cst_25 = arith.constant dense<0.000000e+00> : vector<16x16xf32>
    %62 = tpu.matmul %59, %60, %cst_25 {dimension_numbers = #tpu.dot_dimension_numbers<[1], [1], [0], [0], [0, 0, 1, 0], [], []>} : vector<16x8xbf16>, vector<16x8xbf16>, vector<16x16xf32> -> vector<16x16xf32>
    %c0_26 = arith.constant 0 : index
    %c1 = arith.constant 1 : index
    %c0_27 = arith.constant 0 : index
    %c0_28 = arith.constant 0 : index
    %63 = vector.load %arg3[%c0_26, %c1, %c0_27, %c0_28] : memref<1x16x16x16xf32, #tpu.memory_space<vmem>>, vector<1x1x16x16xf32>
    %64 = vector.shape_cast %63 : vector<1x1x16x16xf32> to vector<16x16xf32>
    %65 = arith.addf %62, %64 : vector<16x16xf32>
    %cst_29 = arith.constant dense<0xFF800000> : vector<16xf32>
    %66 = vector.multi_reduction <maximumf>, %65, %cst_29 [1] : vector<16x16xf32> to vector<16xf32>
    %67 = vector.shape_cast %66 : vector<16xf32> to vector<16x1xf32>
    %68 = vector.broadcast %67 : vector<16x1xf32> to vector<16x16xf32>
    %69 = arith.subf %65, %68 : vector<16x16xf32>
    %70 = math.exp %69 : vector<16x16xf32>
    %cst_30 = arith.constant dense<0.000000e+00> : vector<16xf32>
    %71 = vector.multi_reduction <add>, %70, %cst_30 [1] : vector<16x16xf32> to vector<16xf32>
    %72 = vector.shape_cast %71 : vector<16xf32> to vector<16x1xf32>
    %73 = tpu.reciprocal %72 {approx = true} : vector<16x1xf32> -> vector<16x1xf32>
    %74 = vector.broadcast %73 : vector<16x1xf32> to vector<16x16xf32>
    %75 = arith.mulf %70, %74 : vector<16x16xf32>
    %76 = arith.truncf %75 : vector<16x16xf32> to vector<16x16xbf16>
    %cst_31 = arith.constant dense<0.000000e+00> : vector<16x8xf32>
    %77 = tpu.matmul %76, %61, %cst_31 {dimension_numbers = #tpu.dot_dimension_numbers<[1], [0], [0], [1], [0, 0, 1, 1], [], []>} : vector<16x16xbf16>, vector<16x8xbf16>, vector<16x8xf32> -> vector<16x8xf32>
    %78 = vector.extract_strided_slice %35 {offsets = [0, 16], sizes = [16, 8], strides = [1, 1]} : vector<16x128xbf16> to vector<16x8xbf16>
    %79 = vector.extract_strided_slice %37 {offsets = [0, 16], sizes = [16, 8], strides = [1, 1]} : vector<16x128xbf16> to vector<16x8xbf16>
    %80 = vector.extract_strided_slice %39 {offsets = [0, 16], sizes = [16, 8], strides = [1, 1]} : vector<16x128xbf16> to vector<16x8xbf16>
    %cst_32 = arith.constant dense<0.000000e+00> : vector<16x16xf32>
    %81 = tpu.matmul %78, %79, %cst_32 {dimension_numbers = #tpu.dot_dimension_numbers<[1], [1], [0], [0], [0, 0, 1, 0], [], []>} : vector<16x8xbf16>, vector<16x8xbf16>, vector<16x16xf32> -> vector<16x16xf32>
    %c0_33 = arith.constant 0 : index
    %c2 = arith.constant 2 : index
    %c0_34 = arith.constant 0 : index
    %c0_35 = arith.constant 0 : index
    %82 = vector.load %arg3[%c0_33, %c2, %c0_34, %c0_35] : memref<1x16x16x16xf32, #tpu.memory_space<vmem>>, vector<1x1x16x16xf32>
    %83 = vector.shape_cast %82 : vector<1x1x16x16xf32> to vector<16x16xf32>
    %84 = arith.addf %81, %83 : vector<16x16xf32>
    %cst_36 = arith.constant dense<0xFF800000> : vector<16xf32>
    %85 = vector.multi_reduction <maximumf>, %84, %cst_36 [1] : vector<16x16xf32> to vector<16xf32>
    %86 = vector.shape_cast %85 : vector<16xf32> to vector<16x1xf32>
    %87 = vector.broadcast %86 : vector<16x1xf32> to vector<16x16xf32>
    %88 = arith.subf %84, %87 : vector<16x16xf32>
    %89 = math.exp %88 : vector<16x16xf32>
    %cst_37 = arith.constant dense<0.000000e+00> : vector<16xf32>
    %90 = vector.multi_reduction <add>, %89, %cst_37 [1] : vector<16x16xf32> to vector<16xf32>
    %91 = vector.shape_cast %90 : vector<16xf32> to vector<16x1xf32>
    %92 = tpu.reciprocal %91 {approx = true} : vector<16x1xf32> -> vector<16x1xf32>
    %93 = vector.broadcast %92 : vector<16x1xf32> to vector<16x16xf32>
    %94 = arith.mulf %89, %93 : vector<16x16xf32>
    %95 = arith.truncf %94 : vector<16x16xf32> to vector<16x16xbf16>
    %cst_38 = arith.constant dense<0.000000e+00> : vector<16x8xf32>
    %96 = tpu.matmul %95, %80, %cst_38 {dimension_numbers = #tpu.dot_dimension_numbers<[1], [0], [0], [1], [0, 0, 1, 1], [], []>} : vector<16x16xbf16>, vector<16x8xbf16>, vector<16x8xf32> -> vector<16x8xf32>
    %97 = vector.extract_strided_slice %35 {offsets = [0, 24], sizes = [16, 8], strides = [1, 1]} : vector<16x128xbf16> to vector<16x8xbf16>
    %98 = vector.extract_strided_slice %37 {offsets = [0, 24], sizes = [16, 8], strides = [1, 1]} : vector<16x128xbf16> to vector<16x8xbf16>
    %99 = vector.extract_strided_slice %39 {offsets = [0, 24], sizes = [16, 8], strides = [1, 1]} : vector<16x128xbf16> to vector<16x8xbf16>
    %cst_39 = arith.constant dense<0.000000e+00> : vector<16x16xf32>
    %100 = tpu.matmul %97, %98, %cst_39 {dimension_numbers = #tpu.dot_dimension_numbers<[1], [1], [0], [0], [0, 0, 1, 0], [], []>} : vector<16x8xbf16>, vector<16x8xbf16>, vector<16x16xf32> -> vector<16x16xf32>
    %c0_40 = arith.constant 0 : index
    %c3 = arith.constant 3 : index
    %c0_41 = arith.constant 0 : index
    %c0_42 = arith.constant 0 : index
    %101 = vector.load %arg3[%c0_40, %c3, %c0_41, %c0_42] : memref<1x16x16x16xf32, #tpu.memory_space<vmem>>, vector<1x1x16x16xf32>
    %102 = vector.shape_cast %101 : vector<1x1x16x16xf32> to vector<16x16xf32>
    %103 = arith.addf %100, %102 : vector<16x16xf32>
    %cst_43 = arith.constant dense<0xFF800000> : vector<16xf32>
    %104 = vector.multi_reduction <maximumf>, %103, %cst_43 [1] : vector<16x16xf32> to vector<16xf32>
    %105 = vector.shape_cast %104 : vector<16xf32> to vector<16x1xf32>
    %106 = vector.broadcast %105 : vector<16x1xf32> to vector<16x16xf32>
    %107 = arith.subf %103, %106 : vector<16x16xf32>
    %108 = math.exp %107 : vector<16x16xf32>
    %cst_44 = arith.constant dense<0.000000e+00> : vector<16xf32>
    %109 = vector.multi_reduction <add>, %108, %cst_44 [1] : vector<16x16xf32> to vector<16xf32>
    %110 = vector.shape_cast %109 : vector<16xf32> to vector<16x1xf32>
    %111 = tpu.reciprocal %110 {approx = true} : vector<16x1xf32> -> vector<16x1xf32>
    %112 = vector.broadcast %111 : vector<16x1xf32> to vector<16x16xf32>
    %113 = arith.mulf %108, %112 : vector<16x16xf32>
    %114 = arith.truncf %113 : vector<16x16xf32> to vector<16x16xbf16>
    %cst_45 = arith.constant dense<0.000000e+00> : vector<16x8xf32>
    %115 = tpu.matmul %114, %99, %cst_45 {dimension_numbers = #tpu.dot_dimension_numbers<[1], [0], [0], [1], [0, 0, 1, 1], [], []>} : vector<16x16xbf16>, vector<16x8xbf16>, vector<16x8xf32> -> vector<16x8xf32>
    %116 = vector.extract_strided_slice %35 {offsets = [0, 32], sizes = [16, 8], strides = [1, 1]} : vector<16x128xbf16> to vector<16x8xbf16>
    %117 = vector.extract_strided_slice %37 {offsets = [0, 32], sizes = [16, 8], strides = [1, 1]} : vector<16x128xbf16> to vector<16x8xbf16>
    %118 = vector.extract_strided_slice %39 {offsets = [0, 32], sizes = [16, 8], strides = [1, 1]} : vector<16x128xbf16> to vector<16x8xbf16>
    %cst_46 = arith.constant dense<0.000000e+00> : vector<16x16xf32>
    %119 = tpu.matmul %116, %117, %cst_46 {dimension_numbers = #tpu.dot_dimension_numbers<[1], [1], [0], [0], [0, 0, 1, 0], [], []>} : vector<16x8xbf16>, vector<16x8xbf16>, vector<16x16xf32> -> vector<16x16xf32>
    %c0_47 = arith.constant 0 : index
    %c4 = arith.constant 4 : index
    %c0_48 = arith.constant 0 : index
    %c0_49 = arith.constant 0 : index
    %120 = vector.load %arg3[%c0_47, %c4, %c0_48, %c0_49] : memref<1x16x16x16xf32, #tpu.memory_space<vmem>>, vector<1x1x16x16xf32>
    %121 = vector.shape_cast %120 : vector<1x1x16x16xf32> to vector<16x16xf32>
    %122 = arith.addf %119, %121 : vector<16x16xf32>
    %cst_50 = arith.constant dense<0xFF800000> : vector<16xf32>
    %123 = vector.multi_reduction <maximumf>, %122, %cst_50 [1] : vector<16x16xf32> to vector<16xf32>
    %124 = vector.shape_cast %123 : vector<16xf32> to vector<16x1xf32>
    %125 = vector.broadcast %124 : vector<16x1xf32> to vector<16x16xf32>
    %126 = arith.subf %122, %125 : vector<16x16xf32>
    %127 = math.exp %126 : vector<16x16xf32>
    %cst_51 = arith.constant dense<0.000000e+00> : vector<16xf32>
    %128 = vector.multi_reduction <add>, %127, %cst_51 [1] : vector<16x16xf32> to vector<16xf32>
    %129 = vector.shape_cast %128 : vector<16xf32> to vector<16x1xf32>
    %130 = tpu.reciprocal %129 {approx = true} : vector<16x1xf32> -> vector<16x1xf32>
    %131 = vector.broadcast %130 : vector<16x1xf32> to vector<16x16xf32>
    %132 = arith.mulf %127, %131 : vector<16x16xf32>
    %133 = arith.truncf %132 : vector<16x16xf32> to vector<16x16xbf16>
    %cst_52 = arith.constant dense<0.000000e+00> : vector<16x8xf32>
    %134 = tpu.matmul %133, %118, %cst_52 {dimension_numbers = #tpu.dot_dimension_numbers<[1], [0], [0], [1], [0, 0, 1, 1], [], []>} : vector<16x16xbf16>, vector<16x8xbf16>, vector<16x8xf32> -> vector<16x8xf32>
    %135 = vector.extract_strided_slice %35 {offsets = [0, 40], sizes = [16, 8], strides = [1, 1]} : vector<16x128xbf16> to vector<16x8xbf16>
    %136 = vector.extract_strided_slice %37 {offsets = [0, 40], sizes = [16, 8], strides = [1, 1]} : vector<16x128xbf16> to vector<16x8xbf16>
    %137 = vector.extract_strided_slice %39 {offsets = [0, 40], sizes = [16, 8], strides = [1, 1]} : vector<16x128xbf16> to vector<16x8xbf16>
    %cst_53 = arith.constant dense<0.000000e+00> : vector<16x16xf32>
    %138 = tpu.matmul %135, %136, %cst_53 {dimension_numbers = #tpu.dot_dimension_numbers<[1], [1], [0], [0], [0, 0, 1, 0], [], []>} : vector<16x8xbf16>, vector<16x8xbf16>, vector<16x16xf32> -> vector<16x16xf32>
    %c0_54 = arith.constant 0 : index
    %c5 = arith.constant 5 : index
    %c0_55 = arith.constant 0 : index
    %c0_56 = arith.constant 0 : index
    %139 = vector.load %arg3[%c0_54, %c5, %c0_55, %c0_56] : memref<1x16x16x16xf32, #tpu.memory_space<vmem>>, vector<1x1x16x16xf32>
    %140 = vector.shape_cast %139 : vector<1x1x16x16xf32> to vector<16x16xf32>
    %141 = arith.addf %138, %140 : vector<16x16xf32>
    %cst_57 = arith.constant dense<0xFF800000> : vector<16xf32>
    %142 = vector.multi_reduction <maximumf>, %141, %cst_57 [1] : vector<16x16xf32> to vector<16xf32>
    %143 = vector.shape_cast %142 : vector<16xf32> to vector<16x1xf32>
    %144 = vector.broadcast %143 : vector<16x1xf32> to vector<16x16xf32>
    %145 = arith.subf %141, %144 : vector<16x16xf32>
    %146 = math.exp %145 : vector<16x16xf32>
    %cst_58 = arith.constant dense<0.000000e+00> : vector<16xf32>
    %147 = vector.multi_reduction <add>, %146, %cst_58 [1] : vector<16x16xf32> to vector<16xf32>
    %148 = vector.shape_cast %147 : vector<16xf32> to vector<16x1xf32>
    %149 = tpu.reciprocal %148 {approx = true} : vector<16x1xf32> -> vector<16x1xf32>
    %150 = vector.broadcast %149 : vector<16x1xf32> to vector<16x16xf32>
    %151 = arith.mulf %146, %150 : vector<16x16xf32>
    %152 = arith.truncf %151 : vector<16x16xf32> to vector<16x16xbf16>
    %cst_59 = arith.constant dense<0.000000e+00> : vector<16x8xf32>
    %153 = tpu.matmul %152, %137, %cst_59 {dimension_numbers = #tpu.dot_dimension_numbers<[1], [0], [0], [1], [0, 0, 1, 1], [], []>} : vector<16x16xbf16>, vector<16x8xbf16>, vector<16x8xf32> -> vector<16x8xf32>
    %154 = vector.extract_strided_slice %35 {offsets = [0, 48], sizes = [16, 8], strides = [1, 1]} : vector<16x128xbf16> to vector<16x8xbf16>
    %155 = vector.extract_strided_slice %37 {offsets = [0, 48], sizes = [16, 8], strides = [1, 1]} : vector<16x128xbf16> to vector<16x8xbf16>
    %156 = vector.extract_strided_slice %39 {offsets = [0, 48], sizes = [16, 8], strides = [1, 1]} : vector<16x128xbf16> to vector<16x8xbf16>
    %cst_60 = arith.constant dense<0.000000e+00> : vector<16x16xf32>
    %157 = tpu.matmul %154, %155, %cst_60 {dimension_numbers = #tpu.dot_dimension_numbers<[1], [1], [0], [0], [0, 0, 1, 0], [], []>} : vector<16x8xbf16>, vector<16x8xbf16>, vector<16x16xf32> -> vector<16x16xf32>
    %c0_61 = arith.constant 0 : index
    %c6 = arith.constant 6 : index
    %c0_62 = arith.constant 0 : index
    %c0_63 = arith.constant 0 : index
    %158 = vector.load %arg3[%c0_61, %c6, %c0_62, %c0_63] : memref<1x16x16x16xf32, #tpu.memory_space<vmem>>, vector<1x1x16x16xf32>
    %159 = vector.shape_cast %158 : vector<1x1x16x16xf32> to vector<16x16xf32>
    %160 = arith.addf %157, %159 : vector<16x16xf32>
    %cst_64 = arith.constant dense<0xFF800000> : vector<16xf32>
    %161 = vector.multi_reduction <maximumf>, %160, %cst_64 [1] : vector<16x16xf32> to vector<16xf32>
    %162 = vector.shape_cast %161 : vector<16xf32> to vector<16x1xf32>
    %163 = vector.broadcast %162 : vector<16x1xf32> to vector<16x16xf32>
    %164 = arith.subf %160, %163 : vector<16x16xf32>
    %165 = math.exp %164 : vector<16x16xf32>
    %cst_65 = arith.constant dense<0.000000e+00> : vector<16xf32>
    %166 = vector.multi_reduction <add>, %165, %cst_65 [1] : vector<16x16xf32> to vector<16xf32>
    %167 = vector.shape_cast %166 : vector<16xf32> to vector<16x1xf32>
    %168 = tpu.reciprocal %167 {approx = true} : vector<16x1xf32> -> vector<16x1xf32>
    %169 = vector.broadcast %168 : vector<16x1xf32> to vector<16x16xf32>
    %170 = arith.mulf %165, %169 : vector<16x16xf32>
    %171 = arith.truncf %170 : vector<16x16xf32> to vector<16x16xbf16>
    %cst_66 = arith.constant dense<0.000000e+00> : vector<16x8xf32>
    %172 = tpu.matmul %171, %156, %cst_66 {dimension_numbers = #tpu.dot_dimension_numbers<[1], [0], [0], [1], [0, 0, 1, 1], [], []>} : vector<16x16xbf16>, vector<16x8xbf16>, vector<16x8xf32> -> vector<16x8xf32>
    %173 = vector.extract_strided_slice %35 {offsets = [0, 56], sizes = [16, 8], strides = [1, 1]} : vector<16x128xbf16> to vector<16x8xbf16>
    %174 = vector.extract_strided_slice %37 {offsets = [0, 56], sizes = [16, 8], strides = [1, 1]} : vector<16x128xbf16> to vector<16x8xbf16>
    %175 = vector.extract_strided_slice %39 {offsets = [0, 56], sizes = [16, 8], strides = [1, 1]} : vector<16x128xbf16> to vector<16x8xbf16>
    %cst_67 = arith.constant dense<0.000000e+00> : vector<16x16xf32>
    %176 = tpu.matmul %173, %174, %cst_67 {dimension_numbers = #tpu.dot_dimension_numbers<[1], [1], [0], [0], [0, 0, 1, 0], [], []>} : vector<16x8xbf16>, vector<16x8xbf16>, vector<16x16xf32> -> vector<16x16xf32>
    %c0_68 = arith.constant 0 : index
    %c7 = arith.constant 7 : index
    %c0_69 = arith.constant 0 : index
    %c0_70 = arith.constant 0 : index
    %177 = vector.load %arg3[%c0_68, %c7, %c0_69, %c0_70] : memref<1x16x16x16xf32, #tpu.memory_space<vmem>>, vector<1x1x16x16xf32>
    %178 = vector.shape_cast %177 : vector<1x1x16x16xf32> to vector<16x16xf32>
    %179 = arith.addf %176, %178 : vector<16x16xf32>
    %cst_71 = arith.constant dense<0xFF800000> : vector<16xf32>
    %180 = vector.multi_reduction <maximumf>, %179, %cst_71 [1] : vector<16x16xf32> to vector<16xf32>
    %181 = vector.shape_cast %180 : vector<16xf32> to vector<16x1xf32>
    %182 = vector.broadcast %181 : vector<16x1xf32> to vector<16x16xf32>
    %183 = arith.subf %179, %182 : vector<16x16xf32>
    %184 = math.exp %183 : vector<16x16xf32>
    %cst_72 = arith.constant dense<0.000000e+00> : vector<16xf32>
    %185 = vector.multi_reduction <add>, %184, %cst_72 [1] : vector<16x16xf32> to vector<16xf32>
    %186 = vector.shape_cast %185 : vector<16xf32> to vector<16x1xf32>
    %187 = tpu.reciprocal %186 {approx = true} : vector<16x1xf32> -> vector<16x1xf32>
    %188 = vector.broadcast %187 : vector<16x1xf32> to vector<16x16xf32>
    %189 = arith.mulf %184, %188 : vector<16x16xf32>
    %190 = arith.truncf %189 : vector<16x16xf32> to vector<16x16xbf16>
    %cst_73 = arith.constant dense<0.000000e+00> : vector<16x8xf32>
    %191 = tpu.matmul %190, %175, %cst_73 {dimension_numbers = #tpu.dot_dimension_numbers<[1], [0], [0], [1], [0, 0, 1, 1], [], []>} : vector<16x16xbf16>, vector<16x8xbf16>, vector<16x8xf32> -> vector<16x8xf32>
    %192 = vector.extract_strided_slice %35 {offsets = [0, 64], sizes = [16, 8], strides = [1, 1]} : vector<16x128xbf16> to vector<16x8xbf16>
    %193 = vector.extract_strided_slice %37 {offsets = [0, 64], sizes = [16, 8], strides = [1, 1]} : vector<16x128xbf16> to vector<16x8xbf16>
    %194 = vector.extract_strided_slice %39 {offsets = [0, 64], sizes = [16, 8], strides = [1, 1]} : vector<16x128xbf16> to vector<16x8xbf16>
    %cst_74 = arith.constant dense<0.000000e+00> : vector<16x16xf32>
    %195 = tpu.matmul %192, %193, %cst_74 {dimension_numbers = #tpu.dot_dimension_numbers<[1], [1], [0], [0], [0, 0, 1, 0], [], []>} : vector<16x8xbf16>, vector<16x8xbf16>, vector<16x16xf32> -> vector<16x16xf32>
    %c0_75 = arith.constant 0 : index
    %c8 = arith.constant 8 : index
    %c0_76 = arith.constant 0 : index
    %c0_77 = arith.constant 0 : index
    %196 = vector.load %arg3[%c0_75, %c8, %c0_76, %c0_77] : memref<1x16x16x16xf32, #tpu.memory_space<vmem>>, vector<1x1x16x16xf32>
    %197 = vector.shape_cast %196 : vector<1x1x16x16xf32> to vector<16x16xf32>
    %198 = arith.addf %195, %197 : vector<16x16xf32>
    %cst_78 = arith.constant dense<0xFF800000> : vector<16xf32>
    %199 = vector.multi_reduction <maximumf>, %198, %cst_78 [1] : vector<16x16xf32> to vector<16xf32>
    %200 = vector.shape_cast %199 : vector<16xf32> to vector<16x1xf32>
    %201 = vector.broadcast %200 : vector<16x1xf32> to vector<16x16xf32>
    %202 = arith.subf %198, %201 : vector<16x16xf32>
    %203 = math.exp %202 : vector<16x16xf32>
    %cst_79 = arith.constant dense<0.000000e+00> : vector<16xf32>
    %204 = vector.multi_reduction <add>, %203, %cst_79 [1] : vector<16x16xf32> to vector<16xf32>
    %205 = vector.shape_cast %204 : vector<16xf32> to vector<16x1xf32>
    %206 = tpu.reciprocal %205 {approx = true} : vector<16x1xf32> -> vector<16x1xf32>
    %207 = vector.broadcast %206 : vector<16x1xf32> to vector<16x16xf32>
    %208 = arith.mulf %203, %207 : vector<16x16xf32>
    %209 = arith.truncf %208 : vector<16x16xf32> to vector<16x16xbf16>
    %cst_80 = arith.constant dense<0.000000e+00> : vector<16x8xf32>
    %210 = tpu.matmul %209, %194, %cst_80 {dimension_numbers = #tpu.dot_dimension_numbers<[1], [0], [0], [1], [0, 0, 1, 1], [], []>} : vector<16x16xbf16>, vector<16x8xbf16>, vector<16x8xf32> -> vector<16x8xf32>
    %211 = vector.extract_strided_slice %35 {offsets = [0, 72], sizes = [16, 8], strides = [1, 1]} : vector<16x128xbf16> to vector<16x8xbf16>
    %212 = vector.extract_strided_slice %37 {offsets = [0, 72], sizes = [16, 8], strides = [1, 1]} : vector<16x128xbf16> to vector<16x8xbf16>
    %213 = vector.extract_strided_slice %39 {offsets = [0, 72], sizes = [16, 8], strides = [1, 1]} : vector<16x128xbf16> to vector<16x8xbf16>
    %cst_81 = arith.constant dense<0.000000e+00> : vector<16x16xf32>
    %214 = tpu.matmul %211, %212, %cst_81 {dimension_numbers = #tpu.dot_dimension_numbers<[1], [1], [0], [0], [0, 0, 1, 0], [], []>} : vector<16x8xbf16>, vector<16x8xbf16>, vector<16x16xf32> -> vector<16x16xf32>
    %c0_82 = arith.constant 0 : index
    %c9 = arith.constant 9 : index
    %c0_83 = arith.constant 0 : index
    %c0_84 = arith.constant 0 : index
    %215 = vector.load %arg3[%c0_82, %c9, %c0_83, %c0_84] : memref<1x16x16x16xf32, #tpu.memory_space<vmem>>, vector<1x1x16x16xf32>
    %216 = vector.shape_cast %215 : vector<1x1x16x16xf32> to vector<16x16xf32>
    %217 = arith.addf %214, %216 : vector<16x16xf32>
    %cst_85 = arith.constant dense<0xFF800000> : vector<16xf32>
    %218 = vector.multi_reduction <maximumf>, %217, %cst_85 [1] : vector<16x16xf32> to vector<16xf32>
    %219 = vector.shape_cast %218 : vector<16xf32> to vector<16x1xf32>
    %220 = vector.broadcast %219 : vector<16x1xf32> to vector<16x16xf32>
    %221 = arith.subf %217, %220 : vector<16x16xf32>
    %222 = math.exp %221 : vector<16x16xf32>
    %cst_86 = arith.constant dense<0.000000e+00> : vector<16xf32>
    %223 = vector.multi_reduction <add>, %222, %cst_86 [1] : vector<16x16xf32> to vector<16xf32>
    %224 = vector.shape_cast %223 : vector<16xf32> to vector<16x1xf32>
    %225 = tpu.reciprocal %224 {approx = true} : vector<16x1xf32> -> vector<16x1xf32>
    %226 = vector.broadcast %225 : vector<16x1xf32> to vector<16x16xf32>
    %227 = arith.mulf %222, %226 : vector<16x16xf32>
    %228 = arith.truncf %227 : vector<16x16xf32> to vector<16x16xbf16>
    %cst_87 = arith.constant dense<0.000000e+00> : vector<16x8xf32>
    %229 = tpu.matmul %228, %213, %cst_87 {dimension_numbers = #tpu.dot_dimension_numbers<[1], [0], [0], [1], [0, 0, 1, 1], [], []>} : vector<16x16xbf16>, vector<16x8xbf16>, vector<16x8xf32> -> vector<16x8xf32>
    %230 = vector.extract_strided_slice %35 {offsets = [0, 80], sizes = [16, 8], strides = [1, 1]} : vector<16x128xbf16> to vector<16x8xbf16>
    %231 = vector.extract_strided_slice %37 {offsets = [0, 80], sizes = [16, 8], strides = [1, 1]} : vector<16x128xbf16> to vector<16x8xbf16>
    %232 = vector.extract_strided_slice %39 {offsets = [0, 80], sizes = [16, 8], strides = [1, 1]} : vector<16x128xbf16> to vector<16x8xbf16>
    %cst_88 = arith.constant dense<0.000000e+00> : vector<16x16xf32>
    %233 = tpu.matmul %230, %231, %cst_88 {dimension_numbers = #tpu.dot_dimension_numbers<[1], [1], [0], [0], [0, 0, 1, 0], [], []>} : vector<16x8xbf16>, vector<16x8xbf16>, vector<16x16xf32> -> vector<16x16xf32>
    %c0_89 = arith.constant 0 : index
    %c10 = arith.constant 10 : index
    %c0_90 = arith.constant 0 : index
    %c0_91 = arith.constant 0 : index
    %234 = vector.load %arg3[%c0_89, %c10, %c0_90, %c0_91] : memref<1x16x16x16xf32, #tpu.memory_space<vmem>>, vector<1x1x16x16xf32>
    %235 = vector.shape_cast %234 : vector<1x1x16x16xf32> to vector<16x16xf32>
    %236 = arith.addf %233, %235 : vector<16x16xf32>
    %cst_92 = arith.constant dense<0xFF800000> : vector<16xf32>
    %237 = vector.multi_reduction <maximumf>, %236, %cst_92 [1] : vector<16x16xf32> to vector<16xf32>
    %238 = vector.shape_cast %237 : vector<16xf32> to vector<16x1xf32>
    %239 = vector.broadcast %238 : vector<16x1xf32> to vector<16x16xf32>
    %240 = arith.subf %236, %239 : vector<16x16xf32>
    %241 = math.exp %240 : vector<16x16xf32>
    %cst_93 = arith.constant dense<0.000000e+00> : vector<16xf32>
    %242 = vector.multi_reduction <add>, %241, %cst_93 [1] : vector<16x16xf32> to vector<16xf32>
    %243 = vector.shape_cast %242 : vector<16xf32> to vector<16x1xf32>
    %244 = tpu.reciprocal %243 {approx = true} : vector<16x1xf32> -> vector<16x1xf32>
    %245 = vector.broadcast %244 : vector<16x1xf32> to vector<16x16xf32>
    %246 = arith.mulf %241, %245 : vector<16x16xf32>
    %247 = arith.truncf %246 : vector<16x16xf32> to vector<16x16xbf16>
    %cst_94 = arith.constant dense<0.000000e+00> : vector<16x8xf32>
    %248 = tpu.matmul %247, %232, %cst_94 {dimension_numbers = #tpu.dot_dimension_numbers<[1], [0], [0], [1], [0, 0, 1, 1], [], []>} : vector<16x16xbf16>, vector<16x8xbf16>, vector<16x8xf32> -> vector<16x8xf32>
    %249 = vector.extract_strided_slice %35 {offsets = [0, 88], sizes = [16, 8], strides = [1, 1]} : vector<16x128xbf16> to vector<16x8xbf16>
    %250 = vector.extract_strided_slice %37 {offsets = [0, 88], sizes = [16, 8], strides = [1, 1]} : vector<16x128xbf16> to vector<16x8xbf16>
    %251 = vector.extract_strided_slice %39 {offsets = [0, 88], sizes = [16, 8], strides = [1, 1]} : vector<16x128xbf16> to vector<16x8xbf16>
    %cst_95 = arith.constant dense<0.000000e+00> : vector<16x16xf32>
    %252 = tpu.matmul %249, %250, %cst_95 {dimension_numbers = #tpu.dot_dimension_numbers<[1], [1], [0], [0], [0, 0, 1, 0], [], []>} : vector<16x8xbf16>, vector<16x8xbf16>, vector<16x16xf32> -> vector<16x16xf32>
    %c0_96 = arith.constant 0 : index
    %c11 = arith.constant 11 : index
    %c0_97 = arith.constant 0 : index
    %c0_98 = arith.constant 0 : index
    %253 = vector.load %arg3[%c0_96, %c11, %c0_97, %c0_98] : memref<1x16x16x16xf32, #tpu.memory_space<vmem>>, vector<1x1x16x16xf32>
    %254 = vector.shape_cast %253 : vector<1x1x16x16xf32> to vector<16x16xf32>
    %255 = arith.addf %252, %254 : vector<16x16xf32>
    %cst_99 = arith.constant dense<0xFF800000> : vector<16xf32>
    %256 = vector.multi_reduction <maximumf>, %255, %cst_99 [1] : vector<16x16xf32> to vector<16xf32>
    %257 = vector.shape_cast %256 : vector<16xf32> to vector<16x1xf32>
    %258 = vector.broadcast %257 : vector<16x1xf32> to vector<16x16xf32>
    %259 = arith.subf %255, %258 : vector<16x16xf32>
    %260 = math.exp %259 : vector<16x16xf32>
    %cst_100 = arith.constant dense<0.000000e+00> : vector<16xf32>
    %261 = vector.multi_reduction <add>, %260, %cst_100 [1] : vector<16x16xf32> to vector<16xf32>
    %262 = vector.shape_cast %261 : vector<16xf32> to vector<16x1xf32>
    %263 = tpu.reciprocal %262 {approx = true} : vector<16x1xf32> -> vector<16x1xf32>
    %264 = vector.broadcast %263 : vector<16x1xf32> to vector<16x16xf32>
    %265 = arith.mulf %260, %264 : vector<16x16xf32>
    %266 = arith.truncf %265 : vector<16x16xf32> to vector<16x16xbf16>
    %cst_101 = arith.constant dense<0.000000e+00> : vector<16x8xf32>
    %267 = tpu.matmul %266, %251, %cst_101 {dimension_numbers = #tpu.dot_dimension_numbers<[1], [0], [0], [1], [0, 0, 1, 1], [], []>} : vector<16x16xbf16>, vector<16x8xbf16>, vector<16x8xf32> -> vector<16x8xf32>
    %268 = vector.extract_strided_slice %35 {offsets = [0, 96], sizes = [16, 8], strides = [1, 1]} : vector<16x128xbf16> to vector<16x8xbf16>
    %269 = vector.extract_strided_slice %37 {offsets = [0, 96], sizes = [16, 8], strides = [1, 1]} : vector<16x128xbf16> to vector<16x8xbf16>
    %270 = vector.extract_strided_slice %39 {offsets = [0, 96], sizes = [16, 8], strides = [1, 1]} : vector<16x128xbf16> to vector<16x8xbf16>
    %cst_102 = arith.constant dense<0.000000e+00> : vector<16x16xf32>
    %271 = tpu.matmul %268, %269, %cst_102 {dimension_numbers = #tpu.dot_dimension_numbers<[1], [1], [0], [0], [0, 0, 1, 0], [], []>} : vector<16x8xbf16>, vector<16x8xbf16>, vector<16x16xf32> -> vector<16x16xf32>
    %c0_103 = arith.constant 0 : index
    %c12 = arith.constant 12 : index
    %c0_104 = arith.constant 0 : index
    %c0_105 = arith.constant 0 : index
    %272 = vector.load %arg3[%c0_103, %c12, %c0_104, %c0_105] : memref<1x16x16x16xf32, #tpu.memory_space<vmem>>, vector<1x1x16x16xf32>
    %273 = vector.shape_cast %272 : vector<1x1x16x16xf32> to vector<16x16xf32>
    %274 = arith.addf %271, %273 : vector<16x16xf32>
    %cst_106 = arith.constant dense<0xFF800000> : vector<16xf32>
    %275 = vector.multi_reduction <maximumf>, %274, %cst_106 [1] : vector<16x16xf32> to vector<16xf32>
    %276 = vector.shape_cast %275 : vector<16xf32> to vector<16x1xf32>
    %277 = vector.broadcast %276 : vector<16x1xf32> to vector<16x16xf32>
    %278 = arith.subf %274, %277 : vector<16x16xf32>
    %279 = math.exp %278 : vector<16x16xf32>
    %cst_107 = arith.constant dense<0.000000e+00> : vector<16xf32>
    %280 = vector.multi_reduction <add>, %279, %cst_107 [1] : vector<16x16xf32> to vector<16xf32>
    %281 = vector.shape_cast %280 : vector<16xf32> to vector<16x1xf32>
    %282 = tpu.reciprocal %281 {approx = true} : vector<16x1xf32> -> vector<16x1xf32>
    %283 = vector.broadcast %282 : vector<16x1xf32> to vector<16x16xf32>
    %284 = arith.mulf %279, %283 : vector<16x16xf32>
    %285 = arith.truncf %284 : vector<16x16xf32> to vector<16x16xbf16>
    %cst_108 = arith.constant dense<0.000000e+00> : vector<16x8xf32>
    %286 = tpu.matmul %285, %270, %cst_108 {dimension_numbers = #tpu.dot_dimension_numbers<[1], [0], [0], [1], [0, 0, 1, 1], [], []>} : vector<16x16xbf16>, vector<16x8xbf16>, vector<16x8xf32> -> vector<16x8xf32>
    %287 = vector.extract_strided_slice %35 {offsets = [0, 104], sizes = [16, 8], strides = [1, 1]} : vector<16x128xbf16> to vector<16x8xbf16>
    %288 = vector.extract_strided_slice %37 {offsets = [0, 104], sizes = [16, 8], strides = [1, 1]} : vector<16x128xbf16> to vector<16x8xbf16>
    %289 = vector.extract_strided_slice %39 {offsets = [0, 104], sizes = [16, 8], strides = [1, 1]} : vector<16x128xbf16> to vector<16x8xbf16>
    %cst_109 = arith.constant dense<0.000000e+00> : vector<16x16xf32>
    %290 = tpu.matmul %287, %288, %cst_109 {dimension_numbers = #tpu.dot_dimension_numbers<[1], [1], [0], [0], [0, 0, 1, 0], [], []>} : vector<16x8xbf16>, vector<16x8xbf16>, vector<16x16xf32> -> vector<16x16xf32>
    %c0_110 = arith.constant 0 : index
    %c13 = arith.constant 13 : index
    %c0_111 = arith.constant 0 : index
    %c0_112 = arith.constant 0 : index
    %291 = vector.load %arg3[%c0_110, %c13, %c0_111, %c0_112] : memref<1x16x16x16xf32, #tpu.memory_space<vmem>>, vector<1x1x16x16xf32>
    %292 = vector.shape_cast %291 : vector<1x1x16x16xf32> to vector<16x16xf32>
    %293 = arith.addf %290, %292 : vector<16x16xf32>
    %cst_113 = arith.constant dense<0xFF800000> : vector<16xf32>
    %294 = vector.multi_reduction <maximumf>, %293, %cst_113 [1] : vector<16x16xf32> to vector<16xf32>
    %295 = vector.shape_cast %294 : vector<16xf32> to vector<16x1xf32>
    %296 = vector.broadcast %295 : vector<16x1xf32> to vector<16x16xf32>
    %297 = arith.subf %293, %296 : vector<16x16xf32>
    %298 = math.exp %297 : vector<16x16xf32>
    %cst_114 = arith.constant dense<0.000000e+00> : vector<16xf32>
    %299 = vector.multi_reduction <add>, %298, %cst_114 [1] : vector<16x16xf32> to vector<16xf32>
    %300 = vector.shape_cast %299 : vector<16xf32> to vector<16x1xf32>
    %301 = tpu.reciprocal %300 {approx = true} : vector<16x1xf32> -> vector<16x1xf32>
    %302 = vector.broadcast %301 : vector<16x1xf32> to vector<16x16xf32>
    %303 = arith.mulf %298, %302 : vector<16x16xf32>
    %304 = arith.truncf %303 : vector<16x16xf32> to vector<16x16xbf16>
    %cst_115 = arith.constant dense<0.000000e+00> : vector<16x8xf32>
    %305 = tpu.matmul %304, %289, %cst_115 {dimension_numbers = #tpu.dot_dimension_numbers<[1], [0], [0], [1], [0, 0, 1, 1], [], []>} : vector<16x16xbf16>, vector<16x8xbf16>, vector<16x8xf32> -> vector<16x8xf32>
    %306 = vector.extract_strided_slice %35 {offsets = [0, 112], sizes = [16, 8], strides = [1, 1]} : vector<16x128xbf16> to vector<16x8xbf16>
    %307 = vector.extract_strided_slice %37 {offsets = [0, 112], sizes = [16, 8], strides = [1, 1]} : vector<16x128xbf16> to vector<16x8xbf16>
    %308 = vector.extract_strided_slice %39 {offsets = [0, 112], sizes = [16, 8], strides = [1, 1]} : vector<16x128xbf16> to vector<16x8xbf16>
    %cst_116 = arith.constant dense<0.000000e+00> : vector<16x16xf32>
    %309 = tpu.matmul %306, %307, %cst_116 {dimension_numbers = #tpu.dot_dimension_numbers<[1], [1], [0], [0], [0, 0, 1, 0], [], []>} : vector<16x8xbf16>, vector<16x8xbf16>, vector<16x16xf32> -> vector<16x16xf32>
    %c0_117 = arith.constant 0 : index
    %c14 = arith.constant 14 : index
    %c0_118 = arith.constant 0 : index
    %c0_119 = arith.constant 0 : index
    %310 = vector.load %arg3[%c0_117, %c14, %c0_118, %c0_119] : memref<1x16x16x16xf32, #tpu.memory_space<vmem>>, vector<1x1x16x16xf32>
    %311 = vector.shape_cast %310 : vector<1x1x16x16xf32> to vector<16x16xf32>
    %312 = arith.addf %309, %311 : vector<16x16xf32>
    %cst_120 = arith.constant dense<0xFF800000> : vector<16xf32>
    %313 = vector.multi_reduction <maximumf>, %312, %cst_120 [1] : vector<16x16xf32> to vector<16xf32>
    %314 = vector.shape_cast %313 : vector<16xf32> to vector<16x1xf32>
    %315 = vector.broadcast %314 : vector<16x1xf32> to vector<16x16xf32>
    %316 = arith.subf %312, %315 : vector<16x16xf32>
    %317 = math.exp %316 : vector<16x16xf32>
    %cst_121 = arith.constant dense<0.000000e+00> : vector<16xf32>
    %318 = vector.multi_reduction <add>, %317, %cst_121 [1] : vector<16x16xf32> to vector<16xf32>
    %319 = vector.shape_cast %318 : vector<16xf32> to vector<16x1xf32>
    %320 = tpu.reciprocal %319 {approx = true} : vector<16x1xf32> -> vector<16x1xf32>
    %321 = vector.broadcast %320 : vector<16x1xf32> to vector<16x16xf32>
    %322 = arith.mulf %317, %321 : vector<16x16xf32>
    %323 = arith.truncf %322 : vector<16x16xf32> to vector<16x16xbf16>
    %cst_122 = arith.constant dense<0.000000e+00> : vector<16x8xf32>
    %324 = tpu.matmul %323, %308, %cst_122 {dimension_numbers = #tpu.dot_dimension_numbers<[1], [0], [0], [1], [0, 0, 1, 1], [], []>} : vector<16x16xbf16>, vector<16x8xbf16>, vector<16x8xf32> -> vector<16x8xf32>
    %325 = vector.extract_strided_slice %35 {offsets = [0, 120], sizes = [16, 8], strides = [1, 1]} : vector<16x128xbf16> to vector<16x8xbf16>
    %326 = vector.extract_strided_slice %37 {offsets = [0, 120], sizes = [16, 8], strides = [1, 1]} : vector<16x128xbf16> to vector<16x8xbf16>
    %327 = vector.extract_strided_slice %39 {offsets = [0, 120], sizes = [16, 8], strides = [1, 1]} : vector<16x128xbf16> to vector<16x8xbf16>
    %cst_123 = arith.constant dense<0.000000e+00> : vector<16x16xf32>
    %328 = tpu.matmul %325, %326, %cst_123 {dimension_numbers = #tpu.dot_dimension_numbers<[1], [1], [0], [0], [0, 0, 1, 0], [], []>} : vector<16x8xbf16>, vector<16x8xbf16>, vector<16x16xf32> -> vector<16x16xf32>
    %c0_124 = arith.constant 0 : index
    %c15 = arith.constant 15 : index
    %c0_125 = arith.constant 0 : index
    %c0_126 = arith.constant 0 : index
    %329 = vector.load %arg3[%c0_124, %c15, %c0_125, %c0_126] : memref<1x16x16x16xf32, #tpu.memory_space<vmem>>, vector<1x1x16x16xf32>
    %330 = vector.shape_cast %329 : vector<1x1x16x16xf32> to vector<16x16xf32>
    %331 = arith.addf %328, %330 : vector<16x16xf32>
    %cst_127 = arith.constant dense<0xFF800000> : vector<16xf32>
    %332 = vector.multi_reduction <maximumf>, %331, %cst_127 [1] : vector<16x16xf32> to vector<16xf32>
    %333 = vector.shape_cast %332 : vector<16xf32> to vector<16x1xf32>
    %334 = vector.broadcast %333 : vector<16x1xf32> to vector<16x16xf32>
    %335 = arith.subf %331, %334 : vector<16x16xf32>
    %336 = math.exp %335 : vector<16x16xf32>
    %cst_128 = arith.constant dense<0.000000e+00> : vector<16xf32>
    %337 = vector.multi_reduction <add>, %336, %cst_128 [1] : vector<16x16xf32> to vector<16xf32>
    %338 = vector.shape_cast %337 : vector<16xf32> to vector<16x1xf32>
    %339 = tpu.reciprocal %338 {approx = true} : vector<16x1xf32> -> vector<16x1xf32>
    %340 = vector.broadcast %339 : vector<16x1xf32> to vector<16x16xf32>
    %341 = arith.mulf %336, %340 : vector<16x16xf32>
    %342 = arith.truncf %341 : vector<16x16xf32> to vector<16x16xbf16>
    %cst_129 = arith.constant dense<0.000000e+00> : vector<16x8xf32>
    %343 = tpu.matmul %342, %327, %cst_129 {dimension_numbers = #tpu.dot_dimension_numbers<[1], [0], [0], [1], [0, 0, 1, 1], [], []>} : vector<16x16xbf16>, vector<16x8xbf16>, vector<16x8xf32> -> vector<16x8xf32>
    %344 = tpu.concatenate %58, %77, %96, %115, %134, %153, %172, %191, %210, %229, %248, %267, %286, %305, %324, %343 in 1 : vector<16x8xf32>, vector<16x8xf32>, vector<16x8xf32>, vector<16x8xf32>, vector<16x8xf32>, vector<16x8xf32>, vector<16x8xf32>, vector<16x8xf32>, vector<16x8xf32>, vector<16x8xf32>, vector<16x8xf32>, vector<16x8xf32>, vector<16x8xf32>, vector<16x8xf32>, vector<16x8xf32>, vector<16x8xf32> -> vector<16x128xf32>
    %345 = arith.truncf %344 : vector<16x128xf32> to vector<16x128xbf16>
    %c0_130 = arith.constant 0 : index
    %c0_131 = arith.constant 0 : index
    %c0_132 = arith.constant 0 : index
    %346 = vector.load %arg9[%c0_130, %c0_131, %c0_132] : memref<1x128x128xbf16, #tpu.memory_space<vmem>>, vector<1x128x128xbf16>
    %347 = vector.shape_cast %346 : vector<1x128x128xbf16> to vector<128x128xbf16>
    %cst_133 = arith.constant dense<0.000000e+00> : vector<16x128xf32>
    %348 = tpu.matmul %345, %347, %cst_133 {dimension_numbers = #tpu.dot_dimension_numbers<[1], [0], [0], [1], [0, 0, 1, 1], [], []>} : vector<16x128xbf16>, vector<128x128xbf16>, vector<16x128xf32> -> vector<16x128xf32>
    %c0_134 = arith.constant 0 : index
    %c0_135 = arith.constant 0 : index
    %c0_136 = arith.constant 0 : index
    %349 = vector.load %arg10[%c0_134, %c0_135, %c0_136] : memref<1x1x128xf32, #tpu.memory_space<vmem>>, vector<1x1x128xf32>
    %350 = vector.shape_cast %349 : vector<1x1x128xf32> to vector<1x128xf32>
    %351 = vector.broadcast %350 : vector<1x128xf32> to vector<16x128xf32>
    %352 = arith.addf %348, %351 : vector<16x128xf32>
    %353 = arith.addf %3, %352 : vector<16x128xf32>
    %c0_137 = arith.constant 0 : index
    %c0_138 = arith.constant 0 : index
    %c0_139 = arith.constant 0 : index
    %354 = vector.load %arg11[%c0_137, %c0_138, %c0_139] : memref<1x1x128xf32, #tpu.memory_space<vmem>>, vector<1x1x128xf32>
    %355 = vector.shape_cast %354 : vector<1x1x128xf32> to vector<1x128xf32>
    %c0_140 = arith.constant 0 : index
    %c0_141 = arith.constant 0 : index
    %c0_142 = arith.constant 0 : index
    %356 = vector.load %arg12[%c0_140, %c0_141, %c0_142] : memref<1x1x128xf32, #tpu.memory_space<vmem>>, vector<1x1x128xf32>
    %357 = vector.shape_cast %356 : vector<1x1x128xf32> to vector<1x128xf32>
    %cst_143 = arith.constant dense<0.000000e+00> : vector<16xf32>
    %358 = vector.multi_reduction <add>, %353, %cst_143 [1] : vector<16x128xf32> to vector<16xf32>
    %359 = vector.shape_cast %358 : vector<16xf32> to vector<16x1xf32>
    %cst_144 = arith.constant 1.280000e+02 : f32
    %360 = vector.broadcast %cst_144 : f32 to vector<16x1xf32>
    %361 = arith.divf %359, %360 : vector<16x1xf32>
    %362 = vector.broadcast %361 : vector<16x1xf32> to vector<16x128xf32>
    %363 = arith.subf %353, %362 : vector<16x128xf32>
    %364 = arith.mulf %363, %363 : vector<16x128xf32>
    %cst_145 = arith.constant dense<0.000000e+00> : vector<16xf32>
    %365 = vector.multi_reduction <add>, %364, %cst_145 [1] : vector<16x128xf32> to vector<16xf32>
    %366 = vector.shape_cast %365 : vector<16xf32> to vector<16x1xf32>
    %cst_146 = arith.constant 1.280000e+02 : f32
    %367 = vector.broadcast %cst_146 : f32 to vector<16x1xf32>
    %368 = arith.divf %366, %367 : vector<16x1xf32>
    %cst_147 = arith.constant 9.99999974E-6 : f32
    %369 = vector.broadcast %cst_147 : f32 to vector<16x1xf32>
    %370 = arith.addf %368, %369 : vector<16x1xf32>
    %371 = math.rsqrt %370 : vector<16x1xf32>
    %372 = vector.broadcast %371 : vector<16x1xf32> to vector<16x128xf32>
    %373 = arith.mulf %363, %372 : vector<16x128xf32>
    %374 = vector.broadcast %355 : vector<1x128xf32> to vector<16x128xf32>
    %375 = arith.mulf %373, %374 : vector<16x128xf32>
    %376 = vector.broadcast %357 : vector<1x128xf32> to vector<16x128xf32>
    %377 = arith.addf %375, %376 : vector<16x128xf32>
    %378 = arith.truncf %377 : vector<16x128xf32> to vector<16x128xbf16>
    %c0_148 = arith.constant 0 : index
    %c0_149 = arith.constant 0 : index
    %c0_150 = arith.constant 0 : index
    %379 = vector.load %arg13[%c0_148, %c0_149, %c0_150] : memref<1x128x512xbf16, #tpu.memory_space<vmem>>, vector<1x128x512xbf16>
    %380 = vector.shape_cast %379 : vector<1x128x512xbf16> to vector<128x512xbf16>
    %cst_151 = arith.constant dense<0.000000e+00> : vector<16x512xf32>
    %381 = tpu.matmul %378, %380, %cst_151 {dimension_numbers = #tpu.dot_dimension_numbers<[1], [0], [0], [1], [0, 0, 1, 1], [], []>} : vector<16x128xbf16>, vector<128x512xbf16>, vector<16x512xf32> -> vector<16x512xf32>
    %c0_152 = arith.constant 0 : index
    %c0_153 = arith.constant 0 : index
    %c0_154 = arith.constant 0 : index
    %382 = vector.load %arg14[%c0_152, %c0_153, %c0_154] : memref<1x1x512xf32, #tpu.memory_space<vmem>>, vector<1x1x512xf32>
    %383 = vector.shape_cast %382 : vector<1x1x512xf32> to vector<1x512xf32>
    %384 = vector.broadcast %383 : vector<1x512xf32> to vector<16x512xf32>
    %385 = arith.addf %381, %384 : vector<16x512xf32>
    %cst_155 = arith.constant 5.000000e-01 : f32
    %386 = vector.broadcast %cst_155 : f32 to vector<16x512xf32>
    %387 = arith.mulf %386, %385 : vector<16x512xf32>
    %cst_156 = arith.constant 0.707106769 : f32
    %388 = vector.broadcast %cst_156 : f32 to vector<16x512xf32>
    %389 = arith.mulf %385, %388 : vector<16x512xf32>
    %390 = math.erf %389 : vector<16x512xf32>
    %cst_157 = arith.constant 1.000000e+00 : f32
    %391 = vector.broadcast %cst_157 : f32 to vector<16x512xf32>
    %392 = arith.addf %391, %390 : vector<16x512xf32>
    %393 = arith.mulf %387, %392 : vector<16x512xf32>
    %394 = arith.truncf %393 : vector<16x512xf32> to vector<16x512xbf16>
    %c0_158 = arith.constant 0 : index
    %c0_159 = arith.constant 0 : index
    %c0_160 = arith.constant 0 : index
    %395 = vector.load %arg15[%c0_158, %c0_159, %c0_160] : memref<1x512x128xbf16, #tpu.memory_space<vmem>>, vector<1x512x128xbf16>
    %396 = vector.shape_cast %395 : vector<1x512x128xbf16> to vector<512x128xbf16>
    %cst_161 = arith.constant dense<0.000000e+00> : vector<16x128xf32>
    %397 = tpu.matmul %394, %396, %cst_161 {dimension_numbers = #tpu.dot_dimension_numbers<[1], [0], [0], [1], [0, 0, 1, 1], [], []>} : vector<16x512xbf16>, vector<512x128xbf16>, vector<16x128xf32> -> vector<16x128xf32>
    %c0_162 = arith.constant 0 : index
    %c0_163 = arith.constant 0 : index
    %c0_164 = arith.constant 0 : index
    %398 = vector.load %arg16[%c0_162, %c0_163, %c0_164] : memref<1x1x128xf32, #tpu.memory_space<vmem>>, vector<1x1x128xf32>
    %399 = vector.shape_cast %398 : vector<1x1x128xf32> to vector<1x128xf32>
    %400 = vector.broadcast %399 : vector<1x128xf32> to vector<16x128xf32>
    %401 = arith.addf %397, %400 : vector<16x128xf32>
    %402 = arith.addf %353, %401 : vector<16x128xf32>
    %c0_165 = arith.constant 0 : index
    %c0_166 = arith.constant 0 : index
    %403 = vector.load %arg20[%c0_165, %c0_166] : memref<16x128xf32, #tpu.memory_space<vmem>>, vector<16x128xf32>
    tpu.vector_store %arg20[%c0_165, %c0_166], %402 {strides = array<i32>} : memref<16x128xf32, #tpu.memory_space<vmem>>, vector<16x128xf32>,
    %c1_i32 = arith.constant 1 : i32
    %404 = arith.cmpi eq, %arg1, %c1_i32 : i32
    %405 = arith.extui %404 : i1 to i32
    %c0_i32_167 = arith.constant 0 : i32
    %406 = arith.cmpi ne, %405, %c0_i32_167 : i32
    scf.if %406 {
      %c0_168 = arith.constant 0 : index
      %c0_169 = arith.constant 0 : index
      %407 = vector.load %arg17[%c0_168, %c0_169] : memref<1x128xf32, #tpu.memory_space<vmem>>, vector<1x128xf32>
      %c0_170 = arith.constant 0 : index
      %c0_171 = arith.constant 0 : index
      %408 = vector.load %arg18[%c0_170, %c0_171] : memref<1x128xf32, #tpu.memory_space<vmem>>, vector<1x128xf32>
      %cst_172 = arith.constant dense<0.000000e+00> : vector<16xf32>
      %409 = vector.multi_reduction <add>, %402, %cst_172 [1] : vector<16x128xf32> to vector<16xf32>
      %410 = vector.shape_cast %409 : vector<16xf32> to vector<16x1xf32>
      %cst_173 = arith.constant 1.280000e+02 : f32
      %411 = vector.broadcast %cst_173 : f32 to vector<16x1xf32>
      %412 = arith.divf %410, %411 : vector<16x1xf32>
      %413 = vector.broadcast %412 : vector<16x1xf32> to vector<16x128xf32>
      %414 = arith.subf %402, %413 : vector<16x128xf32>
      %415 = arith.mulf %414, %414 : vector<16x128xf32>
      %cst_174 = arith.constant dense<0.000000e+00> : vector<16xf32>
      %416 = vector.multi_reduction <add>, %415, %cst_174 [1] : vector<16x128xf32> to vector<16xf32>
      %417 = vector.shape_cast %416 : vector<16xf32> to vector<16x1xf32>
      %cst_175 = arith.constant 1.280000e+02 : f32
      %418 = vector.broadcast %cst_175 : f32 to vector<16x1xf32>
      %419 = arith.divf %417, %418 : vector<16x1xf32>
      %cst_176 = arith.constant 9.99999974E-6 : f32
      %420 = vector.broadcast %cst_176 : f32 to vector<16x1xf32>
      %421 = arith.addf %419, %420 : vector<16x1xf32>
      %422 = math.rsqrt %421 : vector<16x1xf32>
      %423 = vector.broadcast %422 : vector<16x1xf32> to vector<16x128xf32>
      %424 = arith.mulf %414, %423 : vector<16x128xf32>
      %425 = vector.broadcast %407 : vector<1x128xf32> to vector<16x128xf32>
      %426 = arith.mulf %424, %425 : vector<16x128xf32>
      %427 = vector.broadcast %408 : vector<1x128xf32> to vector<16x128xf32>
      %428 = arith.addf %426, %427 : vector<16x128xf32>
      %c0_177 = arith.constant 0 : index
      %c0_178 = arith.constant 0 : index
      %c0_179 = arith.constant 0 : index
      %429 = vector.load %arg19[%c0_177, %c0_178, %c0_179] : memref<1x16x128xf32, #tpu.memory_space<vmem>>, vector<1x16x128xf32>
      %430 = vector.shape_cast %429 : vector<1x16x128xf32> to vector<16x128xf32>
      %431 = vector.shape_cast %428 : vector<16x128xf32> to vector<1x16x128xf32>
      tpu.vector_store %arg19[%c0_177, %c0_178, %c0_179], %431 {strides = array<i32>} : memref<1x16x128xf32, #tpu.memory_space<vmem>>, vector<1x16x128xf32>,
    } else {
    }
    return
  }
  func.func @transform_0(%arg0: i32, %arg1: i32) -> (i32, i32, i32) {
    %c0_i32 = arith.constant 0 : i32
    %c0_i32_0 = arith.constant 0 : i32
    %c0_i32_1 = arith.constant 0 : i32
    return %arg0, %c0_i32, %c0_i32_0 : i32, i32, i32
  }
  func.func @transform_1(%arg0: i32, %arg1: i32) -> (i32, i32, i32, i32) {
    %c0_i32 = arith.constant 0 : i32
    %c0_i32_0 = arith.constant 0 : i32
    %c0_i32_1 = arith.constant 0 : i32
    %c0_i32_2 = arith.constant 0 : i32
    return %arg0, %c0_i32, %c0_i32_0, %c0_i32_1 : i32, i32, i32, i32
  }
  func.func @transform_2(%arg0: i32, %arg1: i32) -> (i32, i32) {
    %c0_i32 = arith.constant 0 : i32
    %c0_i32_0 = arith.constant 0 : i32
    %c0_i32_1 = arith.constant 0 : i32
    return %c0_i32, %c0_i32_0 : i32, i32
  }
  func.func @transform_3(%arg0: i32, %arg1: i32) -> (i32, i32) {
    %c0_i32 = arith.constant 0 : i32
    %c0_i32_0 = arith.constant 0 : i32
    %c0_i32_1 = arith.constant 0 : i32
    return %c0_i32, %c0_i32_0 : i32, i32
  }
  func.func @transform_4(%arg0: i32, %arg1: i32) -> (i32, i32, i32) {
    %c0_i32 = arith.constant 0 : i32
    %c0_i32_0 = arith.constant 0 : i32
    %c0_i32_1 = arith.constant 0 : i32
    return %arg1, %c0_i32, %c0_i32_0 : i32, i32, i32
  }
  func.func @transform_5(%arg0: i32, %arg1: i32) -> (i32, i32, i32) {
    %c0_i32 = arith.constant 0 : i32
    %c0_i32_0 = arith.constant 0 : i32
    %c0_i32_1 = arith.constant 0 : i32
    return %arg1, %c0_i32, %c0_i32_0 : i32, i32, i32
  }
  func.func @transform_6(%arg0: i32, %arg1: i32) -> (i32, i32, i32) {
    %c0_i32 = arith.constant 0 : i32
    %c0_i32_0 = arith.constant 0 : i32
    %c0_i32_1 = arith.constant 0 : i32
    return %arg1, %c0_i32, %c0_i32_0 : i32, i32, i32
  }
  func.func @transform_7(%arg0: i32, %arg1: i32) -> (i32, i32, i32) {
    %c0_i32 = arith.constant 0 : i32
    %c0_i32_0 = arith.constant 0 : i32
    %c0_i32_1 = arith.constant 0 : i32
    return %arg1, %c0_i32, %c0_i32_0 : i32, i32, i32
  }
  func.func @transform_8(%arg0: i32, %arg1: i32) -> (i32, i32, i32) {
    %c0_i32 = arith.constant 0 : i32
    %c0_i32_0 = arith.constant 0 : i32
    %c0_i32_1 = arith.constant 0 : i32
    return %arg1, %c0_i32, %c0_i32_0 : i32, i32, i32
  }
  func.func @transform_9(%arg0: i32, %arg1: i32) -> (i32, i32, i32) {
    %c0_i32 = arith.constant 0 : i32
    %c0_i32_0 = arith.constant 0 : i32
    %c0_i32_1 = arith.constant 0 : i32
    return %arg1, %c0_i32, %c0_i32_0 : i32, i32, i32
  }
  func.func @transform_10(%arg0: i32, %arg1: i32) -> (i32, i32, i32) {
    %c0_i32 = arith.constant 0 : i32
    %c0_i32_0 = arith.constant 0 : i32
    %c0_i32_1 = arith.constant 0 : i32
    return %arg1, %c0_i32, %c0_i32_0 : i32, i32, i32
  }
  func.func @transform_11(%arg0: i32, %arg1: i32) -> (i32, i32, i32) {
    %c0_i32 = arith.constant 0 : i32
    %c0_i32_0 = arith.constant 0 : i32
    %c0_i32_1 = arith.constant 0 : i32
    return %arg1, %c0_i32, %c0_i32_0 : i32, i32, i32
  }
  func.func @transform_12(%arg0: i32, %arg1: i32) -> (i32, i32, i32) {
    %c0_i32 = arith.constant 0 : i32
    %c0_i32_0 = arith.constant 0 : i32
    %c0_i32_1 = arith.constant 0 : i32
    return %arg1, %c0_i32, %c0_i32_0 : i32, i32, i32
  }
  func.func @transform_13(%arg0: i32, %arg1: i32) -> (i32, i32, i32) {
    %c0_i32 = arith.constant 0 : i32
    %c0_i32_0 = arith.constant 0 : i32
    %c0_i32_1 = arith.constant 0 : i32
    return %arg1, %c0_i32, %c0_i32_0 : i32, i32, i32
  }
  func.func @transform_14(%arg0: i32, %arg1: i32) -> (i32, i32, i32) {
    %c0_i32 = arith.constant 0 : i32
    %c0_i32_0 = arith.constant 0 : i32
    %c0_i32_1 = arith.constant 0 : i32
    return %arg1, %c0_i32, %c0_i32_0 : i32, i32, i32
  }
  func.func @transform_15(%arg0: i32, %arg1: i32) -> (i32, i32) {
    %c0_i32 = arith.constant 0 : i32
    %c0_i32_0 = arith.constant 0 : i32
    %c0_i32_1 = arith.constant 0 : i32
    return %c0_i32, %c0_i32_0 : i32, i32
  }
  func.func @transform_16(%arg0: i32, %arg1: i32) -> (i32, i32) {
    %c0_i32 = arith.constant 0 : i32
    %c0_i32_0 = arith.constant 0 : i32
    %c0_i32_1 = arith.constant 0 : i32
    return %c0_i32, %c0_i32_0 : i32, i32
  }
  func.func @transform_17(%arg0: i32, %arg1: i32) -> (i32, i32, i32) {
    %c0_i32 = arith.constant 0 : i32
    %c0_i32_0 = arith.constant 0 : i32
    %c0_i32_1 = arith.constant 0 : i32
    return %arg0, %c0_i32, %c0_i32_0 : i32, i32, i32
  }
}

</mosaic_0001>

<llo_original>
// kernel: tpu_custom_call.1
$region0: #{tpu_custom_call.1}
  #allocation0 [shape = 'u32[]', space=smem, size = 0x4, offset = 0x4, fixed_abs, tag = 'smem constant byte address 0x4 - core index']
  #allocation1 [shape = 'u32[144,128]{1,0:T(1,128)}', space=vmem, size = 0x12000, scoped, tag = 'internal scratch']
  #allocation2 [shape = 'f32[16,128]{1,0:T(8,128)}', space=vmem, size = 0x2000, scoped, tag = 'scratch operand']
  %s0 = inlined_call_operand.hbm [shape: bf16[2,16,256], index: 0, kind: input, shape index: {}]
  %s1 = inlined_call_operand.hbm [shape: f32[2,16,16,16], index: 1, kind: input, shape index: {}]
  %s2 = inlined_call_operand.hbm [shape: bf16[256,128], index: 2, kind: input, shape index: {}]
  %s3 = inlined_call_operand.hbm [shape: f32[1,128], index: 3, kind: input, shape index: {}]
  %s4 = inlined_call_operand.vmem [shape: f32[2,1,128], index: 4, kind: input, shape index: {}]
  %s5 = inlined_call_operand.vmem [shape: f32[2,1,128], index: 5, kind: input, shape index: {}]
  %s6 = inlined_call_operand.hbm [shape: bf16[2,128,384], index: 6, kind: input, shape index: {}]
  %s7 = inlined_call_operand.hbm [shape: bf16[2,128,128], index: 7, kind: input, shape index: {}]
  %s8 = inlined_call_operand.vmem [shape: f32[2,1,128], index: 8, kind: input, shape index: {}]
  %s9 = inlined_call_operand.vmem [shape: f32[2,1,128], index: 9, kind: input, shape index: {}]
  %s10 = inlined_call_operand.vmem [shape: f32[2,1,128], index: 10, kind: input, shape index: {}]
  %s11 = inlined_call_operand.hbm [shape: bf16[2,128,512], index: 11, kind: input, shape index: {}]
  %s12 = inlined_call_operand.vmem [shape: f32[2,1,512], index: 12, kind: input, shape index: {}]
  %s13 = inlined_call_operand.hbm [shape: bf16[2,512,128], index: 13, kind: input, shape index: {}]
  %s14 = inlined_call_operand.vmem [shape: f32[2,1,128], index: 14, kind: input, shape index: {}]
  %s15 = inlined_call_operand.vmem [shape: f32[1,128], index: 15, kind: input, shape index: {}]
  %s16 = inlined_call_operand.vmem [shape: f32[1,128], index: 16, kind: input, shape index: {}]
  %s17 = inlined_call_operand.hbm [shape: f32[2,16,128], index: 17, kind: output, shape index: {}]
  %s18 = sld [smem:[#allocation0]]
  $region141: #{tpu_custom_call.1} parent=0
    _
  %s20 = ssub.s32 1, %s18
  %s21 = scalar_select 0, %s20, %s18
  $region1: #{tpu_custom_call.1} parent=0
    #allocation3 [shape = 'u8[16384]{0}', space=vmem, size = 0x4000, scoped, tag = 'input window, operand 0']
    #allocation4 [shape = 's32[2]{0}', space=sflag, size = 0x8, scoped, tag = 'scoped memory for tpu_custom_call.1']
    #allocation5 [shape = 's32[2]{0}', space=sflag, size = 0x8, scoped, tag = 'scoped memory for tpu_custom_call.1']
    #allocation6 [shape = 'u8[262144]{0}', space=vmem, size = 0x40000, scoped, tag = 'input window, operand 1']
    #allocation7 [shape = 's32[2]{0}', space=sflag, size = 0x8, scoped, tag = 'scoped memory for tpu_custom_call.1']
    #allocation8 [shape = 'u8[65536]{0}', space=vmem, size = 0x10000, scoped, tag = 'input window, operand 2, single buffered']
    #allocation9 [shape = 'u8[512]{0}', space=vmem, size = 0x400, scoped, tag = 'input window, operand 3, single buffered']
    #allocation10 [shape = 's32[1]{0}', space=sflag, size = 0x4, scoped, tag = 'scoped memory for tpu_custom_call.1']
    #allocation11 [shape = 'u8[196608]{0}', space=vmem, size = 0x30000, scoped, tag = 'input window, operand 6']
    #allocation12 [shape = 'u8[65536]{0}', space=vmem, size = 0x10000, scoped, tag = 'input window, operand 7']
    #allocation13 [shape = 'u8[262144]{0}', space=vmem, size = 0x40000, scoped, tag = 'input window, operand 11']
    #allocation14 [shape = 'u8[262144]{0}', space=vmem, size = 0x40000, scoped, tag = 'input window, operand 13']
    #allocation15 [shape = 'u8[16384]{0}', space=vmem, size = 0x4000, scoped, tag = 'output window, operand 0']
    %22 = vsyncpa [#allocation4], 0
    %s23 = scalar_lea.sflag [#allocation4], 1
    %24 = vsyncpa %s23, 0
    %25 = vsyncpa [#allocation7], 0
    %s26 = scalar_lea.sflag [#allocation7], 1
    %27 = vsyncpa %s26, 0
    %28 = vsyncpa [#allocation10], 0
    %29 = vsyncpa [#allocation5], 0
    %s30 = scalar_lea.sflag [#allocation5], 1
    %31 = vsyncpa %s30, 0
    loop: start=0, step=1, limit=6
    $region2: #{tpu_custom_call.1} parent=1 // loop_pre_header
      _
    $region3: #{tpu_custom_call.1} parent=1 // loop_header
      %s33 = sphi 0, %s37
      %p34 = scmp.ge.s32.totalorder %s33, 6
      %s40 = sphi 0, %s52
      %s41 = sphi 0, %s48
      %s42 = sphi 0, %s40
      %s43 = sphi 0, %s41
      %s44 = sphi 0, %s42
      %s45 = sphi 0, %s43
      %s55 = sphi 0, %s57
      %s58 = sphi 0, %s55
      %s59 = sphi 0, %s58
      %s75 = sphi 0, %s59
      %s81 = sphi 0, %s83
      %s84 = sphi 0, %s81
      %s85 = sphi 0, %s84
      %s101 = sphi 0, %s85
      %s105 = sphi 0, %s105
      %s107 = sphi 0, %s105
      %s108 = sphi 0, %s107
      %s122 = sphi 0, %s108
      %s126 = sphi 0, %s126
      %s128 = sphi 0, %s126
      %s129 = sphi 0, %s128
      %s143 = sphi 0, %s129
      %s149 = sphi 0, %s151
      %s152 = sphi 0, %s149
      %s153 = sphi 0, %s152
      %s169 = sphi 0, %s153
      %s175 = sphi 0, %s177
      %s178 = sphi 0, %s175
      %s179 = sphi 0, %s178
      %s195 = sphi 0, %s179
      %s201 = sphi 0, %s203
      %s204 = sphi 0, %s201
      %s205 = sphi 0, %s204
      %s221 = sphi 0, %s205
      %s227 = sphi 0, %s229
      %s230 = sphi 0, %s227
      %s231 = sphi 0, %s230
      %s247 = sphi 0, %s231
      %s253 = sphi 0, %s255
      %s256 = sphi 0, %s253
      %s257 = sphi 0, %s256
      %s273 = sphi 0, %s257
      %s279 = sphi 0, %s281
      %s282 = sphi 0, %s279
      %s283 = sphi 0, %s282
      %s299 = sphi 0, %s283
      %s305 = sphi 0, %s307
      %s308 = sphi 0, %s305
      %s309 = sphi 0, %s308
      %s325 = sphi 0, %s309
      %s331 = sphi 0, %s333
      %s334 = sphi 0, %s331
      %s335 = sphi 0, %s334
      %s351 = sphi 0, %s335
      %s357 = sphi 0, %s359
      %s360 = sphi 0, %s357
      %s361 = sphi 0, %s360
      %s377 = sphi 0, %s361
      %s383 = sphi 0, %s385
      %s386 = sphi 0, %s383
      %s387 = sphi 0, %s386
      %s403 = sphi 0, %s387
      %s409 = sphi 0, %s411
      %s412 = sphi 0, %s409
      %s413 = sphi 0, %s412
      %s429 = sphi 0, %s413
      %s433 = sphi 0, %s433
      %s435 = sphi 0, %s433
      %s436 = sphi 0, %s435
      %s450 = sphi 0, %s436
      %s454 = sphi 0, %s454
      %s456 = sphi 0, %s454
      %s457 = sphi 0, %s456
      %s471 = sphi 0, %s457
      %s477 = sphi 0, %s479
      %s480 = sphi 0, %s477
      %s481 = sphi 0, %s480
      %s497 = sphi 0, %s481
    $region4: #{tpu_custom_call.1} parent=1 // loop_header_branch
      %36 = sbr.rel (%p34) target = $region8
    $region5: #{tpu_custom_call.1} parent=1 // loop_body
      %s38 = ssub.s32 %s33, 1
      %s39 = ssub.s32 %s33, 2
      %s46 = sadd.s32 1, %s41
      %p47 = scmp.ge.s32.totalorder %s46, 2
      %s48 = scalar_select %p47, 0, %s46
      %s49 = sadd.s32 1, %s40
      %s50 = scalar_select %p47, %s49, %s40
      %p51 = scmp.ge.s32.totalorder %s50, 2
      %s52 = scalar_select %p51, 0, %s50
      %s53 = ssub.s32 %s40, %s52
      %p54 = scmp.eq.s32.totalorder %s53, 0
      %s56 = sadd.s32 %s55, 1
      %s57 = scalar_select %p54, %s55, %s56
      %p60 = pneg %p54
      %p61 = scmp.eq.s32.totalorder %s33, 3
      %p62 = por %p60, %p61
      %p63 = scmp.ne.s32.totalorder %s55, %s58
      %p64 = scmp.eq.s32.totalorder %s33, 0
      %p65 = por %p63, %p64
      %p66 = scmp.ne.s32.totalorder %s55, %s58
      %p67 = scmp.eq.s32.totalorder %s38, 3
      %p68 = por %p66, %p67
      %p69 = scmp.ne.s32.totalorder %s58, %s59
      %p70 = scmp.eq.s32.totalorder %s38, 0
      %p71 = por %p69, %p70
      %p72 = scmp.ne.s32.totalorder %s58, %s59
      %p73 = scmp.eq.s32.totalorder %s39, 3
      %p74 = por %p72, %p73
      %p76 = scmp.ne.s32.totalorder %s59, %s75
      %p77 = scmp.eq.s32.totalorder %s39, 0
      %p78 = por %p76, %p77
      %s79 = ssub.s32 %s40, %s52
      %p80 = scmp.eq.s32.totalorder %s79, 0
      %s82 = sadd.s32 %s81, 1
      %s83 = scalar_select %p80, %s81, %s82
      %p86 = pneg %p80
      %p87 = scmp.eq.s32.totalorder %s33, 3
      %p88 = por %p86, %p87
      %p89 = scmp.ne.s32.totalorder %s81, %s84
      %p90 = scmp.eq.s32.totalorder %s33, 0
      %p91 = por %p89, %p90
      %p92 = scmp.ne.s32.totalorder %s81, %s84
      %p93 = scmp.eq.s32.totalorder %s38, 3
      %p94 = por %p92, %p93
      %p95 = scmp.ne.s32.totalorder %s84, %s85
      %p96 = scmp.eq.s32.totalorder %s38, 0
      %p97 = por %p95, %p96
      %p98 = scmp.ne.s32.totalorder %s84, %s85
      %p99 = scmp.eq.s32.totalorder %s39, 3
      %p100 = por %p98, %p99
      %p102 = scmp.ne.s32.totalorder %s85, %s101
      %p103 = scmp.eq.s32.totalorder %s39, 0
      %p104 = por %p102, %p103
      %s106 = sadd.s32 %s105, 1
      %p109 = scmp.eq.s32.totalorder %s33, 3
      %p110 = scmp.ne.s32.totalorder %s105, %s107
      %p111 = scmp.eq.s32.totalorder %s33, 0
      %p112 = por %p110, %p111
      %p113 = scmp.ne.s32.totalorder %s105, %s107
      %p114 = scmp.eq.s32.totalorder %s38, 3
      %p115 = por %p113, %p114
      %p116 = scmp.ne.s32.totalorder %s107, %s108
      %p117 = scmp.eq.s32.totalorder %s38, 0
      %p118 = por %p116, %p117
      %p119 = scmp.ne.s32.totalorder %s107, %s108
      %p120 = scmp.eq.s32.totalorder %s39, 3
      %p121 = por %p119, %p120
      %p123 = scmp.ne.s32.totalorder %s108, %s122
      %p124 = scmp.eq.s32.totalorder %s39, 0
      %p125 = por %p123, %p124
      %s127 = sadd.s32 %s126, 1
      %p130 = scmp.eq.s32.totalorder %s33, 3
      %p131 = scmp.ne.s32.totalorder %s126, %s128
      %p132 = scmp.eq.s32.totalorder %s33, 0
      %p133 = por %p131, %p132
      %p134 = scmp.ne.s32.totalorder %s126, %s128
      %p135 = scmp.eq.s32.totalorder %s38, 3
      %p136 = por %p134, %p135
      %p137 = scmp.ne.s32.totalorder %s128, %s129
      %p138 = scmp.eq.s32.totalorder %s38, 0
      %p139 = por %p137, %p138
      %p140 = scmp.ne.s32.totalorder %s128, %s129
      %p141 = scmp.eq.s32.totalorder %s39, 3
      %p142 = por %p140, %p141
      %p144 = scmp.ne.s32.totalorder %s129, %s143
      %p145 = scmp.eq.s32.totalorder %s39, 0
      %p146 = por %p144, %p145
      %s147 = ssub.s32 %s41, %s48
      %p148 = scmp.eq.s32.totalorder %s147, 0
      %s150 = sadd.s32 %s149, 1
      %s151 = scalar_select %p148, %s149, %s150
      %p154 = pneg %p148
      %p155 = scmp.eq.s32.totalorder %s33, 3
      %p156 = por %p154, %p155
      %p157 = scmp.ne.s32.totalorder %s149, %s152
      %p158 = scmp.eq.s32.totalorder %s33, 0
      %p159 = por %p157, %p158
      %p160 = scmp.ne.s32.totalorder %s149, %s152
      %p161 = scmp.eq.s32.totalorder %s38, 3
      %p162 = por %p160, %p161
      %p163 = scmp.ne.s32.totalorder %s152, %s153
      %p164 = scmp.eq.s32.totalorder %s38, 0
      %p165 = por %p163, %p164
      %p166 = scmp.ne.s32.totalorder %s152, %s153
      %p167 = scmp.eq.s32.totalorder %s39, 3
      %p168 = por %p166, %p167
      %p170 = scmp.ne.s32.totalorder %s153, %s169
      %p171 = scmp.eq.s32.totalorder %s39, 0
      %p172 = por %p170, %p171
      %s173 = ssub.s32 %s41, %s48
      %p174 = scmp.eq.s32.totalorder %s173, 0
      %s176 = sadd.s32 %s175, 1
      %s177 = scalar_select %p174, %s175, %s176
      %p180 = pneg %p174
      %p181 = scmp.eq.s32.totalorder %s33, 3
      %p182 = por %p180, %p181
      %p183 = scmp.ne.s32.totalorder %s175, %s178
      %p184 = scmp.eq.s32.totalorder %s33, 0
      %p185 = por %p183, %p184
      %p186 = scmp.ne.s32.totalorder %s175, %s178
      %p187 = scmp.eq.s32.totalorder %s38, 3
      %p188 = por %p186, %p187
      %p189 = scmp.ne.s32.totalorder %s178, %s179
      %p190 = scmp.eq.s32.totalorder %s38, 0
      %p191 = por %p189, %p190
      %p192 = scmp.ne.s32.totalorder %s178, %s179
      %p193 = scmp.eq.s32.totalorder %s39, 3
      %p194 = por %p192, %p193
      %p196 = scmp.ne.s32.totalorder %s179, %s195
      %p197 = scmp.eq.s32.totalorder %s39, 0
      %p198 = por %p196, %p197
      %s199 = ssub.s32 %s41, %s48
      %p200 = scmp.eq.s32.totalorder %s199, 0
      %s202 = sadd.s32 %s201, 1
      %s203 = scalar_select %p200, %s201, %s202
      %p206 = pneg %p200
      %p207 = scmp.eq.s32.totalorder %s33, 3
      %p208 = por %p206, %p207
      %p209 = scmp.ne.s32.totalorder %s201, %s204
      %p210 = scmp.eq.s32.totalorder %s33, 0
      %p211 = por %p209, %p210
      %p212 = scmp.ne.s32.totalorder %s201, %s204
      %p213 = scmp.eq.s32.totalorder %s38, 3
      %p214 = por %p212, %p213
      %p215 = scmp.ne.s32.totalorder %s204, %s205
      %p216 = scmp.eq.s32.totalorder %s38, 0
      %p217 = por %p215, %p216
      %p218 = scmp.ne.s32.totalorder %s204, %s205
      %p219 = scmp.eq.s32.totalorder %s39, 3
      %p220 = por %p218, %p219
      %p222 = scmp.ne.s32.totalorder %s205, %s221
      %p223 = scmp.eq.s32.totalorder %s39, 0
      %p224 = por %p222, %p223
      %s225 = ssub.s32 %s41, %s48
      %p226 = scmp.eq.s32.totalorder %s225, 0
      %s228 = sadd.s32 %s227, 1
      %s229 = scalar_select %p226, %s227, %s228
      %p232 = pneg %p226
      %p233 = scmp.eq.s32.totalorder %s33, 3
      %p234 = por %p232, %p233
      %p235 = scmp.ne.s32.totalorder %s227, %s230
      %p236 = scmp.eq.s32.totalorder %s33, 0
      %p237 = por %p235, %p236
      %p238 = scmp.ne.s32.totalorder %s227, %s230
      %p239 = scmp.eq.s32.totalorder %s38, 3
      %p240 = por %p238, %p239
      %p241 = scmp.ne.s32.totalorder %s230, %s231
      %p242 = scmp.eq.s32.totalorder %s38, 0
      %p243 = por %p241, %p242
      %p244 = scmp.ne.s32.totalorder %s230, %s231
      %p245 = scmp.eq.s32.totalorder %s39, 3
      %p246 = por %p244, %p245
      %p248 = scmp.ne.s32.totalorder %s231, %s247
      %p249 = scmp.eq.s32.totalorder %s39, 0
      %p250 = por %p248, %p249
      %s251 = ssub.s32 %s41, %s48
      %p252 = scmp.eq.s32.totalorder %s251, 0
      %s254 = sadd.s32 %s253, 1
      %s255 = scalar_select %p252, %s253, %s254
      %p258 = pneg %p252
      %p259 = scmp.eq.s32.totalorder %s33, 3
      %p260 = por %p258, %p259
      %p261 = scmp.ne.s32.totalorder %s253, %s256
      %p262 = scmp.eq.s32.totalorder %s33, 0
      %p263 = por %p261, %p262
      %p264 = scmp.ne.s32.totalorder %s253, %s256
      %p265 = scmp.eq.s32.totalorder %s38, 3
      %p266 = por %p264, %p265
      %p267 = scmp.ne.s32.totalorder %s256, %s257
      %p268 = scmp.eq.s32.totalorder %s38, 0
      %p269 = por %p267, %p268
      %p270 = scmp.ne.s32.totalorder %s256, %s257
      %p271 = scmp.eq.s32.totalorder %s39, 3
      %p272 = por %p270, %p271
      %p274 = scmp.ne.s32.totalorder %s257, %s273
      %p275 = scmp.eq.s32.totalorder %s39, 0
      %p276 = por %p274, %p275
      %s277 = ssub.s32 %s41, %s48
      %p278 = scmp.eq.s32.totalorder %s277, 0
      %s280 = sadd.s32 %s279, 1
      %s281 = scalar_select %p278, %s279, %s280
      %p284 = pneg %p278
      %p285 = scmp.eq.s32.totalorder %s33, 3
      %p286 = por %p284, %p285
      %p287 = scmp.ne.s32.totalorder %s279, %s282
      %p288 = scmp.eq.s32.totalorder %s33, 0
      %p289 = por %p287, %p288
      %p290 = scmp.ne.s32.totalorder %s279, %s282
      %p291 = scmp.eq.s32.totalorder %s38, 3
      %p292 = por %p290, %p291
      %p293 = scmp.ne.s32.totalorder %s282, %s283
      %p294 = scmp.eq.s32.totalorder %s38, 0
      %p295 = por %p293, %p294
      %p296 = scmp.ne.s32.totalorder %s282, %s283
      %p297 = scmp.eq.s32.totalorder %s39, 3
      %p298 = por %p296, %p297
      %p300 = scmp.ne.s32.totalorder %s283, %s299
      %p301 = scmp.eq.s32.totalorder %s39, 0
      %p302 = por %p300, %p301
      %s303 = ssub.s32 %s41, %s48
      %p304 = scmp.eq.s32.totalorder %s303, 0
      %s306 = sadd.s32 %s305, 1
      %s307 = scalar_select %p304, %s305, %s306
      %p310 = pneg %p304
      %p311 = scmp.eq.s32.totalorder %s33, 3
      %p312 = por %p310, %p311
      %p313 = scmp.ne.s32.totalorder %s305, %s308
      %p314 = scmp.eq.s32.totalorder %s33, 0
      %p315 = por %p313, %p314
      %p316 = scmp.ne.s32.totalorder %s305, %s308
      %p317 = scmp.eq.s32.totalorder %s38, 3
      %p318 = por %p316, %p317
      %p319 = scmp.ne.s32.totalorder %s308, %s309
      %p320 = scmp.eq.s32.totalorder %s38, 0
      %p321 = por %p319, %p320
      %p322 = scmp.ne.s32.totalorder %s308, %s309
      %p323 = scmp.eq.s32.totalorder %s39, 3
      %p324 = por %p322, %p323
      %p326 = scmp.ne.s32.totalorder %s309, %s325
      %p327 = scmp.eq.s32.totalorder %s39, 0
      %p328 = por %p326, %p327
      %s329 = ssub.s32 %s41, %s48
      %p330 = scmp.eq.s32.totalorder %s329, 0
      %s332 = sadd.s32 %s331, 1
      %s333 = scalar_select %p330, %s331, %s332
      %p336 = pneg %p330
      %p337 = scmp.eq.s32.totalorder %s33, 3
      %p338 = por %p336, %p337
      %p339 = scmp.ne.s32.totalorder %s331, %s334
      %p340 = scmp.eq.s32.totalorder %s33, 0
      %p341 = por %p339, %p340
      %p342 = scmp.ne.s32.totalorder %s331, %s334
      %p343 = scmp.eq.s32.totalorder %s38, 3
      %p344 = por %p342, %p343
      %p345 = scmp.ne.s32.totalorder %s334, %s335
      %p346 = scmp.eq.s32.totalorder %s38, 0
      %p347 = por %p345, %p346
      %p348 = scmp.ne.s32.totalorder %s334, %s335
      %p349 = scmp.eq.s32.totalorder %s39, 3
      %p350 = por %p348, %p349
      %p352 = scmp.ne.s32.totalorder %s335, %s351
      %p353 = scmp.eq.s32.totalorder %s39, 0
      %p354 = por %p352, %p353
      %s355 = ssub.s32 %s41, %s48
      %p356 = scmp.eq.s32.totalorder %s355, 0
      %s358 = sadd.s32 %s357, 1
      %s359 = scalar_select %p356, %s357, %s358
      %p362 = pneg %p356
      %p363 = scmp.eq.s32.totalorder %s33, 3
      %p364 = por %p362, %p363
      %p365 = scmp.ne.s32.totalorder %s357, %s360
      %p366 = scmp.eq.s32.totalorder %s33, 0
      %p367 = por %p365, %p366
      %p368 = scmp.ne.s32.totalorder %s357, %s360
      %p369 = scmp.eq.s32.totalorder %s38, 3
      %p370 = por %p368, %p369
      %p371 = scmp.ne.s32.totalorder %s360, %s361
      %p372 = scmp.eq.s32.totalorder %s38, 0
      %p373 = por %p371, %p372
      %p374 = scmp.ne.s32.totalorder %s360, %s361
      %p375 = scmp.eq.s32.totalorder %s39, 3
      %p376 = por %p374, %p375
      %p378 = scmp.ne.s32.totalorder %s361, %s377
      %p379 = scmp.eq.s32.totalorder %s39, 0
      %p380 = por %p378, %p379
      %s381 = ssub.s32 %s41, %s48
      %p382 = scmp.eq.s32.totalorder %s381, 0
      %s384 = sadd.s32 %s383, 1
      %s385 = scalar_select %p382, %s383, %s384
      %p388 = pneg %p382
      %p389 = scmp.eq.s32.totalorder %s33, 3
      %p390 = por %p388, %p389
      %p391 = scmp.ne.s32.totalorder %s383, %s386
      %p392 = scmp.eq.s32.totalorder %s33, 0
      %p393 = por %p391, %p392
      %p394 = scmp.ne.s32.totalorder %s383, %s386
      %p395 = scmp.eq.s32.totalorder %s38, 3
      %p396 = por %p394, %p395
      %p397 = scmp.ne.s32.totalorder %s386, %s387
      %p398 = scmp.eq.s32.totalorder %s38, 0
      %p399 = por %p397, %p398
      %p400 = scmp.ne.s32.totalorder %s386, %s387
      %p401 = scmp.eq.s32.totalorder %s39, 3
      %p402 = por %p400, %p401
      %p404 = scmp.ne.s32.totalorder %s387, %s403
      %p405 = scmp.eq.s32.totalorder %s39, 0
      %p406 = por %p404, %p405
      %s407 = ssub.s32 %s41, %s48
      %p408 = scmp.eq.s32.totalorder %s407, 0
      %s410 = sadd.s32 %s409, 1
      %s411 = scalar_select %p408, %s409, %s410
      %p414 = pneg %p408
      %p415 = scmp.eq.s32.totalorder %s33, 3
      %p416 = por %p414, %p415
      %p417 = scmp.ne.s32.totalorder %s409, %s412
      %p418 = scmp.eq.s32.totalorder %s33, 0
      %p419 = por %p417, %p418
      %p420 = scmp.ne.s32.totalorder %s409, %s412
      %p421 = scmp.eq.s32.totalorder %s38, 3
      %p422 = por %p420, %p421
      %p423 = scmp.ne.s32.totalorder %s412, %s413
      %p424 = scmp.eq.s32.totalorder %s38, 0
      %p425 = por %p423, %p424
      %p426 = scmp.ne.s32.totalorder %s412, %s413
      %p427 = scmp.eq.s32.totalorder %s39, 3
      %p428 = por %p426, %p427
      %p430 = scmp.ne.s32.totalorder %s413, %s429
      %p431 = scmp.eq.s32.totalorder %s39, 0
      %p432 = por %p430, %p431
      %s434 = sadd.s32 %s433, 1
      %p437 = scmp.eq.s32.totalorder %s33, 3
      %p438 = scmp.ne.s32.totalorder %s433, %s435
      %p439 = scmp.eq.s32.totalorder %s33, 0
      %p440 = por %p438, %p439
      %p441 = scmp.ne.s32.totalorder %s433, %s435
      %p442 = scmp.eq.s32.totalorder %s38, 3
      %p443 = por %p441, %p442
      %p444 = scmp.ne.s32.totalorder %s435, %s436
      %p445 = scmp.eq.s32.totalorder %s38, 0
      %p446 = por %p444, %p445
      %p447 = scmp.ne.s32.totalorder %s435, %s436
      %p448 = scmp.eq.s32.totalorder %s39, 3
      %p449 = por %p447, %p448
      %p451 = scmp.ne.s32.totalorder %s436, %s450
      %p452 = scmp.eq.s32.totalorder %s39, 0
      %p453 = por %p451, %p452
      %s455 = sadd.s32 %s454, 1
      %p458 = scmp.eq.s32.totalorder %s33, 3
      %p459 = scmp.ne.s32.totalorder %s454, %s456
      %p460 = scmp.eq.s32.totalorder %s33, 0
      %p461 = por %p459, %p460
      %p462 = scmp.ne.s32.totalorder %s454, %s456
      %p463 = scmp.eq.s32.totalorder %s38, 3
      %p464 = por %p462, %p463
      %p465 = scmp.ne.s32.totalorder %s456, %s457
      %p466 = scmp.eq.s32.totalorder %s38, 0
      %p467 = por %p465, %p466
      %p468 = scmp.ne.s32.totalorder %s456, %s457
      %p469 = scmp.eq.s32.totalorder %s39, 3
      %p470 = por %p468, %p469
      %p472 = scmp.ne.s32.totalorder %s457, %s471
      %p473 = scmp.eq.s32.totalorder %s39, 0
      %p474 = por %p472, %p473
      %s475 = ssub.s32 %s40, %s52
      %p476 = scmp.eq.s32.totalorder %s475, 0
      %s478 = sadd.s32 %s477, 1
      %s479 = scalar_select %p476, %s477, %s478
      %p482 = pneg %p476
      %p483 = scmp.eq.s32.totalorder %s33, 3
      %p484 = por %p482, %p483
      %p485 = scmp.ne.s32.totalorder %s477, %s480
      %p486 = scmp.eq.s32.totalorder %s33, 0
      %p487 = por %p485, %p486
      %p488 = scmp.ne.s32.totalorder %s477, %s480
      %p489 = scmp.eq.s32.totalorder %s38, 3
      %p490 = por %p488, %p489
      %p491 = scmp.ne.s32.totalorder %s480, %s481
      %p492 = scmp.eq.s32.totalorder %s38, 0
      %p493 = por %p491, %p492
      %p494 = scmp.ne.s32.totalorder %s480, %s481
      %p495 = scmp.eq.s32.totalorder %s39, 3
      %p496 = por %p494, %p495
      %p498 = scmp.ne.s32.totalorder %s481, %s497
      %p499 = scmp.eq.s32.totalorder %s39, 0
      %p500 = por %p498, %p499
      %p501 = scmp.le.s32.totalorder 1, %s33
      %p502 = scmp.lt.s32.totalorder %s33, 5
      %p503 = pnand %p501, %p502
      %p504 = pneg %p503
      // Predicated region
      $region9: #{tpu_custom_call.1} parent=5 // pred_check
        _
      $region10: #{tpu_custom_call.1} parent=5 // pred_check_branch
        %506 = sbr.rel (%p503) target = $region12
      $region11: #{tpu_custom_call.1} parent=5 // pred_region
        %s507 = ssub.s32 %s33, 1
        // Predicated region
        $region13: #{tpu_custom_call.1} parent=11 // pred_check
          %p508 = pneg %p118
        $region14: #{tpu_custom_call.1} parent=11 // pred_check_branch
          %510 = sbr.rel (%p508) target = $region16
        $region15: #{tpu_custom_call.1} parent=11 // pred_region
          %s512 = ssub.s32 2048, 2048
          %513 = vsyncadd [#allocation7], %s512
          %s514 = sshll.u32 [#allocation8], 4
          %s515 = int_to_ptr.vmem [resolvable:$true] %s514
          %520 = dma.hbm_to_vmem [thread:$0]  %s2, 2048, %s515, [#allocation7], 64, 64, 4
        $region16: #{tpu_custom_call.1} parent=11 // pred_fallthru
          _
        // Predicated region
        $region17: #{tpu_custom_call.1} parent=11 // pred_check
          %p521 = pneg %p139
        $region18: #{tpu_custom_call.1} parent=11 // pred_check_branch
          %523 = sbr.rel (%p521) target = $region20
        $region19: #{tpu_custom_call.1} parent=11 // pred_region
          %s525 = ssub.s32 16, 16
          %526 = vsyncadd [#allocation10], %s525
          %s528 = sshll.u32 [#allocation9], 4
          %s529 = int_to_ptr.vmem [resolvable:$true] %s528
          %531 = dma.hbm_to_vmem [thread:$0]  %s3, 16, %s529, [#allocation10]
        $region20: #{tpu_custom_call.1} parent=11 // pred_fallthru
          _
        // Predicated region
        $region21: #{tpu_custom_call.1} parent=11 // pred_check
          %p532 = pneg %p446
        $region22: #{tpu_custom_call.1} parent=11 // pred_check_branch
          %534 = sbr.rel (%p532) target = $region24
        $region23: #{tpu_custom_call.1} parent=11 // pred_region
          _
        $region24: #{tpu_custom_call.1} parent=11 // pred_fallthru
          _
        // Predicated region
        $region25: #{tpu_custom_call.1} parent=11 // pred_check
          %p535 = pneg %p467
        $region26: #{tpu_custom_call.1} parent=11 // pred_check_branch
          %537 = sbr.rel (%p535) target = $region28
        $region27: #{tpu_custom_call.1} parent=11 // pred_region
          _
        $region28: #{tpu_custom_call.1} parent=11 // pred_fallthru
          _
      $region12: #{tpu_custom_call.1} parent=5 // pred_fallthru
        _
      %p538 = scmp.lt.s32.totalorder %s33, 4
      // Predicated region
      $region29: #{tpu_custom_call.1} parent=5 // pred_check
        %p539 = pneg %p538
      $region30: #{tpu_custom_call.1} parent=5 // pred_check_branch
        %541 = sbr.rel (%p539) target = $region32
      $region31: #{tpu_custom_call.1} parent=5 // pred_region
        // Predicated region
        $region33: #{tpu_custom_call.1} parent=31 // pred_check
          %p542 = pneg %p65
        $region34: #{tpu_custom_call.1} parent=31 // pred_check_branch
          %544 = sbr.rel (%p542) target = $region36
        $region35: #{tpu_custom_call.1} parent=31 // pred_region
          %s545 = sand.u32 %s33, 1
          %s546 = scalar_lea.sflag [#allocation4], %s545
          %s547 = sand.u32 %s55, 1
          %s548 = smul.addr %s547, 16
          %s549 = scalar_lea.vmem [#allocation3], %s548
          %s551 = ssub.s32 256, 256
          %552 = vsyncadd %s546, %s551
          %s553 = smul.addr %s40, 4
          %s554 = smul.addr %s553, 64
          %s555 = scalar_lea.hbm %s0, %s554
          %s556 = sshll.u32 %s549, 4
          %s557 = int_to_ptr.vmem [resolvable:$true] %s556
          %562 = dma.hbm_to_vmem [thread:$0]  %s555, 256, %s557, %s546, 128, 128, 8
        $region36: #{tpu_custom_call.1} parent=31 // pred_fallthru
          _
        // Predicated region
        $region37: #{tpu_custom_call.1} parent=31 // pred_check
          %p563 = pneg %p91
        $region38: #{tpu_custom_call.1} parent=31 // pred_check_branch
          %565 = sbr.rel (%p563) target = $region40
        $region39: #{tpu_custom_call.1} parent=31 // pred_region
          %s566 = sand.u32 %s33, 1
          %s567 = scalar_lea.sflag [#allocation7], %s566
          %s568 = sand.u32 %s81, 1
          %s569 = smul.addr %s568, 256
          %s570 = scalar_lea.vmem [#allocation6], %s569
          %s572 = ssub.s32 4096, 4096
          %573 = vsyncadd %s567, %s572
          %s574 = smul.addr %s40, 32
          %s575 = smul.addr %s574, 128
          %s576 = scalar_lea.hbm %s1, %s575
          %s577 = sshll.u32 %s570, 4
          %s578 = int_to_ptr.vmem [resolvable:$true] %s577
          %583 = dma.hbm_to_vmem [thread:$0]  %s576, 4096, %s578, %s567, 128, 128, 8
        $region40: #{tpu_custom_call.1} parent=31 // pred_fallthru
          _
        // Predicated region
        $region41: #{tpu_custom_call.1} parent=31 // pred_check
          %p584 = pneg %p159
        $region42: #{tpu_custom_call.1} parent=31 // pred_check_branch
          %586 = sbr.rel (%p584) target = $region44
        $region43: #{tpu_custom_call.1} parent=31 // pred_region
          %p587 = scmp.lt.s32.totalorder %s41, 1
          %s588 = scalar_select %p587, %s41, 1
          %s589 = scalar_lea.vmem %s4, %s588
        $region44: #{tpu_custom_call.1} parent=31 // pred_fallthru
          _
        // Predicated region
        $region45: #{tpu_custom_call.1} parent=31 // pred_check
          %p590 = pneg %p185
        $region46: #{tpu_custom_call.1} parent=31 // pred_check_branch
          %592 = sbr.rel (%p590) target = $region48
        $region47: #{tpu_custom_call.1} parent=31 // pred_region
          %p593 = scmp.lt.s32.totalorder %s41, 1
          %s594 = scalar_select %p593, %s41, 1
          %s595 = scalar_lea.vmem %s5, %s594
        $region48: #{tpu_custom_call.1} parent=31 // pred_fallthru
          _
        // Predicated region
        $region49: #{tpu_custom_call.1} parent=31 // pred_check
          %p596 = pneg %p211
        $region50: #{tpu_custom_call.1} parent=31 // pred_check_branch
          %598 = sbr.rel (%p596) target = $region52
        $region51: #{tpu_custom_call.1} parent=31 // pred_region
          %s599 = sand.u32 %s33, 1
          %s600 = scalar_lea.sflag [#allocation4], %s599
          %s601 = sand.u32 %s201, 1
          %s602 = smul.addr %s601, 192
          %s603 = scalar_lea.vmem [#allocation11], %s602
          %s605 = ssub.s32 3072, 3072
          %606 = vsyncadd %s600, %s605
          %s607 = smul.addr %s41, 48
          %s608 = smul.addr %s607, 64
          %s609 = scalar_lea.hbm %s6, %s608
          %s610 = sshll.u32 %s603, 4
          %s611 = int_to_ptr.vmem [resolvable:$true] %s610
          %616 = dma.hbm_to_vmem [thread:$0]  %s609, 3072, %s611, %s600, 192, 192, 12
        $region52: #{tpu_custom_call.1} parent=31 // pred_fallthru
          _
        // Predicated region
        $region53: #{tpu_custom_call.1} parent=31 // pred_check
          %p617 = pneg %p237
        $region54: #{tpu_custom_call.1} parent=31 // pred_check_branch
          %619 = sbr.rel (%p617) target = $region56
        $region55: #{tpu_custom_call.1} parent=31 // pred_region
          %s620 = sand.u32 %s33, 1
          %s621 = scalar_lea.sflag [#allocation7], %s620
          %s622 = sand.u32 %s227, 1
          %s623 = smul.addr %s622, 64
          %s624 = scalar_lea.vmem [#allocation12], %s623
          %s626 = ssub.s32 1024, 1024
          %627 = vsyncadd %s621, %s626
          %s628 = smul.addr %s41, 16
          %s629 = smul.addr %s628, 64
          %s630 = scalar_lea.hbm %s7, %s629
          %s631 = sshll.u32 %s624, 4
          %s632 = int_to_ptr.vmem [resolvable:$true] %s631
          %637 = dma.hbm_to_vmem [thread:$0]  %s630, 1024, %s632, %s621, 64, 64, 4
        $region56: #{tpu_custom_call.1} parent=31 // pred_fallthru
          _
        // Predicated region
        $region57: #{tpu_custom_call.1} parent=31 // pred_check
          %p638 = pneg %p263
        $region58: #{tpu_custom_call.1} parent=31 // pred_check_branch
          %640 = sbr.rel (%p638) target = $region60
        $region59: #{tpu_custom_call.1} parent=31 // pred_region
          %p641 = scmp.lt.s32.totalorder %s41, 1
          %s642 = scalar_select %p641, %s41, 1
          %s643 = scalar_lea.vmem %s8, %s642
        $region60: #{tpu_custom_call.1} parent=31 // pred_fallthru
          _
        // Predicated region
        $region61: #{tpu_custom_call.1} parent=31 // pred_check
          %p644 = pneg %p289
        $region62: #{tpu_custom_call.1} parent=31 // pred_check_branch
          %646 = sbr.rel (%p644) target = $region64
        $region63: #{tpu_custom_call.1} parent=31 // pred_region
          %p647 = scmp.lt.s32.totalorder %s41, 1
          %s648 = scalar_select %p647, %s41, 1
          %s649 = scalar_lea.vmem %s9, %s648
        $region64: #{tpu_custom_call.1} parent=31 // pred_fallthru
          _
        // Predicated region
        $region65: #{tpu_custom_call.1} parent=31 // pred_check
          %p650 = pneg %p315
        $region66: #{tpu_custom_call.1} parent=31 // pred_check_branch
          %652 = sbr.rel (%p650) target = $region68
        $region67: #{tpu_custom_call.1} parent=31 // pred_region
          %p653 = scmp.lt.s32.totalorder %s41, 1
          %s654 = scalar_select %p653, %s41, 1
          %s655 = scalar_lea.vmem %s10, %s654
        $region68: #{tpu_custom_call.1} parent=31 // pred_fallthru
          _
        // Predicated region
        $region69: #{tpu_custom_call.1} parent=31 // pred_check
          %p656 = pneg %p341
        $region70: #{tpu_custom_call.1} parent=31 // pred_check_branch
          %658 = sbr.rel (%p656) target = $region72
        $region71: #{tpu_custom_call.1} parent=31 // pred_region
          %s659 = sand.u32 %s33, 1
          %s660 = scalar_lea.sflag [#allocation4], %s659
          %s661 = sand.u32 %s331, 1
          %s662 = smul.addr %s661, 256
          %s663 = scalar_lea.vmem [#allocation13], %s662
          %s665 = ssub.s32 4096, 4096
          %666 = vsyncadd %s660, %s665
          %s667 = smul.addr %s41, 64
          %s668 = smul.addr %s667, 64
          %s669 = scalar_lea.hbm %s11, %s668
          %s670 = sshll.u32 %s663, 4
          %s671 = int_to_ptr.vmem [resolvable:$true] %s670
          %676 = dma.hbm_to_vmem [thread:$0]  %s669, 4096, %s671, %s660, 256, 256, 16
        $region72: #{tpu_custom_call.1} parent=31 // pred_fallthru
          _
        // Predicated region
        $region73: #{tpu_custom_call.1} parent=31 // pred_check
          %p677 = pneg %p367
        $region74: #{tpu_custom_call.1} parent=31 // pred_check_branch
          %679 = sbr.rel (%p677) target = $region76
        $region75: #{tpu_custom_call.1} parent=31 // pred_region
          %p680 = scmp.lt.s32.totalorder %s41, 1
          %s681 = scalar_select %p680, %s41, 1
          %s682 = smul.addr %s681, 4
          %s683 = scalar_lea.vmem %s12, %s682
        $region76: #{tpu_custom_call.1} parent=31 // pred_fallthru
          _
        // Predicated region
        $region77: #{tpu_custom_call.1} parent=31 // pred_check
          %p684 = pneg %p393
        $region78: #{tpu_custom_call.1} parent=31 // pred_check_branch
          %686 = sbr.rel (%p684) target = $region80
        $region79: #{tpu_custom_call.1} parent=31 // pred_region
          %s687 = sand.u32 %s33, 1
          %s688 = scalar_lea.sflag [#allocation7], %s687
          %s689 = sand.u32 %s383, 1
          %s690 = smul.addr %s689, 256
          %s691 = scalar_lea.vmem [#allocation14], %s690
          %s693 = ssub.s32 4096, 4096
          %694 = vsyncadd %s688, %s693
          %s695 = smul.addr %s41, 64
          %s696 = smul.addr %s695, 64
          %s697 = scalar_lea.hbm %s13, %s696
          %s698 = sshll.u32 %s691, 4
          %s699 = int_to_ptr.vmem [resolvable:$true] %s698
          %704 = dma.hbm_to_vmem [thread:$0]  %s697, 4096, %s699, %s688, 64, 64, 4
        $region80: #{tpu_custom_call.1} parent=31 // pred_fallthru
          _
        // Predicated region
        $region81: #{tpu_custom_call.1} parent=31 // pred_check
          %p705 = pneg %p419
        $region82: #{tpu_custom_call.1} parent=31 // pred_check_branch
          %707 = sbr.rel (%p705) target = $region84
        $region83: #{tpu_custom_call.1} parent=31 // pred_region
          %p708 = scmp.lt.s32.totalorder %s41, 1
          %s709 = scalar_select %p708, %s41, 1
          %s710 = scalar_lea.vmem %s14, %s709
        $region84: #{tpu_custom_call.1} parent=31 // pred_fallthru
          _
      $region32: #{tpu_custom_call.1} parent=5 // pred_fallthru
        _
      %p711 = scmp.le.s32.totalorder 1, %s33
      %p712 = scmp.lt.s32.totalorder %s33, 5
      %p713 = pnand %p711, %p712
      %p714 = pneg %p713
      // Predicated region
      $region85: #{tpu_custom_call.1} parent=5 // pred_check
        _
      $region86: #{tpu_custom_call.1} parent=5 // pred_check_branch
        %716 = sbr.rel (%p713) target = $region88
      $region87: #{tpu_custom_call.1} parent=5 // pred_region
        %s717 = ssub.s32 %s33, 1
        %s718 = sand.u32 %s38, 1
        %s719 = scalar_lea.sflag [#allocation4], %s718
        %s720 = sand.u32 %s58, 1
        %s721 = smul.addr %s720, 16
        %s722 = scalar_lea.vmem [#allocation3], %s721
        // Predicated region
        $region89: #{tpu_custom_call.1} parent=87 // pred_check
          %p723 = pneg %p71
        $region90: #{tpu_custom_call.1} parent=87 // pred_check_branch
          %725 = sbr.rel (%p723) target = $region92
        $region91: #{tpu_custom_call.1} parent=87 // pred_region
          %726 = dma.done %s719, 256
        $region92: #{tpu_custom_call.1} parent=87 // pred_fallthru
          _
        %s727 = sand.u32 %s38, 1
        %s728 = scalar_lea.sflag [#allocation7], %s727
        %s729 = sand.u32 %s84, 1
        %s730 = smul.addr %s729, 256
        %s731 = scalar_lea.vmem [#allocation6], %s730
        // Predicated region
        $region93: #{tpu_custom_call.1} parent=87 // pred_check
          %p732 = pneg %p97
        $region94: #{tpu_custom_call.1} parent=87 // pred_check_branch
          %734 = sbr.rel (%p732) target = $region96
        $region95: #{tpu_custom_call.1} parent=87 // pred_region
          %735 = dma.done %s728, 4096
        $region96: #{tpu_custom_call.1} parent=87 // pred_fallthru
          _
        // Predicated region
        $region97: #{tpu_custom_call.1} parent=87 // pred_check
          %p736 = pneg %p118
        $region98: #{tpu_custom_call.1} parent=87 // pred_check_branch
          %738 = sbr.rel (%p736) target = $region100
        $region99: #{tpu_custom_call.1} parent=87 // pred_region
          %739 = dma.done [#allocation7], 2048
        $region100: #{tpu_custom_call.1} parent=87 // pred_fallthru
          _
        // Predicated region
        $region101: #{tpu_custom_call.1} parent=87 // pred_check
          %p740 = pneg %p139
        $region102: #{tpu_custom_call.1} parent=87 // pred_check_branch
          %742 = sbr.rel (%p740) target = $region104
        $region103: #{tpu_custom_call.1} parent=87 // pred_region
          %743 = dma.done [#allocation10], 16
        $region104: #{tpu_custom_call.1} parent=87 // pred_fallthru
          _
        %s744 = sand.u32 %s38, 1
        %s745 = scalar_lea.sflag [#allocation4], %s744
        %s746 = sand.u32 %s204, 1
        %s747 = smul.addr %s746, 192
        %s748 = scalar_lea.vmem [#allocation11], %s747
        // Predicated region
        $region105: #{tpu_custom_call.1} parent=87 // pred_check
          %p749 = pneg %p217
        $region106: #{tpu_custom_call.1} parent=87 // pred_check_branch
          %751 = sbr.rel (%p749) target = $region108
        $region107: #{tpu_custom_call.1} parent=87 // pred_region
          %752 = dma.done %s745, 3072
        $region108: #{tpu_custom_call.1} parent=87 // pred_fallthru
          _
        %s753 = sand.u32 %s38, 1
        %s754 = scalar_lea.sflag [#allocation7], %s753
        %s755 = sand.u32 %s230, 1
        %s756 = smul.addr %s755, 64
        %s757 = scalar_lea.vmem [#allocation12], %s756
        // Predicated region
        $region109: #{tpu_custom_call.1} parent=87 // pred_check
          %p758 = pneg %p243
        $region110: #{tpu_custom_call.1} parent=87 // pred_check_branch
          %760 = sbr.rel (%p758) target = $region112
        $region111: #{tpu_custom_call.1} parent=87 // pred_region
          %761 = dma.done %s754, 1024
        $region112: #{tpu_custom_call.1} parent=87 // pred_fallthru
          _
        %s762 = sand.u32 %s38, 1
        %s763 = scalar_lea.sflag [#allocation4], %s762
        %s764 = sand.u32 %s334, 1
        %s765 = smul.addr %s764, 256
        %s766 = scalar_lea.vmem [#allocation13], %s765
        // Predicated region
        $region113: #{tpu_custom_call.1} parent=87 // pred_check
          %p767 = pneg %p347
        $region114: #{tpu_custom_call.1} parent=87 // pred_check_branch
          %769 = sbr.rel (%p767) target = $region116
        $region115: #{tpu_custom_call.1} parent=87 // pred_region
          %770 = dma.done %s763, 4096
        $region116: #{tpu_custom_call.1} parent=87 // pred_fallthru
          _
        %s771 = sand.u32 %s38, 1
        %s772 = scalar_lea.sflag [#allocation7], %s771
        %s773 = sand.u32 %s386, 1
        %s774 = smul.addr %s773, 256
        %s775 = scalar_lea.vmem [#allocation14], %s774
        // Predicated region
        $region117: #{tpu_custom_call.1} parent=87 // pred_check
          %p776 = pneg %p399
        $region118: #{tpu_custom_call.1} parent=87 // pred_check_branch
          %778 = sbr.rel (%p776) target = $region120
        $region119: #{tpu_custom_call.1} parent=87 // pred_region
          %779 = dma.done %s772, 4096
        $region120: #{tpu_custom_call.1} parent=87 // pred_fallthru
          _
        %s780 = sand.u32 %s38, 1
        %s781 = scalar_lea.sflag [#allocation4], %s780
        %s782 = sand.u32 %s58, 1
        %s783 = smul.addr %s782, 16
        %s784 = scalar_lea.vmem [#allocation3], %s783
        %p785 = pneg %p71
        %p786 = pneg %p68
        %s787 = sand.u32 %s38, 1
        %s788 = scalar_lea.sflag [#allocation7], %s787
        %s789 = sand.u32 %s84, 1
        %s790 = smul.addr %s789, 256
        %s791 = scalar_lea.vmem [#allocation6], %s790
        %p792 = pneg %p97
        %p793 = pneg %p94
        %p794 = pneg %p118
        %p795 = pneg %p115
        %p796 = pneg %p139
        %p797 = pneg %p136
        %p798 = scmp.lt.s32.totalorder %s43, 1
        %s799 = scalar_select %p798, %s43, 1
        %s800 = scalar_lea.vmem %s4, %s799
        %p801 = pneg %p165
        %p802 = pneg %p162
        %p803 = scmp.lt.s32.totalorder %s43, 1
        %s804 = scalar_select %p803, %s43, 1
        %s805 = scalar_lea.vmem %s5, %s804
        %p806 = pneg %p191
        %p807 = pneg %p188
        %s808 = sand.u32 %s38, 1
        %s809 = scalar_lea.sflag [#allocation4], %s808
        %s810 = sand.u32 %s204, 1
        %s811 = smul.addr %s810, 192
        %s812 = scalar_lea.vmem [#allocation11], %s811
        %p813 = pneg %p217
        %p814 = pneg %p214
        %s815 = sand.u32 %s38, 1
        %s816 = scalar_lea.sflag [#allocation7], %s815
        %s817 = sand.u32 %s230, 1
        %s818 = smul.addr %s817, 64
        %s819 = scalar_lea.vmem [#allocation12], %s818
        %p820 = pneg %p243
        %p821 = pneg %p240
        %p822 = scmp.lt.s32.totalorder %s43, 1
        %s823 = scalar_select %p822, %s43, 1
        %s824 = scalar_lea.vmem %s8, %s823
        %p825 = pneg %p269
        %p826 = pneg %p266
        %p827 = scmp.lt.s32.totalorder %s43, 1
        %s828 = scalar_select %p827, %s43, 1
        %s829 = scalar_lea.vmem %s9, %s828
        %p830 = pneg %p295
        %p831 = pneg %p292
        %p832 = scmp.lt.s32.totalorder %s43, 1
        %s833 = scalar_select %p832, %s43, 1
        %s834 = scalar_lea.vmem %s10, %s833
        %p835 = pneg %p321
        %p836 = pneg %p318
        %s837 = sand.u32 %s38, 1
        %s838 = scalar_lea.sflag [#allocation4], %s837
        %s839 = sand.u32 %s334, 1
        %s840 = smul.addr %s839, 256
        %s841 = scalar_lea.vmem [#allocation13], %s840
        %p842 = pneg %p347
        %p843 = pneg %p344
        %p844 = scmp.lt.s32.totalorder %s43, 1
        %s845 = scalar_select %p844, %s43, 1
        %s846 = smul.addr %s845, 4
        %s847 = scalar_lea.vmem %s12, %s846
        %p848 = pneg %p373
        %p849 = pneg %p370
        %s850 = sand.u32 %s38, 1
        %s851 = scalar_lea.sflag [#allocation7], %s850
        %s852 = sand.u32 %s386, 1
        %s853 = smul.addr %s852, 256
        %s854 = scalar_lea.vmem [#allocation14], %s853
        %p855 = pneg %p399
        %p856 = pneg %p396
        %p857 = scmp.lt.s32.totalorder %s43, 1
        %s858 = scalar_select %p857, %s43, 1
        %s859 = scalar_lea.vmem %s14, %s858
        %p860 = pneg %p425
        %p861 = pneg %p422
        %p862 = pneg %p446
        %p863 = pneg %p443
        %p864 = pneg %p467
        %p865 = pneg %p464
        %p866 = pneg %p493
        %p867 = pneg %p490
        %s868 = sand.u32 %s480, 1
        %s869 = scalar_lea.sflag [#allocation5], %s868
        %s870 = sand.u32 %s480, 1
        %s871 = smul.addr %s870, 16
        %s872 = scalar_lea.vmem [#allocation15], %s871
        %p873 = scmp.lt.s32.totalorder %s43, 1
        %s874 = scalar_select %p873, %s43, 1
        %s875 = scalar_lea.vmem %s4, %s874
        %p876 = scmp.lt.s32.totalorder %s43, 1
        %s877 = scalar_select %p876, %s43, 1
        %s878 = scalar_lea.vmem %s5, %s877
        %p879 = scmp.lt.s32.totalorder %s43, 1
        %s880 = scalar_select %p879, %s43, 1
        %s881 = scalar_lea.vmem %s8, %s880
        %p882 = scmp.lt.s32.totalorder %s43, 1
        %s883 = scalar_select %p882, %s43, 1
        %s884 = scalar_lea.vmem %s9, %s883
        %p885 = scmp.lt.s32.totalorder %s43, 1
        %s886 = scalar_select %p885, %s43, 1
        %s887 = scalar_lea.vmem %s10, %s886
        %p888 = scmp.lt.s32.totalorder %s43, 1
        %s889 = scalar_select %p888, %s43, 1
        %s890 = smul.addr %s889, 4
        %s891 = scalar_lea.vmem %s12, %s890
        %p892 = scmp.lt.s32.totalorder %s43, 1
        %s893 = scalar_select %p892, %s43, 1
        %s894 = scalar_lea.vmem %s14, %s893
        %p896 = scmp.eq.s32.totalorder %s43, 0
        // Predicated region
        $region121: #{tpu_custom_call.1} parent=87 // pred_check
          %p897 = pneg %p896
        $region122: #{tpu_custom_call.1} parent=87 // pred_check_branch
          %899 = sbr.rel (%p897) target = $region124
        $region123: #{tpu_custom_call.1} parent=87 // pred_region
          %v900 = vld [vmem:[%s722] sm:$0xff]
          %v901 = vld [vmem:[%s722 + $0x8] sm:$0xff]
          %v902 = vld [vmem:[#allocation8] sm:$0xf]
          %v903 = vld [vmem:[#allocation8 + $0x4] sm:$0xf]
          %v904 = vld [vmem:[#allocation8 + $0x8] sm:$0xf]
          %v905 = vld [vmem:[#allocation8 + $0xc] sm:$0xf]
          %v906 = vld [vmem:[#allocation8 + $0x10] sm:$0xf]
          %v907 = vld [vmem:[#allocation8 + $0x14] sm:$0xf]
          %v908 = vld [vmem:[#allocation8 + $0x18] sm:$0xf]
          %v909 = vld [vmem:[#allocation8 + $0x1c] sm:$0xf]
          %v910 = vld [vmem:[#allocation8 + $0x20] sm:$0xf]
          %v911 = vld [vmem:[#allocation8 + $0x24] sm:$0xf]
          %v912 = vld [vmem:[#allocation8 + $0x28] sm:$0xf]
          %v913 = vld [vmem:[#allocation8 + $0x2c] sm:$0xf]
          %v914 = vld [vmem:[#allocation8 + $0x30] sm:$0xf]
          %v915 = vld [vmem:[#allocation8 + $0x34] sm:$0xf]
          %v916 = vld [vmem:[#allocation8 + $0x38] sm:$0xf]
          %v917 = vld [vmem:[#allocation8 + $0x3c] sm:$0xf]
          %v918 = vld [vmem:[#allocation8 + $0x40] sm:$0xf]
          %v919 = vld [vmem:[#allocation8 + $0x44] sm:$0xf]
          %v920 = vld [vmem:[#allocation8 + $0x48] sm:$0xf]
          %v921 = vld [vmem:[#allocation8 + $0x4c] sm:$0xf]
          %v922 = vld [vmem:[#allocation8 + $0x50] sm:$0xf]
          %v923 = vld [vmem:[#allocation8 + $0x54] sm:$0xf]
          %v924 = vld [vmem:[#allocation8 + $0x58] sm:$0xf]
          %v925 = vld [vmem:[#allocation8 + $0x5c] sm:$0xf]
          %v926 = vld [vmem:[#allocation8 + $0x60] sm:$0xf]
          %v927 = vld [vmem:[#allocation8 + $0x64] sm:$0xf]
          %v928 = vld [vmem:[#allocation8 + $0x68] sm:$0xf]
          %v929 = vld [vmem:[#allocation8 + $0x6c] sm:$0xf]
          %v930 = vld [vmem:[#allocation8 + $0x70] sm:$0xf]
          %v931 = vld [vmem:[#allocation8 + $0x74] sm:$0xf]
          %v932 = vld [vmem:[#allocation8 + $0x78] sm:$0xf]
          %v933 = vld [vmem:[#allocation8 + $0x7c] sm:$0xf]
          %v934 = vld [vmem:[#allocation9] sm:$0x1]
          %v936 = vlaneseq
          %v937 = vshrl.u32 %v936, 7
          %v938 = vsub.s32 0, %v937
          %v939 = vrot.slane %v934, %v938
          %v943 = vunpack.c.l.b16 %v900
          %v944 = vunpack.c.h.b16 %v900
          %v945 = vunpack.c.l.b16 %v901
          %v946 = vunpack.c.h.b16 %v901
          %v947 = vpack.c.b16 %v945, %v943
          %v948 = vpack.c.b16 %v946, %v944
          %v983 = vunpack.c.l.b16 %v902
          %v984 = vunpack.c.l.b16 %v903
          %v985 = vunpack.c.l.b16 %v904
          %v986 = vunpack.c.l.b16 %v905
          %v987 = vunpack.c.l.b16 %v906
          %v988 = vunpack.c.l.b16 %v907
          %v989 = vunpack.c.l.b16 %v908
          %v990 = vunpack.c.l.b16 %v909
          %v991 = vunpack.c.l.b16 %v910
          %v992 = vunpack.c.l.b16 %v911
          %v993 = vunpack.c.l.b16 %v912
          %v994 = vunpack.c.l.b16 %v913
          %v995 = vunpack.c.l.b16 %v914
          %v996 = vunpack.c.l.b16 %v915
          %v997 = vunpack.c.l.b16 %v916
          %v998 = vunpack.c.l.b16 %v917
          %v999 = vunpack.c.l.b16 %v918
          %v1000 = vunpack.c.l.b16 %v919
          %v1001 = vunpack.c.l.b16 %v920
          %v1002 = vunpack.c.l.b16 %v921
          %v1003 = vunpack.c.l.b16 %v922
          %v1004 = vunpack.c.l.b16 %v923
          %v1005 = vunpack.c.l.b16 %v924
          %v1006 = vunpack.c.l.b16 %v925
          %v1007 = vunpack.c.l.b16 %v926
          %v1008 = vunpack.c.l.b16 %v927
          %v1009 = vunpack.c.l.b16 %v928
          %v1010 = vunpack.c.l.b16 %v929
          %v1011 = vunpack.c.l.b16 %v930
          %v1012 = vunpack.c.l.b16 %v931
          %v1013 = vunpack.c.l.b16 %v932
          %v1014 = vunpack.c.l.b16 %v933
          %v1015 = vpack.c.b16 %v984, %v983
          %v1016 = vpack.c.b16 %v986, %v985
          %v1017 = vpack.c.b16 %v988, %v987
          %v1018 = vpack.c.b16 %v990, %v989
          %v1019 = vpack.c.b16 %v992, %v991
          %v1020 = vpack.c.b16 %v994, %v993
          %v1021 = vpack.c.b16 %v996, %v995
          %v1022 = vpack.c.b16 %v998, %v997
          %v1023 = vpack.c.b16 %v1000, %v999
          %v1024 = vpack.c.b16 %v1002, %v1001
          %v1025 = vpack.c.b16 %v1004, %v1003
          %v1026 = vpack.c.b16 %v1006, %v1005
          %v1027 = vpack.c.b16 %v1008, %v1007
          %v1028 = vpack.c.b16 %v1010, %v1009
          %v1029 = vpack.c.b16 %v1012, %v1011
          %v1030 = vpack.c.b16 %v1014, %v1013
          %1047 = vmatprep.subr.bf16.mxu0 0
          %1048 = vmatpush1.bf16.msra.mxu0 %v1015
          %1049 = vmatprep.subr.bf16.mxu0 0
          %1050 = vmatpush1.bf16.msra.mxu0 %v1016
          %1051 = vmatprep.subr.bf16.mxu0 0
          %1052 = vmatpush1.bf16.msra.mxu0 %v1017
          %1053 = vmatprep.subr.bf16.mxu0 0
          %1054 = vmatpush1.bf16.msra.mxu0 %v1018
          %1055 = vmatprep.subr.bf16.mxu0 0
          %1056 = vmatpush1.bf16.msra.mxu0 %v1019
          %1057 = vmatprep.subr.bf16.mxu0 0
          %1058 = vmatpush1.bf16.msra.mxu0 %v1020
          %1059 = vmatprep.subr.bf16.mxu0 0
          %1060 = vmatpush1.bf16.msra.mxu0 %v1021
          %1061 = vmatprep.subr.bf16.mxu0 0
          %1062 = vmatpush1.bf16.msra.mxu0 %v1022
          %1063 = vmatprep.subr.bf16.mxu0 0
          %1064 = vmatpush1.bf16.msra.mxu0 %v1023
          %1065 = vmatprep.subr.bf16.mxu0 0
          %1066 = vmatpush1.bf16.msra.mxu0 %v1024
          %1067 = vmatprep.subr.bf16.mxu0 0
          %1068 = vmatpush1.bf16.msra.mxu0 %v1025
          %1069 = vmatprep.subr.bf16.mxu0 0
          %1070 = vmatpush1.bf16.msra.mxu0 %v1026
          %1071 = vmatprep.subr.bf16.mxu0 0
          %1072 = vmatpush1.bf16.msra.mxu0 %v1027
          %1073 = vmatprep.subr.bf16.mxu0 0
          %1074 = vmatpush1.bf16.msra.mxu0 %v1028
          %1075 = vmatprep.subr.bf16.mxu0 0
          %1076 = vmatpush1.bf16.msra.mxu0 %v1029
          %1077 = vmatprep.subr.bf16.mxu0 0
          %1078 = vmatpush1.bf16.msra.mxu0 %v1030
          %1079 = vmatprep.mubr.bf16.mxu0 %v948
          %1080 = vmatmul.mubr.bf16.gmra.mrb[0].mxu0 %v947
          %v1081 = vpop.f32.mrb[0].mxu0
          %v1082 = vadd.f32 %v939, %v1081
          %v1083 = vpop.f32.mrb[0].mxu0
          %v1084 = vpop.f32.mrb[0].mxu0
          %v1085 = vadd.f32 %v939, %v1084
          %v1086 = vpop.f32.mrb[0].mxu0
          %1087 = vdwg.mxu0
          %1088 = vst [vmem:[#allocation2] sm:$0xff] %v1082
          %1089 = vst [vmem:[#allocation2 + $0x8] sm:$0xff] %v1085
        $region124: #{tpu_custom_call.1} parent=87 // pred_fallthru
          _
        %v1090 = vld [vmem:[#allocation2] sm:$0xff]
        %v1091 = vld [vmem:[#allocation2 + $0x8] sm:$0xff]
        %v1092 = vld [vmem:[%s875] sm:$0x1]
        %v1093 = vld [vmem:[%s878] sm:$0x1]
        %1094 = vadd.xlane.f32.xlu0 %v1090
        %v1095 = vpop.xlane.xlu0 %1094
        %1096 = vadd.xlane.f32.xlu0 %v1091
        %v1097 = vpop.xlane.xlu0 %1096
        %v1098 = vrcp.pop 128.0
        %v1099 = vmul.f32 %v1095, %v1098
        %v1100 = vmul.f32 %v1097, %v1098
        %v1101 = vsub.f32 %v1090, %v1099
        %v1102 = vsub.f32 %v1091, %v1100
        %v1103 = vmul.f32 %v1101, %v1101
        %v1104 = vmul.f32 %v1102, %v1102
        %1105 = vadd.xlane.f32.xlu0 %v1103
        %v1106 = vpop.xlane.xlu0 %1105
        %1107 = vadd.xlane.f32.xlu0 %v1104
        %v1108 = vpop.xlane.xlu0 %1107
        %v1109 = vmul.f32 %v1106, %v1098
        %v1110 = vmul.f32 %v1108, %v1098
        %v1111 = vadd.f32 %v1109, 1e-05
        %v1112 = vadd.f32 %v1110, 1e-05
        %v1113 = vrsqrt.pop %v1111
        %v1114 = vrsqrt.pop %v1112
        %v1115 = vmul.f32 %v1101, %v1113
        %v1116 = vmul.f32 %v1102, %v1114
        %v1118 = vlaneseq
        %v1119 = vshrl.u32 %v1118, 7
        %v1120 = vsub.s32 0, %v1119
        %v1121 = vrot.slane %v1092, %v1120
        %v1123 = vmul.f32 %v1115, %v1121
        %v1124 = vmul.f32 %v1116, %v1121
        %v1126 = vlaneseq
        %v1127 = vshrl.u32 %v1126, 7
        %v1128 = vsub.s32 0, %v1127
        %v1129 = vrot.slane %v1093, %v1128
        %v1131 = vadd.f32 %v1123, %v1129
        %v1132 = vadd.f32 %v1124, %v1129
        %v1133 = vpack.c.bf16 %v1132, %v1131
        %v1134 = vld [vmem:[%s748] sm:$0xff]
        %v1135 = vld [vmem:[%s748 + $0x8] sm:$0xf]
        %v1136 = vld [vmem:[%s748 + $0xc] sm:$0xff]
        %v1137 = vld [vmem:[%s748 + $0x14] sm:$0xf]
        %v1138 = vld [vmem:[%s748 + $0x18] sm:$0xff]
        %v1139 = vld [vmem:[%s748 + $0x20] sm:$0xf]
        %v1140 = vld [vmem:[%s748 + $0x24] sm:$0xff]
        %v1141 = vld [vmem:[%s748 + $0x2c] sm:$0xf]
        %v1142 = vld [vmem:[%s748 + $0x30] sm:$0xff]
        %v1143 = vld [vmem:[%s748 + $0x38] sm:$0xf]
        %v1144 = vld [vmem:[%s748 + $0x3c] sm:$0xff]
        %v1145 = vld [vmem:[%s748 + $0x44] sm:$0xf]
        %v1146 = vld [vmem:[%s748 + $0x48] sm:$0xff]
        %v1147 = vld [vmem:[%s748 + $0x50] sm:$0xf]
        %v1148 = vld [vmem:[%s748 + $0x54] sm:$0xff]
        %v1149 = vld [vmem:[%s748 + $0x5c] sm:$0xf]
        %v1150 = vld [vmem:[%s748 + $0x60] sm:$0xff]
        %v1151 = vld [vmem:[%s748 + $0x68] sm:$0xf]
        %v1152 = vld [vmem:[%s748 + $0x6c] sm:$0xff]
        %v1153 = vld [vmem:[%s748 + $0x74] sm:$0xf]
        %v1154 = vld [vmem:[%s748 + $0x78] sm:$0xff]
        %v1155 = vld [vmem:[%s748 + $0x80] sm:$0xf]
        %v1156 = vld [vmem:[%s748 + $0x84] sm:$0xff]
        %v1157 = vld [vmem:[%s748 + $0x8c] sm:$0xf]
        %v1158 = vld [vmem:[%s748 + $0x90] sm:$0xff]
        %v1159 = vld [vmem:[%s748 + $0x98] sm:$0xf]
        %v1160 = vld [vmem:[%s748 + $0x9c] sm:$0xff]
        %v1161 = vld [vmem:[%s748 + $0xa4] sm:$0xf]
        %v1162 = vld [vmem:[%s748 + $0xa8] sm:$0xff]
        %v1163 = vld [vmem:[%s748 + $0xb0] sm:$0xf]
        %v1164 = vld [vmem:[%s748 + $0xb4] sm:$0xff]
        %v1165 = vld [vmem:[%s748 + $0xbc] sm:$0xf]
        %v1198 = vunpack.c.l.b16 %v1134
        %v1199 = vunpack.c.h.b16 %v1134
        %v1200 = vunpack.c.l.b16 %v1135
        %v1201 = vunpack.c.l.b16 %v1136
        %v1202 = vunpack.c.h.b16 %v1136
        %v1203 = vunpack.c.l.b16 %v1137
        %v1204 = vunpack.c.l.b16 %v1138
        %v1205 = vunpack.c.h.b16 %v1138
        %v1206 = vunpack.c.l.b16 %v1139
        %v1207 = vunpack.c.l.b16 %v1140
        %v1208 = vunpack.c.h.b16 %v1140
        %v1209 = vunpack.c.l.b16 %v1141
        %v1210 = vunpack.c.l.b16 %v1142
        %v1211 = vunpack.c.h.b16 %v1142
        %v1212 = vunpack.c.l.b16 %v1143
        %v1213 = vunpack.c.l.b16 %v1144
        %v1214 = vunpack.c.h.b16 %v1144
        %v1215 = vunpack.c.l.b16 %v1145
        %v1216 = vunpack.c.l.b16 %v1146
        %v1217 = vunpack.c.h.b16 %v1146
        %v1218 = vunpack.c.l.b16 %v1147
        %v1219 = vunpack.c.l.b16 %v1148
        %v1220 = vunpack.c.h.b16 %v1148
        %v1221 = vunpack.c.l.b16 %v1149
        %v1222 = vunpack.c.l.b16 %v1150
        %v1223 = vunpack.c.h.b16 %v1150
        %v1224 = vunpack.c.l.b16 %v1151
        %v1225 = vunpack.c.l.b16 %v1152
        %v1226 = vunpack.c.h.b16 %v1152
        %v1227 = vunpack.c.l.b16 %v1153
        %v1228 = vunpack.c.l.b16 %v1154
        %v1229 = vunpack.c.h.b16 %v1154
        %v1230 = vunpack.c.l.b16 %v1155
        %v1231 = vunpack.c.l.b16 %v1156
        %v1232 = vunpack.c.h.b16 %v1156
        %v1233 = vunpack.c.l.b16 %v1157
        %v1234 = vunpack.c.l.b16 %v1158
        %v1235 = vunpack.c.h.b16 %v1158
        %v1236 = vunpack.c.l.b16 %v1159
        %v1237 = vunpack.c.l.b16 %v1160
        %v1238 = vunpack.c.h.b16 %v1160
        %v1239 = vunpack.c.l.b16 %v1161
        %v1240 = vunpack.c.l.b16 %v1162
        %v1241 = vunpack.c.h.b16 %v1162
        %v1242 = vunpack.c.l.b16 %v1163
        %v1243 = vunpack.c.l.b16 %v1164
        %v1244 = vunpack.c.h.b16 %v1164
        %v1245 = vunpack.c.l.b16 %v1165
        %v1246 = vpack.c.b16 %v1201, %v1198
        %v1247 = vpack.c.b16 %v1202, %v1199
        %v1248 = vpack.c.b16 %v1203, %v1200
        %v1249 = vpack.c.b16 %v1207, %v1204
        %v1250 = vpack.c.b16 %v1208, %v1205
        %v1251 = vpack.c.b16 %v1209, %v1206
        %v1252 = vpack.c.b16 %v1213, %v1210
        %v1253 = vpack.c.b16 %v1214, %v1211
        %v1254 = vpack.c.b16 %v1215, %v1212
        %v1255 = vpack.c.b16 %v1219, %v1216
        %v1256 = vpack.c.b16 %v1220, %v1217
        %v1257 = vpack.c.b16 %v1221, %v1218
        %v1258 = vpack.c.b16 %v1225, %v1222
        %v1259 = vpack.c.b16 %v1226, %v1223
        %v1260 = vpack.c.b16 %v1227, %v1224
        %v1261 = vpack.c.b16 %v1231, %v1228
        %v1262 = vpack.c.b16 %v1232, %v1229
        %v1263 = vpack.c.b16 %v1233, %v1230
        %v1264 = vpack.c.b16 %v1237, %v1234
        %v1265 = vpack.c.b16 %v1238, %v1235
        %v1266 = vpack.c.b16 %v1239, %v1236
        %v1267 = vpack.c.b16 %v1243, %v1240
        %v1268 = vpack.c.b16 %v1244, %v1241
        %v1269 = vpack.c.b16 %v1245, %v1242
        %1294 = vmatprep.subr.bf16.mxu0 %v1247
        %1295 = vmatpush1.bf16.msra.mxu0 %v1246
        %1296 = vmatprep.subr.bf16.mxu0 %v1250
        %1297 = vmatpush1.bf16.msra.mxu0 %v1249
        %1298 = vmatprep.subr.bf16.mxu0 %v1253
        %1299 = vmatpush1.bf16.msra.mxu0 %v1252
        %1300 = vmatprep.subr.bf16.mxu0 %v1256
        %1301 = vmatpush1.bf16.msra.mxu0 %v1255
        %1302 = vmatprep.subr.bf16.mxu0 %v1259
        %1303 = vmatpush1.bf16.msra.mxu0 %v1258
        %1304 = vmatprep.subr.bf16.mxu0 %v1262
        %1305 = vmatpush1.bf16.msra.mxu0 %v1261
        %1306 = vmatprep.subr.bf16.mxu0 %v1265
        %1307 = vmatpush1.bf16.msra.mxu0 %v1264
        %1308 = vmatprep.subr.bf16.mxu0 %v1268
        %1309 = vmatpush1.bf16.msra.mxu0 %v1267
        %1310 = vmatprep.subr.bf16.mxu0 0
        %1311 = vmatpush1.bf16.msra.mxu0 0
        %1312 = vmatprep.subr.bf16.mxu0 0
        %1313 = vmatpush1.bf16.msra.mxu0 0
        %1314 = vmatprep.subr.bf16.mxu0 0
        %1315 = vmatpush1.bf16.msra.mxu0 0
        %1316 = vmatprep.subr.bf16.mxu0 0
        %1317 = vmatpush1.bf16.msra.mxu0 0
        %1318 = vmatprep.subr.bf16.mxu0 0
        %1319 = vmatpush1.bf16.msra.mxu0 0
        %1320 = vmatprep.subr.bf16.mxu0 0
        %1321 = vmatpush1.bf16.msra.mxu0 0
        %1322 = vmatprep.subr.bf16.mxu0 0
        %1323 = vmatpush1.bf16.msra.mxu0 0
        %1324 = vmatprep.subr.bf16.mxu0 0
        %1325 = vmatpush1.bf16.msra.mxu0 0
        %1326 = vmatprep.mubr.bf16.mxu0 0
        %1327 = vmatmul.mubr.bf16.gmra.mrb[0].mxu0 %v1133
        %v1328 = vpop.f32.mrb[0].mxu0
        %v1329 = vadd.f32 0.0, %v1328
        %v1330 = vpop.f32.mrb[0].mxu0
        %v1331 = vadd.f32 0.0, %v1330
        %v1332 = vpop.f32.mrb[0].mxu0
        %v1333 = vadd.f32 0.0, %v1332
        %v1334 = vpop.f32.mrb[0].mxu0
        %v1335 = vadd.f32 0.0, %v1334
        %1336 = vdwg.mxu0
        %1337 = vmatprep.subr.bf16.mxu0 0
        %1338 = vmatpush1.bf16.msra.mxu0 %v1248
        %1339 = vmatprep.subr.bf16.mxu0 0
        %1340 = vmatpush1.bf16.msra.mxu0 %v1251
        %1341 = vmatprep.subr.bf16.mxu0 0
        %1342 = vmatpush1.bf16.msra.mxu0 %v1254
        %1343 = vmatprep.subr.bf16.mxu0 0
        %1344 = vmatpush1.bf16.msra.mxu0 %v1257
        %1345 = vmatprep.subr.bf16.mxu0 0
        %1346 = vmatpush1.bf16.msra.mxu0 %v1260
        %1347 = vmatprep.subr.bf16.mxu0 0
        %1348 = vmatpush1.bf16.msra.mxu0 %v1263
        %1349 = vmatprep.subr.bf16.mxu0 0
        %1350 = vmatpush1.bf16.msra.mxu0 %v1266
        %1351 = vmatprep.subr.bf16.mxu0 0
        %1352 = vmatpush1.bf16.msra.mxu0 %v1269
        %1353 = vmatprep.subr.bf16.mxu0 0
        %1354 = vmatpush1.bf16.msra.mxu0 0
        %1355 = vmatprep.subr.bf16.mxu0 0
        %1356 = vmatpush1.bf16.msra.mxu0 0
        %1357 = vmatprep.subr.bf16.mxu0 0
        %1358 = vmatpush1.bf16.msra.mxu0 0
        %1359 = vmatprep.subr.bf16.mxu0 0
        %1360 = vmatpush1.bf16.msra.mxu0 0
        %1361 = vmatprep.subr.bf16.mxu0 0
        %1362 = vmatpush1.bf16.msra.mxu0 0
        %1363 = vmatprep.subr.bf16.mxu0 0
        %1364 = vmatpush1.bf16.msra.mxu0 0
        %1365 = vmatprep.subr.bf16.mxu0 0
        %1366 = vmatpush1.bf16.msra.mxu0 0
        %1367 = vmatprep.subr.bf16.mxu0 0
        %1368 = vmatpush1.bf16.msra.mxu0 0
        %1369 = vmatprep.mubr.bf16.mxu0 0
        %1370 = vmatmul.mubr.bf16.gmra.mrb[0].mxu0 %v1133
        %v1371 = vpop.f32.mrb[0].mxu0
        %v1372 = vadd.f32 0.0, %v1371
        %v1373 = vpop.f32.mrb[0].mxu0
        %v1374 = vpop.f32.mrb[0].mxu0
        %v1375 = vadd.f32 0.0, %v1374
        %v1376 = vpop.f32.mrb[0].mxu0
        %1377 = vdwg.mxu0
        %v1378 = vmul.f32 %v1329, 0.35355338
        %v1379 = vmul.f32 %v1333, 0.35355338
        %v1380 = vpack.c.bf16 %v1379, %v1378
        %v1381 = vpack.c.bf16 %v1335, %v1331
        %v1382 = vpack.c.bf16 %v1375, %v1372
        %v1383 = vld [vmem:[%s731] sm:$0xff]
        %v1384 = vld [vmem:[%s731 + $0x8] sm:$0xff]
        %vm1385 = vcmask 64512
        %v1387 = vsel %vm1385, %v1380, 0
        %v1390 = vsel %vm1385, %v1381, 0
        %1392 = vmatprep.subr.bf16.mxu0 0
        %1393 = vmatpush1.bf16.xpose.msra.mxu0 %v1390
        %1394 = vmatprep.subr.bf16.mxu0 0
        %1395 = vmatpush1.bf16.xpose.msra.mxu0 0
        %1396 = vmatprep.subr.bf16.mxu0 0
        %1397 = vmatpush1.bf16.xpose.msra.mxu0 0
        %1398 = vmatprep.subr.bf16.mxu0 0
        %1399 = vmatpush1.bf16.xpose.msra.mxu0 0
        %1400 = vmatprep.subr.bf16.mxu0 0
        %1401 = vmatpush1.bf16.xpose.msra.mxu0 0
        %1402 = vmatprep.subr.bf16.mxu0 0
        %1403 = vmatpush1.bf16.xpose.msra.mxu0 0
        %1404 = vmatprep.subr.bf16.mxu0 0
        %1405 = vmatpush1.bf16.xpose.msra.mxu0 0
        %1406 = vmatprep.subr.bf16.mxu0 0
        %1407 = vmatpush1.bf16.xpose.msra.mxu0 0
        %1408 = vmatprep.subr.bf16.mxu0 0
        %1409 = vmatpush1.bf16.xpose.msra.mxu0 0
        %1410 = vmatprep.subr.bf16.mxu0 0
        %1411 = vmatpush1.bf16.xpose.msra.mxu0 0
        %1412 = vmatprep.subr.bf16.mxu0 0
        %1413 = vmatpush1.bf16.xpose.msra.mxu0 0
        %1414 = vmatprep.subr.bf16.mxu0 0
        %1415 = vmatpush1.bf16.xpose.msra.mxu0 0
        %1416 = vmatprep.subr.bf16.mxu0 0
        %1417 = vmatpush1.bf16.xpose.msra.mxu0 0
        %1418 = vmatprep.subr.bf16.mxu0 0
        %1419 = vmatpush1.bf16.xpose.msra.mxu0 0
        %1420 = vmatprep.subr.bf16.mxu0 0
        %1421 = vmatpush1.bf16.xpose.msra.mxu0 0
        %1422 = vmatprep.subr.bf16.mxu0 0
        %1423 = vmatpush1.bf16.xpose.msra.mxu0 0
        %1424 = vmatprep.mubr.bf16.mxu0 0
        %1425 = vmatmul.mubr.bf16.gmra.mrb[0].mxu0 %v1387
        %v1426 = vpop.f32.mrb[0].mxu0
        %v1427 = vadd.f32 %v1383, %v1426
        %v1428 = vpop.f32.mrb[0].mxu0
        %v1429 = vpop.f32.mrb[0].mxu0
        %v1430 = vadd.f32 %v1384, %v1429
        %v1431 = vpop.f32.mrb[0].mxu0
        %1432 = vdwg.mxu0
        %vm1433 = vcmask 130048
        %v1434 = vsel %vm1433, %v1427, -inf
        %1435 = vmax.xlane.f32.xlu0 %v1434
        %v1436 = vpop.xlane.xlu0 %1435
        %v1437 = vsel %vm1433, %v1430, -inf
        %1438 = vmax.xlane.f32.xlu0 %v1437
        %v1439 = vpop.xlane.xlu0 %1438
        %v1440 = vsub.f32 %v1427, %v1436
        %v1441 = vsub.f32 %v1430, %v1439
        %v1442 = vmul.f32 %v1440, 1.442695
        %v1443 = vpow.pop %v1442
        %v1444 = vmul.f32 %v1441, 1.442695
        %v1445 = vpow.pop %v1444
        %v1446 = vsel %vm1433, %v1443, 0.0
        %1447 = vadd.xlane.f32.xlu0 %v1446
        %v1448 = vpop.xlane.xlu0 %1447
        %v1449 = vsel %vm1433, %v1445, 0.0
        %1450 = vadd.xlane.f32.xlu0 %v1449
        %v1451 = vpop.xlane.xlu0 %1450
        %v1452 = vrcp.pop %v1448
        %v1453 = vrcp.pop %v1451
        %v1454 = vmul.f32 %v1443, %v1452
        %v1455 = vmul.f32 %v1445, %v1453
        %v1456 = vpack.c.bf16 %v1455, %v1454
        %v1458 = vsel %vm1433, %v1456, 0
        %1460 = vmatprep.subr.bf16.mxu0 0
        %1461 = vmatpush1.bf16.msra.mxu0 %v1382
        %1462 = vmatprep.subr.bf16.mxu0 0
        %1463 = vmatpush1.bf16.msra.mxu0 0
        %1464 = vmatprep.subr.bf16.mxu0 0
        %1465 = vmatpush1.bf16.msra.mxu0 0
        %1466 = vmatprep.subr.bf16.mxu0 0
        %1467 = vmatpush1.bf16.msra.mxu0 0
        %1468 = vmatprep.subr.bf16.mxu0 0
        %1469 = vmatpush1.bf16.msra.mxu0 0
        %1470 = vmatprep.subr.bf16.mxu0 0
        %1471 = vmatpush1.bf16.msra.mxu0 0
        %1472 = vmatprep.subr.bf16.mxu0 0
        %1473 = vmatpush1.bf16.msra.mxu0 0
        %1474 = vmatprep.subr.bf16.mxu0 0
        %1475 = vmatpush1.bf16.msra.mxu0 0
        %1476 = vmatprep.subr.bf16.mxu0 0
        %1477 = vmatpush1.bf16.msra.mxu0 0
        %1478 = vmatprep.subr.bf16.mxu0 0
        %1479 = vmatpush1.bf16.msra.mxu0 0
        %1480 = vmatprep.subr.bf16.mxu0 0
        %1481 = vmatpush1.bf16.msra.mxu0 0
        %1482 = vmatprep.subr.bf16.mxu0 0
        %1483 = vmatpush1.bf16.msra.mxu0 0
        %1484 = vmatprep.subr.bf16.mxu0 0
        %1485 = vmatpush1.bf16.msra.mxu0 0
        %1486 = vmatprep.subr.bf16.mxu0 0
        %1487 = vmatpush1.bf16.msra.mxu0 0
        %1488 = vmatprep.subr.bf16.mxu0 0
        %1489 = vmatpush1.bf16.msra.mxu0 0
        %1490 = vmatprep.subr.bf16.mxu0 0
        %1491 = vmatpush1.bf16.msra.mxu0 0
        %1492 = vmatprep.mubr.bf16.mxu0 0
        %1493 = vmatmul.mubr.bf16.gmra.mrb[0].mxu0 %v1458
        %v1494 = vpop.f32.mrb[0].mxu0
        %v1495 = vadd.f32 0.0, %v1494
        %v1496 = vpop.f32.mrb[0].mxu0
        %v1497 = vpop.f32.mrb[0].mxu0
        %v1498 = vadd.f32 0.0, %v1497
        %v1499 = vpop.f32.mrb[0].mxu0
        %1500 = vdwg.mxu0
        %s1501 = scalar_lea.vmem %s731, 16 [#allocation6]
        %v1502 = vld [vmem:[%s1501] sm:$0xff]
        %v1503 = vld [vmem:[%s1501 + $0x8] sm:$0xff]
        %1505 = vrot.lane.b32.xlu0 %v1380, 120
        %v1506 = vpop.permute.xlu0 %1505
        %1508 = vrot.lane.b32.xlu0 %v1381, 120
        %v1509 = vpop.permute.xlu0 %1508
        %v1511 = vsel %vm1385, %v1506, 0
        %v1514 = vsel %vm1385, %v1509, 0
        %1516 = vmatprep.subr.bf16.mxu0 0
        %1517 = vmatpush1.bf16.xpose.msra.mxu0 %v1514
        %1518 = vmatprep.subr.bf16.mxu0 0
        %1519 = vmatpush1.bf16.xpose.msra.mxu0 0
        %1520 = vmatprep.subr.bf16.mxu0 0
        %1521 = vmatpush1.bf16.xpose.msra.mxu0 0
        %1522 = vmatprep.subr.bf16.mxu0 0
        %1523 = vmatpush1.bf16.xpose.msra.mxu0 0
        %1524 = vmatprep.subr.bf16.mxu0 0
        %1525 = vmatpush1.bf16.xpose.msra.mxu0 0
        %1526 = vmatprep.subr.bf16.mxu0 0
        %1527 = vmatpush1.bf16.xpose.msra.mxu0 0
        %1528 = vmatprep.subr.bf16.mxu0 0
        %1529 = vmatpush1.bf16.xpose.msra.mxu0 0
        %1530 = vmatprep.subr.bf16.mxu0 0
        %1531 = vmatpush1.bf16.xpose.msra.mxu0 0
        %1532 = vmatprep.subr.bf16.mxu0 0
        %1533 = vmatpush1.bf16.xpose.msra.mxu0 0
        %1534 = vmatprep.subr.bf16.mxu0 0
        %1535 = vmatpush1.bf16.xpose.msra.mxu0 0
        %1536 = vmatprep.subr.bf16.mxu0 0
        %1537 = vmatpush1.bf16.xpose.msra.mxu0 0
        %1538 = vmatprep.subr.bf16.mxu0 0
        %1539 = vmatpush1.bf16.xpose.msra.mxu0 0
        %1540 = vmatprep.subr.bf16.mxu0 0
        %1541 = vmatpush1.bf16.xpose.msra.mxu0 0
        %1542 = vmatprep.subr.bf16.mxu0 0
        %1543 = vmatpush1.bf16.xpose.msra.mxu0 0
        %1544 = vmatprep.subr.bf16.mxu0 0
        %1545 = vmatpush1.bf16.xpose.msra.mxu0 0
        %1546 = vmatprep.subr.bf16.mxu0 0
        %1547 = vmatpush1.bf16.xpose.msra.mxu0 0
        %1548 = vmatprep.mubr.bf16.mxu0 0
        %1549 = vmatmul.mubr.bf16.gmra.mrb[0].mxu0 %v1511
        %v1550 = vpop.f32.mrb[0].mxu0
        %v1551 = vadd.f32 %v1502, %v1550
        %v1552 = vpop.f32.mrb[0].mxu0
        %v1553 = vpop.f32.mrb[0].mxu0
        %v1554 = vadd.f32 %v1503, %v1553
        %v1555 = vpop.f32.mrb[0].mxu0
        %1556 = vdwg.mxu0
        %v1557 = vsel %vm1433, %v1551, -inf
        %1558 = vmax.xlane.f32.xlu0 %v1557
        %v1559 = vpop.xlane.xlu0 %1558
        %v1560 = vsel %vm1433, %v1554, -inf
        %1561 = vmax.xlane.f32.xlu0 %v1560
        %v1562 = vpop.xlane.xlu0 %1561
        %v1563 = vsub.f32 %v1551, %v1559
        %v1564 = vsub.f32 %v1554, %v1562
        %v1565 = vmul.f32 %v1563, 1.442695
        %v1566 = vpow.pop %v1565
        %v1567 = vmul.f32 %v1564, 1.442695
        %v1568 = vpow.pop %v1567
        %v1569 = vsel %vm1433, %v1566, 0.0
        %1570 = vadd.xlane.f32.xlu0 %v1569
        %v1571 = vpop.xlane.xlu0 %1570
        %v1572 = vsel %vm1433, %v1568, 0.0
        %1573 = vadd.xlane.f32.xlu0 %v1572
        %v1574 = vpop.xlane.xlu0 %1573
        %v1575 = vrcp.pop %v1571
        %v1576 = vrcp.pop %v1574
        %v1577 = vmul.f32 %v1566, %v1575
        %v1578 = vmul.f32 %v1568, %v1576
        %v1579 = vpack.c.bf16 %v1578, %v1577
        %1581 = vrot.lane.b32.xlu0 %v1382, 120
        %v1582 = vpop.permute.xlu0 %1581
        %v1585 = vsel %vm1433, %v1579, 0
        %1587 = vmatprep.subr.bf16.mxu0 0
        %1588 = vmatpush1.bf16.msra.mxu0 %v1582
        %1589 = vmatprep.subr.bf16.mxu0 0
        %1590 = vmatpush1.bf16.msra.mxu0 0
        %1591 = vmatprep.subr.bf16.mxu0 0
        %1592 = vmatpush1.bf16.msra.mxu0 0
        %1593 = vmatprep.subr.bf16.mxu0 0
        %1594 = vmatpush1.bf16.msra.mxu0 0
        %1595 = vmatprep.subr.bf16.mxu0 0
        %1596 = vmatpush1.bf16.msra.mxu0 0
        %1597 = vmatprep.subr.bf16.mxu0 0
        %1598 = vmatpush1.bf16.msra.mxu0 0
        %1599 = vmatprep.subr.bf16.mxu0 0
        %1600 = vmatpush1.bf16.msra.mxu0 0
        %1601 = vmatprep.subr.bf16.mxu0 0
        %1602 = vmatpush1.bf16.msra.mxu0 0
        %1603 = vmatprep.subr.bf16.mxu0 0
        %1604 = vmatpush1.bf16.msra.mxu0 0
        %1605 = vmatprep.subr.bf16.mxu0 0
        %1606 = vmatpush1.bf16.msra.mxu0 0
        %1607 = vmatprep.subr.bf16.mxu0 0
        %1608 = vmatpush1.bf16.msra.mxu0 0
        %1609 = vmatprep.subr.bf16.mxu0 0
        %1610 = vmatpush1.bf16.msra.mxu0 0
        %1611 = vmatprep.subr.bf16.mxu0 0
        %1612 = vmatpush1.bf16.msra.mxu0 0
        %1613 = vmatprep.subr.bf16.mxu0 0
        %1614 = vmatpush1.bf16.msra.mxu0 0
        %1615 = vmatprep.subr.bf16.mxu0 0
        %1616 = vmatpush1.bf16.msra.mxu0 0
        %1617 = vmatprep.subr.bf16.mxu0 0
        %1618 = vmatpush1.bf16.msra.mxu0 0
        %1619 = vmatprep.mubr.bf16.mxu0 0
        %1620 = vmatmul.mubr.bf16.gmra.mrb[0].mxu0 %v1585
        %v1621 = vpop.f32.mrb[0].mxu0
        %v1622 = vadd.f32 0.0, %v1621
        %v1623 = vpop.f32.mrb[0].mxu0
        %v1624 = vpop.f32.mrb[0].mxu0
        %v1625 = vadd.f32 0.0, %v1624
        %v1626 = vpop.f32.mrb[0].mxu0
        %1627 = vdwg.mxu0
        %s1628 = scalar_lea.vmem %s731, 32 [#allocation6]
        %v1629 = vld [vmem:[%s1628] sm:$0xff]
        %v1630 = vld [vmem:[%s1628 + $0x8] sm:$0xff]
        %1631 = vrot.lane.b32.xlu0 %v1380, 112
        %v1632 = vpop.permute.xlu0 %1631
        %1633 = vrot.lane.b32.xlu0 %v1381, 112
        %v1634 = vpop.permute.xlu0 %1633
        %v1636 = vsel %vm1385, %v1632, 0
        %v1639 = vsel %vm1385, %v1634, 0
        %1641 = vmatprep.subr.bf16.mxu0 0
        %1642 = vmatpush1.bf16.xpose.msra.mxu0 %v1639
        %1643 = vmatprep.subr.bf16.mxu0 0
        %1644 = vmatpush1.bf16.xpose.msra.mxu0 0
        %1645 = vmatprep.subr.bf16.mxu0 0
        %1646 = vmatpush1.bf16.xpose.msra.mxu0 0
        %1647 = vmatprep.subr.bf16.mxu0 0
        %1648 = vmatpush1.bf16.xpose.msra.mxu0 0
        %1649 = vmatprep.subr.bf16.mxu0 0
        %1650 = vmatpush1.bf16.xpose.msra.mxu0 0
        %1651 = vmatprep.subr.bf16.mxu0 0
        %1652 = vmatpush1.bf16.xpose.msra.mxu0 0
        %1653 = vmatprep.subr.bf16.mxu0 0
        %1654 = vmatpush1.bf16.xpose.msra.mxu0 0
        %1655 = vmatprep.subr.bf16.mxu0 0
        %1656 = vmatpush1.bf16.xpose.msra.mxu0 0
        %1657 = vmatprep.subr.bf16.mxu0 0
        %1658 = vmatpush1.bf16.xpose.msra.mxu0 0
        %1659 = vmatprep.subr.bf16.mxu0 0
        %1660 = vmatpush1.bf16.xpose.msra.mxu0 0
        %1661 = vmatprep.subr.bf16.mxu0 0
        %1662 = vmatpush1.bf16.xpose.msra.mxu0 0
        %1663 = vmatprep.subr.bf16.mxu0 0
        %1664 = vmatpush1.bf16.xpose.msra.mxu0 0
        %1665 = vmatprep.subr.bf16.mxu0 0
        %1666 = vmatpush1.bf16.xpose.msra.mxu0 0
        %1667 = vmatprep.subr.bf16.mxu0 0
        %1668 = vmatpush1.bf16.xpose.msra.mxu0 0
        %1669 = vmatprep.subr.bf16.mxu0 0
        %1670 = vmatpush1.bf16.xpose.msra.mxu0 0
        %1671 = vmatprep.subr.bf16.mxu0 0
        %1672 = vmatpush1.bf16.xpose.msra.mxu0 0
        %1673 = vmatprep.mubr.bf16.mxu0 0
        %1674 = vmatmul.mubr.bf16.gmra.mrb[0].mxu0 %v1636
        %v1675 = vpop.f32.mrb[0].mxu0
        %v1676 = vadd.f32 %v1629, %v1675
        %v1677 = vpop.f32.mrb[0].mxu0
        %v1678 = vpop.f32.mrb[0].mxu0
        %v1679 = vadd.f32 %v1630, %v1678
        %v1680 = vpop.f32.mrb[0].mxu0
        %1681 = vdwg.mxu0
        %v1682 = vsel %vm1433, %v1676, -inf
        %1683 = vmax.xlane.f32.xlu0 %v1682
        %v1684 = vpop.xlane.xlu0 %1683
        %v1685 = vsel %vm1433, %v1679, -inf
        %1686 = vmax.xlane.f32.xlu0 %v1685
        %v1687 = vpop.xlane.xlu0 %1686
        %v1688 = vsub.f32 %v1676, %v1684
        %v1689 = vsub.f32 %v1679, %v1687
        %v1690 = vmul.f32 %v1688, 1.442695
        %v1691 = vpow.pop %v1690
        %v1692 = vmul.f32 %v1689, 1.442695
        %v1693 = vpow.pop %v1692
        %v1694 = vsel %vm1433, %v1691, 0.0
        %1695 = vadd.xlane.f32.xlu0 %v1694
        %v1696 = vpop.xlane.xlu0 %1695
        %v1697 = vsel %vm1433, %v1693, 0.0
        %1698 = vadd.xlane.f32.xlu0 %v1697
        %v1699 = vpop.xlane.xlu0 %1698
        %v1700 = vrcp.pop %v1696
        %v1701 = vrcp.pop %v1699
        %v1702 = vmul.f32 %v1691, %v1700
        %v1703 = vmul.f32 %v1693, %v1701
        %v1704 = vpack.c.bf16 %v1703, %v1702
        %1705 = vrot.lane.b32.xlu0 %v1382, 112
        %v1706 = vpop.permute.xlu0 %1705
        %v1709 = vsel %vm1433, %v1704, 0
        %1711 = vmatprep.subr.bf16.mxu0 0
        %1712 = vmatpush1.bf16.msra.mxu0 %v1706
        %1713 = vmatprep.subr.bf16.mxu0 0
        %1714 = vmatpush1.bf16.msra.mxu0 0
        %1715 = vmatprep.subr.bf16.mxu0 0
        %1716 = vmatpush1.bf16.msra.mxu0 0
        %1717 = vmatprep.subr.bf16.mxu0 0
        %1718 = vmatpush1.bf16.msra.mxu0 0
        %1719 = vmatprep.subr.bf16.mxu0 0
        %1720 = vmatpush1.bf16.msra.mxu0 0
        %1721 = vmatprep.subr.bf16.mxu0 0
        %1722 = vmatpush1.bf16.msra.mxu0 0
        %1723 = vmatprep.subr.bf16.mxu0 0
        %1724 = vmatpush1.bf16.msra.mxu0 0
        %1725 = vmatprep.subr.bf16.mxu0 0
        %1726 = vmatpush1.bf16.msra.mxu0 0
        %1727 = vmatprep.subr.bf16.mxu0 0
        %1728 = vmatpush1.bf16.msra.mxu0 0
        %1729 = vmatprep.subr.bf16.mxu0 0
        %1730 = vmatpush1.bf16.msra.mxu0 0
        %1731 = vmatprep.subr.bf16.mxu0 0
        %1732 = vmatpush1.bf16.msra.mxu0 0
        %1733 = vmatprep.subr.bf16.mxu0 0
        %1734 = vmatpush1.bf16.msra.mxu0 0
        %1735 = vmatprep.subr.bf16.mxu0 0
        %1736 = vmatpush1.bf16.msra.mxu0 0
        %1737 = vmatprep.subr.bf16.mxu0 0
        %1738 = vmatpush1.bf16.msra.mxu0 0
        %1739 = vmatprep.subr.bf16.mxu0 0
        %1740 = vmatpush1.bf16.msra.mxu0 0
        %1741 = vmatprep.subr.bf16.mxu0 0
        %1742 = vmatpush1.bf16.msra.mxu0 0
        %1743 = vmatprep.mubr.bf16.mxu0 0
        %1744 = vmatmul.mubr.bf16.gmra.mrb[0].mxu0 %v1709
        %v1745 = vpop.f32.mrb[0].mxu0
        %v1746 = vadd.f32 0.0, %v1745
        %v1747 = vpop.f32.mrb[0].mxu0
        %v1748 = vpop.f32.mrb[0].mxu0
        %v1749 = vadd.f32 0.0, %v1748
        %v1750 = vpop.f32.mrb[0].mxu0
        %1751 = vdwg.mxu0
        %s1752 = scalar_lea.vmem %s731, 48 [#allocation6]
        %v1753 = vld [vmem:[%s1752] sm:$0xff]
        %v1754 = vld [vmem:[%s1752 + $0x8] sm:$0xff]
        %1755 = vrot.lane.b32.xlu0 %v1380, 104
        %v1756 = vpop.permute.xlu0 %1755
        %1757 = vrot.lane.b32.xlu0 %v1381, 104
        %v1758 = vpop.permute.xlu0 %1757
        %v1760 = vsel %vm1385, %v1756, 0
        %v1763 = vsel %vm1385, %v1758, 0
        %1765 = vmatprep.subr.bf16.mxu0 0
        %1766 = vmatpush1.bf16.xpose.msra.mxu0 %v1763
        %1767 = vmatprep.subr.bf16.mxu0 0
        %1768 = vmatpush1.bf16.xpose.msra.mxu0 0
        %1769 = vmatprep.subr.bf16.mxu0 0
        %1770 = vmatpush1.bf16.xpose.msra.mxu0 0
        %1771 = vmatprep.subr.bf16.mxu0 0
        %1772 = vmatpush1.bf16.xpose.msra.mxu0 0
        %1773 = vmatprep.subr.bf16.mxu0 0
        %1774 = vmatpush1.bf16.xpose.msra.mxu0 0
        %1775 = vmatprep.subr.bf16.mxu0 0
        %1776 = vmatpush1.bf16.xpose.msra.mxu0 0
        %1777 = vmatprep.subr.bf16.mxu0 0
        %1778 = vmatpush1.bf16.xpose.msra.mxu0 0
        %1779 = vmatprep.subr.bf16.mxu0 0
        %1780 = vmatpush1.bf16.xpose.msra.mxu0 0
        %1781 = vmatprep.subr.bf16.mxu0 0
        %1782 = vmatpush1.bf16.xpose.msra.mxu0 0
        %1783 = vmatprep.subr.bf16.mxu0 0
        %1784 = vmatpush1.bf16.xpose.msra.mxu0 0
        %1785 = vmatprep.subr.bf16.mxu0 0
        %1786 = vmatpush1.bf16.xpose.msra.mxu0 0
        %1787 = vmatprep.subr.bf16.mxu0 0
        %1788 = vmatpush1.bf16.xpose.msra.mxu0 0
        %1789 = vmatprep.subr.bf16.mxu0 0
        %1790 = vmatpush1.bf16.xpose.msra.mxu0 0
        %1791 = vmatprep.subr.bf16.mxu0 0
        %1792 = vmatpush1.bf16.xpose.msra.mxu0 0
        %1793 = vmatprep.subr.bf16.mxu0 0
        %1794 = vmatpush1.bf16.xpose.msra.mxu0 0
        %1795 = vmatprep.subr.bf16.mxu0 0
        %1796 = vmatpush1.bf16.xpose.msra.mxu0 0
        %1797 = vmatprep.mubr.bf16.mxu0 0
        %1798 = vmatmul.mubr.bf16.gmra.mrb[0].mxu0 %v1760
        %v1799 = vpop.f32.mrb[0].mxu0
        %v1800 = vadd.f32 %v1753, %v1799
        %v1801 = vpop.f32.mrb[0].mxu0
        %v1802 = vpop.f32.mrb[0].mxu0
        %v1803 = vadd.f32 %v1754, %v1802
        %v1804 = vpop.f32.mrb[0].mxu0
        %1805 = vdwg.mxu0
        %v1806 = vsel %vm1433, %v1800, -inf
        %1807 = vmax.xlane.f32.xlu0 %v1806
        %v1808 = vpop.xlane.xlu0 %1807
        %v1809 = vsel %vm1433, %v1803, -inf
        %1810 = vmax.xlane.f32.xlu0 %v1809
        %v1811 = vpop.xlane.xlu0 %1810
        %v1812 = vsub.f32 %v1800, %v1808
        %v1813 = vsub.f32 %v1803, %v1811
        %v1814 = vmul.f32 %v1812, 1.442695
        %v1815 = vpow.pop %v1814
        %v1816 = vmul.f32 %v1813, 1.442695
        %v1817 = vpow.pop %v1816
        %v1818 = vsel %vm1433, %v1815, 0.0
        %1819 = vadd.xlane.f32.xlu0 %v1818
        %v1820 = vpop.xlane.xlu0 %1819
        %v1821 = vsel %vm1433, %v1817, 0.0
        %1822 = vadd.xlane.f32.xlu0 %v1821
        %v1823 = vpop.xlane.xlu0 %1822
        %v1824 = vrcp.pop %v1820
        %v1825 = vrcp.pop %v1823
        %v1826 = vmul.f32 %v1815, %v1824
        %v1827 = vmul.f32 %v1817, %v1825
        %v1828 = vpack.c.bf16 %v1827, %v1826
        %1829 = vrot.lane.b32.xlu0 %v1382, 104
        %v1830 = vpop.permute.xlu0 %1829
        %v1833 = vsel %vm1433, %v1828, 0
        %1835 = vmatprep.subr.bf16.mxu0 0
        %1836 = vmatpush1.bf16.msra.mxu0 %v1830
        %1837 = vmatprep.subr.bf16.mxu0 0
        %1838 = vmatpush1.bf16.msra.mxu0 0
        %1839 = vmatprep.subr.bf16.mxu0 0
        %1840 = vmatpush1.bf16.msra.mxu0 0
        %1841 = vmatprep.subr.bf16.mxu0 0
        %1842 = vmatpush1.bf16.msra.mxu0 0
        %1843 = vmatprep.subr.bf16.mxu0 0
        %1844 = vmatpush1.bf16.msra.mxu0 0
        %1845 = vmatprep.subr.bf16.mxu0 0
        %1846 = vmatpush1.bf16.msra.mxu0 0
        %1847 = vmatprep.subr.bf16.mxu0 0
        %1848 = vmatpush1.bf16.msra.mxu0 0
        %1849 = vmatprep.subr.bf16.mxu0 0
        %1850 = vmatpush1.bf16.msra.mxu0 0
        %1851 = vmatprep.subr.bf16.mxu0 0
        %1852 = vmatpush1.bf16.msra.mxu0 0
        %1853 = vmatprep.subr.bf16.mxu0 0
        %1854 = vmatpush1.bf16.msra.mxu0 0
        %1855 = vmatprep.subr.bf16.mxu0 0
        %1856 = vmatpush1.bf16.msra.mxu0 0
        %1857 = vmatprep.subr.bf16.mxu0 0
        %1858 = vmatpush1.bf16.msra.mxu0 0
        %1859 = vmatprep.subr.bf16.mxu0 0
        %1860 = vmatpush1.bf16.msra.mxu0 0
        %1861 = vmatprep.subr.bf16.mxu0 0
        %1862 = vmatpush1.bf16.msra.mxu0 0
        %1863 = vmatprep.subr.bf16.mxu0 0
        %1864 = vmatpush1.bf16.msra.mxu0 0
        %1865 = vmatprep.subr.bf16.mxu0 0
        %1866 = vmatpush1.bf16.msra.mxu0 0
        %1867 = vmatprep.mubr.bf16.mxu0 0
        %1868 = vmatmul.mubr.bf16.gmra.mrb[0].mxu0 %v1833
        %v1869 = vpop.f32.mrb[0].mxu0
        %v1870 = vadd.f32 0.0, %v1869
        %v1871 = vpop.f32.mrb[0].mxu0
        %v1872 = vpop.f32.mrb[0].mxu0
        %v1873 = vadd.f32 0.0, %v1872
        %v1874 = vpop.f32.mrb[0].mxu0
        %1875 = vdwg.mxu0
        %s1876 = scalar_lea.vmem %s731, 64 [#allocation6]
        %v1877 = vld [vmem:[%s1876] sm:$0xff]
        %v1878 = vld [vmem:[%s1876 + $0x8] sm:$0xff]
        %1879 = vrot.lane.b32.xlu0 %v1380, 96
        %v1880 = vpop.permute.xlu0 %1879
        %1881 = vrot.lane.b32.xlu0 %v1381, 96
        %v1882 = vpop.permute.xlu0 %1881
        %v1884 = vsel %vm1385, %v1880, 0
        %v1887 = vsel %vm1385, %v1882, 0
        %1889 = vmatprep.subr.bf16.mxu0 0
        %1890 = vmatpush1.bf16.xpose.msra.mxu0 %v1887
        %1891 = vmatprep.subr.bf16.mxu0 0
        %1892 = vmatpush1.bf16.xpose.msra.mxu0 0
        %1893 = vmatprep.subr.bf16.mxu0 0
        %1894 = vmatpush1.bf16.xpose.msra.mxu0 0
        %1895 = vmatprep.subr.bf16.mxu0 0
        %1896 = vmatpush1.bf16.xpose.msra.mxu0 0
        %1897 = vmatprep.subr.bf16.mxu0 0
        %1898 = vmatpush1.bf16.xpose.msra.mxu0 0
        %1899 = vmatprep.subr.bf16.mxu0 0
        %1900 = vmatpush1.bf16.xpose.msra.mxu0 0
        %1901 = vmatprep.subr.bf16.mxu0 0
        %1902 = vmatpush1.bf16.xpose.msra.mxu0 0
        %1903 = vmatprep.subr.bf16.mxu0 0
        %1904 = vmatpush1.bf16.xpose.msra.mxu0 0
        %1905 = vmatprep.subr.bf16.mxu0 0
        %1906 = vmatpush1.bf16.xpose.msra.mxu0 0
        %1907 = vmatprep.subr.bf16.mxu0 0
        %1908 = vmatpush1.bf16.xpose.msra.mxu0 0
        %1909 = vmatprep.subr.bf16.mxu0 0
        %1910 = vmatpush1.bf16.xpose.msra.mxu0 0
        %1911 = vmatprep.subr.bf16.mxu0 0
        %1912 = vmatpush1.bf16.xpose.msra.mxu0 0
        %1913 = vmatprep.subr.bf16.mxu0 0
        %1914 = vmatpush1.bf16.xpose.msra.mxu0 0
        %1915 = vmatprep.subr.bf16.mxu0 0
        %1916 = vmatpush1.bf16.xpose.msra.mxu0 0
        %1917 = vmatprep.subr.bf16.mxu0 0
        %1918 = vmatpush1.bf16.xpose.msra.mxu0 0
        %1919 = vmatprep.subr.bf16.mxu0 0
        %1920 = vmatpush1.bf16.xpose.msra.mxu0 0
        %1921 = vmatprep.mubr.bf16.mxu0 0
        %1922 = vmatmul.mubr.bf16.gmra.mrb[0].mxu0 %v1884
        %v1923 = vpop.f32.mrb[0].mxu0
        %v1924 = vadd.f32 %v1877, %v1923
        %v1925 = vpop.f32.mrb[0].mxu0
        %v1926 = vpop.f32.mrb[0].mxu0
        %v1927 = vadd.f32 %v1878, %v1926
        %v1928 = vpop.f32.mrb[0].mxu0
        %1929 = vdwg.mxu0
        %v1930 = vsel %vm1433, %v1924, -inf
        %1931 = vmax.xlane.f32.xlu0 %v1930
        %v1932 = vpop.xlane.xlu0 %1931
        %v1933 = vsel %vm1433, %v1927, -inf
        %1934 = vmax.xlane.f32.xlu0 %v1933
        %v1935 = vpop.xlane.xlu0 %1934
        %v1936 = vsub.f32 %v1924, %v1932
        %v1937 = vsub.f32 %v1927, %v1935
        %v1938 = vmul.f32 %v1936, 1.442695
        %v1939 = vpow.pop %v1938
        %v1940 = vmul.f32 %v1937, 1.442695
        %v1941 = vpow.pop %v1940
        %v1942 = vsel %vm1433, %v1939, 0.0
        %1943 = vadd.xlane.f32.xlu0 %v1942
        %v1944 = vpop.xlane.xlu0 %1943
        %v1945 = vsel %vm1433, %v1941, 0.0
        %1946 = vadd.xlane.f32.xlu0 %v1945
        %v1947 = vpop.xlane.xlu0 %1946
        %v1948 = vrcp.pop %v1944
        %v1949 = vrcp.pop %v1947
        %v1950 = vmul.f32 %v1939, %v1948
        %v1951 = vmul.f32 %v1941, %v1949
        %v1952 = vpack.c.bf16 %v1951, %v1950
        %1953 = vrot.lane.b32.xlu0 %v1382, 96
        %v1954 = vpop.permute.xlu0 %1953
        %v1957 = vsel %vm1433, %v1952, 0
        %1959 = vmatprep.subr.bf16.mxu0 0
        %1960 = vmatpush1.bf16.msra.mxu0 %v1954
        %1961 = vmatprep.subr.bf16.mxu0 0
        %1962 = vmatpush1.bf16.msra.mxu0 0
        %1963 = vmatprep.subr.bf16.mxu0 0
        %1964 = vmatpush1.bf16.msra.mxu0 0
        %1965 = vmatprep.subr.bf16.mxu0 0
        %1966 = vmatpush1.bf16.msra.mxu0 0
        %1967 = vmatprep.subr.bf16.mxu0 0
        %1968 = vmatpush1.bf16.msra.mxu0 0
        %1969 = vmatprep.subr.bf16.mxu0 0
        %1970 = vmatpush1.bf16.msra.mxu0 0
        %1971 = vmatprep.subr.bf16.mxu0 0
        %1972 = vmatpush1.bf16.msra.mxu0 0
        %1973 = vmatprep.subr.bf16.mxu0 0
        %1974 = vmatpush1.bf16.msra.mxu0 0
        %1975 = vmatprep.subr.bf16.mxu0 0
        %1976 = vmatpush1.bf16.msra.mxu0 0
        %1977 = vmatprep.subr.bf16.mxu0 0
        %1978 = vmatpush1.bf16.msra.mxu0 0
        %1979 = vmatprep.subr.bf16.mxu0 0
        %1980 = vmatpush1.bf16.msra.mxu0 0
        %1981 = vmatprep.subr.bf16.mxu0 0
        %1982 = vmatpush1.bf16.msra.mxu0 0
        %1983 = vmatprep.subr.bf16.mxu0 0
        %1984 = vmatpush1.bf16.msra.mxu0 0
        %1985 = vmatprep.subr.bf16.mxu0 0
        %1986 = vmatpush1.bf16.msra.mxu0 0
        %1987 = vmatprep.subr.bf16.mxu0 0
        %1988 = vmatpush1.bf16.msra.mxu0 0
        %1989 = vmatprep.subr.bf16.mxu0 0
        %1990 = vmatpush1.bf16.msra.mxu0 0
        %1991 = vmatprep.mubr.bf16.mxu0 0
        %1992 = vmatmul.mubr.bf16.gmra.mrb[0].mxu0 %v1957
        %v1993 = vpop.f32.mrb[0].mxu0
        %v1994 = vadd.f32 0.0, %v1993
        %v1995 = vpop.f32.mrb[0].mxu0
        %v1996 = vpop.f32.mrb[0].mxu0
        %v1997 = vadd.f32 0.0, %v1996
        %v1998 = vpop.f32.mrb[0].mxu0
        %1999 = vdwg.mxu0
        %s2000 = scalar_lea.vmem %s731, 80 [#allocation6]
        %v2001 = vld [vmem:[%s2000] sm:$0xff]
        %v2002 = vld [vmem:[%s2000 + $0x8] sm:$0xff]
        %2003 = vrot.lane.b32.xlu0 %v1380, 88
        %v2004 = vpop.permute.xlu0 %2003
        %2005 = vrot.lane.b32.xlu0 %v1381, 88
        %v2006 = vpop.permute.xlu0 %2005
        %v2008 = vsel %vm1385, %v2004, 0
        %v2011 = vsel %vm1385, %v2006, 0
        %2013 = vmatprep.subr.bf16.mxu0 0
        %2014 = vmatpush1.bf16.xpose.msra.mxu0 %v2011
        %2015 = vmatprep.subr.bf16.mxu0 0
        %2016 = vmatpush1.bf16.xpose.msra.mxu0 0
        %2017 = vmatprep.subr.bf16.mxu0 0
        %2018 = vmatpush1.bf16.xpose.msra.mxu0 0
        %2019 = vmatprep.subr.bf16.mxu0 0
        %2020 = vmatpush1.bf16.xpose.msra.mxu0 0
        %2021 = vmatprep.subr.bf16.mxu0 0
        %2022 = vmatpush1.bf16.xpose.msra.mxu0 0
        %2023 = vmatprep.subr.bf16.mxu0 0
        %2024 = vmatpush1.bf16.xpose.msra.mxu0 0
        %2025 = vmatprep.subr.bf16.mxu0 0
        %2026 = vmatpush1.bf16.xpose.msra.mxu0 0
        %2027 = vmatprep.subr.bf16.mxu0 0
        %2028 = vmatpush1.bf16.xpose.msra.mxu0 0
        %2029 = vmatprep.subr.bf16.mxu0 0
        %2030 = vmatpush1.bf16.xpose.msra.mxu0 0
        %2031 = vmatprep.subr.bf16.mxu0 0
        %2032 = vmatpush1.bf16.xpose.msra.mxu0 0
        %2033 = vmatprep.subr.bf16.mxu0 0
        %2034 = vmatpush1.bf16.xpose.msra.mxu0 0
        %2035 = vmatprep.subr.bf16.mxu0 0
        %2036 = vmatpush1.bf16.xpose.msra.mxu0 0
        %2037 = vmatprep.subr.bf16.mxu0 0
        %2038 = vmatpush1.bf16.xpose.msra.mxu0 0
        %2039 = vmatprep.subr.bf16.mxu0 0
        %2040 = vmatpush1.bf16.xpose.msra.mxu0 0
        %2041 = vmatprep.subr.bf16.mxu0 0
        %2042 = vmatpush1.bf16.xpose.msra.mxu0 0
        %2043 = vmatprep.subr.bf16.mxu0 0
        %2044 = vmatpush1.bf16.xpose.msra.mxu0 0
        %2045 = vmatprep.mubr.bf16.mxu0 0
        %2046 = vmatmul.mubr.bf16.gmra.mrb[0].mxu0 %v2008
        %v2047 = vpop.f32.mrb[0].mxu0
        %v2048 = vadd.f32 %v2001, %v2047
        %v2049 = vpop.f32.mrb[0].mxu0
        %v2050 = vpop.f32.mrb[0].mxu0
        %v2051 = vadd.f32 %v2002, %v2050
        %v2052 = vpop.f32.mrb[0].mxu0
        %2053 = vdwg.mxu0
        %v2054 = vsel %vm1433, %v2048, -inf
        %2055 = vmax.xlane.f32.xlu0 %v2054
        %v2056 = vpop.xlane.xlu0 %2055
        %v2057 = vsel %vm1433, %v2051, -inf
        %2058 = vmax.xlane.f32.xlu0 %v2057
        %v2059 = vpop.xlane.xlu0 %2058
        %v2060 = vsub.f32 %v2048, %v2056
        %v2061 = vsub.f32 %v2051, %v2059
        %v2062 = vmul.f32 %v2060, 1.442695
        %v2063 = vpow.pop %v2062
        %v2064 = vmul.f32 %v2061, 1.442695
        %v2065 = vpow.pop %v2064
        %v2066 = vsel %vm1433, %v2063, 0.0
        %2067 = vadd.xlane.f32.xlu0 %v2066
        %v2068 = vpop.xlane.xlu0 %2067
        %v2069 = vsel %vm1433, %v2065, 0.0
        %2070 = vadd.xlane.f32.xlu0 %v2069
        %v2071 = vpop.xlane.xlu0 %2070
        %v2072 = vrcp.pop %v2068
        %v2073 = vrcp.pop %v2071
        %v2074 = vmul.f32 %v2063, %v2072
        %v2075 = vmul.f32 %v2065, %v2073
        %v2076 = vpack.c.bf16 %v2075, %v2074
        %2077 = vrot.lane.b32.xlu0 %v1382, 88
        %v2078 = vpop.permute.xlu0 %2077
        %v2081 = vsel %vm1433, %v2076, 0
        %2083 = vmatprep.subr.bf16.mxu0 0
        %2084 = vmatpush1.bf16.msra.mxu0 %v2078
        %2085 = vmatprep.subr.bf16.mxu0 0
        %2086 = vmatpush1.bf16.msra.mxu0 0
        %2087 = vmatprep.subr.bf16.mxu0 0
        %2088 = vmatpush1.bf16.msra.mxu0 0
        %2089 = vmatprep.subr.bf16.mxu0 0
        %2090 = vmatpush1.bf16.msra.mxu0 0
        %2091 = vmatprep.subr.bf16.mxu0 0
        %2092 = vmatpush1.bf16.msra.mxu0 0
        %2093 = vmatprep.subr.bf16.mxu0 0
        %2094 = vmatpush1.bf16.msra.mxu0 0
        %2095 = vmatprep.subr.bf16.mxu0 0
        %2096 = vmatpush1.bf16.msra.mxu0 0
        %2097 = vmatprep.subr.bf16.mxu0 0
        %2098 = vmatpush1.bf16.msra.mxu0 0
        %2099 = vmatprep.subr.bf16.mxu0 0
        %2100 = vmatpush1.bf16.msra.mxu0 0
        %2101 = vmatprep.subr.bf16.mxu0 0
        %2102 = vmatpush1.bf16.msra.mxu0 0
        %2103 = vmatprep.subr.bf16.mxu0 0
        %2104 = vmatpush1.bf16.msra.mxu0 0
        %2105 = vmatprep.subr.bf16.mxu0 0
        %2106 = vmatpush1.bf16.msra.mxu0 0
        %2107 = vmatprep.subr.bf16.mxu0 0
        %2108 = vmatpush1.bf16.msra.mxu0 0
        %2109 = vmatprep.subr.bf16.mxu0 0
        %2110 = vmatpush1.bf16.msra.mxu0 0
        %2111 = vmatprep.subr.bf16.mxu0 0
        %2112 = vmatpush1.bf16.msra.mxu0 0
        %2113 = vmatprep.subr.bf16.mxu0 0
        %2114 = vmatpush1.bf16.msra.mxu0 0
        %2115 = vmatprep.mubr.bf16.mxu0 0
        %2116 = vmatmul.mubr.bf16.gmra.mrb[0].mxu0 %v2081
        %v2117 = vpop.f32.mrb[0].mxu0
        %v2118 = vadd.f32 0.0, %v2117
        %v2119 = vpop.f32.mrb[0].mxu0
        %v2120 = vpop.f32.mrb[0].mxu0
        %v2121 = vadd.f32 0.0, %v2120
        %v2122 = vpop.f32.mrb[0].mxu0
        %2123 = vdwg.mxu0
        %s2124 = scalar_lea.vmem %s731, 96 [#allocation6]
        %v2125 = vld [vmem:[%s2124] sm:$0xff]
        %v2126 = vld [vmem:[%s2124 + $0x8] sm:$0xff]
        %2127 = vrot.lane.b32.xlu0 %v1380, 80
        %v2128 = vpop.permute.xlu0 %2127
        %2129 = vrot.lane.b32.xlu0 %v1381, 80
        %v2130 = vpop.permute.xlu0 %2129
        %v2132 = vsel %vm1385, %v2128, 0
        %v2135 = vsel %vm1385, %v2130, 0
        %2137 = vmatprep.subr.bf16.mxu0 0
        %2138 = vmatpush1.bf16.xpose.msra.mxu0 %v2135
        %2139 = vmatprep.subr.bf16.mxu0 0
        %2140 = vmatpush1.bf16.xpose.msra.mxu0 0
        %2141 = vmatprep.subr.bf16.mxu0 0
        %2142 = vmatpush1.bf16.xpose.msra.mxu0 0
        %2143 = vmatprep.subr.bf16.mxu0 0
        %2144 = vmatpush1.bf16.xpose.msra.mxu0 0
        %2145 = vmatprep.subr.bf16.mxu0 0
        %2146 = vmatpush1.bf16.xpose.msra.mxu0 0
        %2147 = vmatprep.subr.bf16.mxu0 0
        %2148 = vmatpush1.bf16.xpose.msra.mxu0 0
        %2149 = vmatprep.subr.bf16.mxu0 0
        %2150 = vmatpush1.bf16.xpose.msra.mxu0 0
        %2151 = vmatprep.subr.bf16.mxu0 0
        %2152 = vmatpush1.bf16.xpose.msra.mxu0 0
        %2153 = vmatprep.subr.bf16.mxu0 0
        %2154 = vmatpush1.bf16.xpose.msra.mxu0 0
        %2155 = vmatprep.subr.bf16.mxu0 0
        %2156 = vmatpush1.bf16.xpose.msra.mxu0 0
        %2157 = vmatprep.subr.bf16.mxu0 0
        %2158 = vmatpush1.bf16.xpose.msra.mxu0 0
        %2159 = vmatprep.subr.bf16.mxu0 0
        %2160 = vmatpush1.bf16.xpose.msra.mxu0 0
        %2161 = vmatprep.subr.bf16.mxu0 0
        %2162 = vmatpush1.bf16.xpose.msra.mxu0 0
        %2163 = vmatprep.subr.bf16.mxu0 0
        %2164 = vmatpush1.bf16.xpose.msra.mxu0 0
        %2165 = vmatprep.subr.bf16.mxu0 0
        %2166 = vmatpush1.bf16.xpose.msra.mxu0 0
        %2167 = vmatprep.subr.bf16.mxu0 0
        %2168 = vmatpush1.bf16.xpose.msra.mxu0 0
        %2169 = vmatprep.mubr.bf16.mxu0 0
        %2170 = vmatmul.mubr.bf16.gmra.mrb[0].mxu0 %v2132
        %v2171 = vpop.f32.mrb[0].mxu0
        %v2172 = vadd.f32 %v2125, %v2171
        %v2173 = vpop.f32.mrb[0].mxu0
        %v2174 = vpop.f32.mrb[0].mxu0
        %v2175 = vadd.f32 %v2126, %v2174
        %v2176 = vpop.f32.mrb[0].mxu0
        %2177 = vdwg.mxu0
        %v2178 = vsel %vm1433, %v2172, -inf
        %2179 = vmax.xlane.f32.xlu0 %v2178
        %v2180 = vpop.xlane.xlu0 %2179
        %v2181 = vsel %vm1433, %v2175, -inf
        %2182 = vmax.xlane.f32.xlu0 %v2181
        %v2183 = vpop.xlane.xlu0 %2182
        %v2184 = vsub.f32 %v2172, %v2180
        %v2185 = vsub.f32 %v2175, %v2183
        %v2186 = vmul.f32 %v2184, 1.442695
        %v2187 = vpow.pop %v2186
        %v2188 = vmul.f32 %v2185, 1.442695
        %v2189 = vpow.pop %v2188
        %v2190 = vsel %vm1433, %v2187, 0.0
        %2191 = vadd.xlane.f32.xlu0 %v2190
        %v2192 = vpop.xlane.xlu0 %2191
        %v2193 = vsel %vm1433, %v2189, 0.0
        %2194 = vadd.xlane.f32.xlu0 %v2193
        %v2195 = vpop.xlane.xlu0 %2194
        %v2196 = vrcp.pop %v2192
        %v2197 = vrcp.pop %v2195
        %v2198 = vmul.f32 %v2187, %v2196
        %v2199 = vmul.f32 %v2189, %v2197
        %v2200 = vpack.c.bf16 %v2199, %v2198
        %2201 = vrot.lane.b32.xlu0 %v1382, 80
        %v2202 = vpop.permute.xlu0 %2201
        %v2205 = vsel %vm1433, %v2200, 0
        %2207 = vmatprep.subr.bf16.mxu0 0
        %2208 = vmatpush1.bf16.msra.mxu0 %v2202
        %2209 = vmatprep.subr.bf16.mxu0 0
        %2210 = vmatpush1.bf16.msra.mxu0 0
        %2211 = vmatprep.subr.bf16.mxu0 0
        %2212 = vmatpush1.bf16.msra.mxu0 0
        %2213 = vmatprep.subr.bf16.mxu0 0
        %2214 = vmatpush1.bf16.msra.mxu0 0
        %2215 = vmatprep.subr.bf16.mxu0 0
        %2216 = vmatpush1.bf16.msra.mxu0 0
        %2217 = vmatprep.subr.bf16.mxu0 0
        %2218 = vmatpush1.bf16.msra.mxu0 0
        %2219 = vmatprep.subr.bf16.mxu0 0
        %2220 = vmatpush1.bf16.msra.mxu0 0
        %2221 = vmatprep.subr.bf16.mxu0 0
        %2222 = vmatpush1.bf16.msra.mxu0 0
        %2223 = vmatprep.subr.bf16.mxu0 0
        %2224 = vmatpush1.bf16.msra.mxu0 0
        %2225 = vmatprep.subr.bf16.mxu0 0
        %2226 = vmatpush1.bf16.msra.mxu0 0
        %2227 = vmatprep.subr.bf16.mxu0 0
        %2228 = vmatpush1.bf16.msra.mxu0 0
        %2229 = vmatprep.subr.bf16.mxu0 0
        %2230 = vmatpush1.bf16.msra.mxu0 0
        %2231 = vmatprep.subr.bf16.mxu0 0
        %2232 = vmatpush1.bf16.msra.mxu0 0
        %2233 = vmatprep.subr.bf16.mxu0 0
        %2234 = vmatpush1.bf16.msra.mxu0 0
        %2235 = vmatprep.subr.bf16.mxu0 0
        %2236 = vmatpush1.bf16.msra.mxu0 0
        %2237 = vmatprep.subr.bf16.mxu0 0
        %2238 = vmatpush1.bf16.msra.mxu0 0
        %2239 = vmatprep.mubr.bf16.mxu0 0
        %2240 = vmatmul.mubr.bf16.gmra.mrb[0].mxu0 %v2205
        %v2241 = vpop.f32.mrb[0].mxu0
        %v2242 = vadd.f32 0.0, %v2241
        %v2243 = vpop.f32.mrb[0].mxu0
        %v2244 = vpop.f32.mrb[0].mxu0
        %v2245 = vadd.f32 0.0, %v2244
        %v2246 = vpop.f32.mrb[0].mxu0
        %2247 = vdwg.mxu0
        %s2248 = scalar_lea.vmem %s731, 112 [#allocation6]
        %v2249 = vld [vmem:[%s2248] sm:$0xff]
        %v2250 = vld [vmem:[%s2248 + $0x8] sm:$0xff]
        %2251 = vrot.lane.b32.xlu0 %v1380, 72
        %v2252 = vpop.permute.xlu0 %2251
        %2253 = vrot.lane.b32.xlu0 %v1381, 72
        %v2254 = vpop.permute.xlu0 %2253
        %v2256 = vsel %vm1385, %v2252, 0
        %v2259 = vsel %vm1385, %v2254, 0
        %2261 = vmatprep.subr.bf16.mxu0 0
        %2262 = vmatpush1.bf16.xpose.msra.mxu0 %v2259
        %2263 = vmatprep.subr.bf16.mxu0 0
        %2264 = vmatpush1.bf16.xpose.msra.mxu0 0
        %2265 = vmatprep.subr.bf16.mxu0 0
        %2266 = vmatpush1.bf16.xpose.msra.mxu0 0
        %2267 = vmatprep.subr.bf16.mxu0 0
        %2268 = vmatpush1.bf16.xpose.msra.mxu0 0
        %2269 = vmatprep.subr.bf16.mxu0 0
        %2270 = vmatpush1.bf16.xpose.msra.mxu0 0
        %2271 = vmatprep.subr.bf16.mxu0 0
        %2272 = vmatpush1.bf16.xpose.msra.mxu0 0
        %2273 = vmatprep.subr.bf16.mxu0 0
        %2274 = vmatpush1.bf16.xpose.msra.mxu0 0
        %2275 = vmatprep.subr.bf16.mxu0 0
        %2276 = vmatpush1.bf16.xpose.msra.mxu0 0
        %2277 = vmatprep.subr.bf16.mxu0 0
        %2278 = vmatpush1.bf16.xpose.msra.mxu0 0
        %2279 = vmatprep.subr.bf16.mxu0 0
        %2280 = vmatpush1.bf16.xpose.msra.mxu0 0
        %2281 = vmatprep.subr.bf16.mxu0 0
        %2282 = vmatpush1.bf16.xpose.msra.mxu0 0
        %2283 = vmatprep.subr.bf16.mxu0 0
        %2284 = vmatpush1.bf16.xpose.msra.mxu0 0
        %2285 = vmatprep.subr.bf16.mxu0 0
        %2286 = vmatpush1.bf16.xpose.msra.mxu0 0
        %2287 = vmatprep.subr.bf16.mxu0 0
        %2288 = vmatpush1.bf16.xpose.msra.mxu0 0
        %2289 = vmatprep.subr.bf16.mxu0 0
        %2290 = vmatpush1.bf16.xpose.msra.mxu0 0
        %2291 = vmatprep.subr.bf16.mxu0 0
        %2292 = vmatpush1.bf16.xpose.msra.mxu0 0
        %2293 = vmatprep.mubr.bf16.mxu0 0
        %2294 = vmatmul.mubr.bf16.gmra.mrb[0].mxu0 %v2256
        %v2295 = vpop.f32.mrb[0].mxu0
        %v2296 = vadd.f32 %v2249, %v2295
        %v2297 = vpop.f32.mrb[0].mxu0
        %v2298 = vpop.f32.mrb[0].mxu0
        %v2299 = vadd.f32 %v2250, %v2298
        %v2300 = vpop.f32.mrb[0].mxu0
        %2301 = vdwg.mxu0
        %v2302 = vsel %vm1433, %v2296, -inf
        %2303 = vmax.xlane.f32.xlu0 %v2302
        %v2304 = vpop.xlane.xlu0 %2303
        %v2305 = vsel %vm1433, %v2299, -inf
        %2306 = vmax.xlane.f32.xlu0 %v2305
        %v2307 = vpop.xlane.xlu0 %2306
        %v2308 = vsub.f32 %v2296, %v2304
        %v2309 = vsub.f32 %v2299, %v2307
        %v2310 = vmul.f32 %v2308, 1.442695
        %v2311 = vpow.pop %v2310
        %v2312 = vmul.f32 %v2309, 1.442695
        %v2313 = vpow.pop %v2312
        %v2314 = vsel %vm1433, %v2311, 0.0
        %2315 = vadd.xlane.f32.xlu0 %v2314
        %v2316 = vpop.xlane.xlu0 %2315
        %v2317 = vsel %vm1433, %v2313, 0.0
        %2318 = vadd.xlane.f32.xlu0 %v2317
        %v2319 = vpop.xlane.xlu0 %2318
        %v2320 = vrcp.pop %v2316
        %v2321 = vrcp.pop %v2319
        %v2322 = vmul.f32 %v2311, %v2320
        %v2323 = vmul.f32 %v2313, %v2321
        %v2324 = vpack.c.bf16 %v2323, %v2322
        %2325 = vrot.lane.b32.xlu0 %v1382, 72
        %v2326 = vpop.permute.xlu0 %2325
        %v2329 = vsel %vm1433, %v2324, 0
        %2331 = vmatprep.subr.bf16.mxu0 0
        %2332 = vmatpush1.bf16.msra.mxu0 %v2326
        %2333 = vmatprep.subr.bf16.mxu0 0
        %2334 = vmatpush1.bf16.msra.mxu0 0
        %2335 = vmatprep.subr.bf16.mxu0 0
        %2336 = vmatpush1.bf16.msra.mxu0 0
        %2337 = vmatprep.subr.bf16.mxu0 0
        %2338 = vmatpush1.bf16.msra.mxu0 0
        %2339 = vmatprep.subr.bf16.mxu0 0
        %2340 = vmatpush1.bf16.msra.mxu0 0
        %2341 = vmatprep.subr.bf16.mxu0 0
        %2342 = vmatpush1.bf16.msra.mxu0 0
        %2343 = vmatprep.subr.bf16.mxu0 0
        %2344 = vmatpush1.bf16.msra.mxu0 0
        %2345 = vmatprep.subr.bf16.mxu0 0
        %2346 = vmatpush1.bf16.msra.mxu0 0
        %2347 = vmatprep.subr.bf16.mxu0 0
        %2348 = vmatpush1.bf16.msra.mxu0 0
        %2349 = vmatprep.subr.bf16.mxu0 0
        %2350 = vmatpush1.bf16.msra.mxu0 0
        %2351 = vmatprep.subr.bf16.mxu0 0
        %2352 = vmatpush1.bf16.msra.mxu0 0
        %2353 = vmatprep.subr.bf16.mxu0 0
        %2354 = vmatpush1.bf16.msra.mxu0 0
        %2355 = vmatprep.subr.bf16.mxu0 0
        %2356 = vmatpush1.bf16.msra.mxu0 0
        %2357 = vmatprep.subr.bf16.mxu0 0
        %2358 = vmatpush1.bf16.msra.mxu0 0
        %2359 = vmatprep.subr.bf16.mxu0 0
        %2360 = vmatpush1.bf16.msra.mxu0 0
        %2361 = vmatprep.subr.bf16.mxu0 0
        %2362 = vmatpush1.bf16.msra.mxu0 0
        %2363 = vmatprep.mubr.bf16.mxu0 0
        %2364 = vmatmul.mubr.bf16.gmra.mrb[0].mxu0 %v2329
        %v2365 = vpop.f32.mrb[0].mxu0
        %v2366 = vadd.f32 0.0, %v2365
        %v2367 = vpop.f32.mrb[0].mxu0
        %v2368 = vpop.f32.mrb[0].mxu0
        %v2369 = vadd.f32 0.0, %v2368
        %v2370 = vpop.f32.mrb[0].mxu0
        %2371 = vdwg.mxu0
        %s2372 = scalar_lea.vmem %s731, 128 [#allocation6]
        %v2373 = vld [vmem:[%s2372] sm:$0xff]
        %v2374 = vld [vmem:[%s2372 + $0x8] sm:$0xff]
        %2375 = vrot.lane.b32.xlu0 %v1380, 64
        %v2376 = vpop.permute.xlu0 %2375
        %2377 = vrot.lane.b32.xlu0 %v1381, 64
        %v2378 = vpop.permute.xlu0 %2377
        %v2380 = vsel %vm1385, %v2376, 0
        %v2383 = vsel %vm1385, %v2378, 0
        %2385 = vmatprep.subr.bf16.mxu0 0
        %2386 = vmatpush1.bf16.xpose.msra.mxu0 %v2383
        %2387 = vmatprep.subr.bf16.mxu0 0
        %2388 = vmatpush1.bf16.xpose.msra.mxu0 0
        %2389 = vmatprep.subr.bf16.mxu0 0
        %2390 = vmatpush1.bf16.xpose.msra.mxu0 0
        %2391 = vmatprep.subr.bf16.mxu0 0
        %2392 = vmatpush1.bf16.xpose.msra.mxu0 0
        %2393 = vmatprep.subr.bf16.mxu0 0
        %2394 = vmatpush1.bf16.xpose.msra.mxu0 0
        %2395 = vmatprep.subr.bf16.mxu0 0
        %2396 = vmatpush1.bf16.xpose.msra.mxu0 0
        %2397 = vmatprep.subr.bf16.mxu0 0
        %2398 = vmatpush1.bf16.xpose.msra.mxu0 0
        %2399 = vmatprep.subr.bf16.mxu0 0
        %2400 = vmatpush1.bf16.xpose.msra.mxu0 0
        %2401 = vmatprep.subr.bf16.mxu0 0
        %2402 = vmatpush1.bf16.xpose.msra.mxu0 0
        %2403 = vmatprep.subr.bf16.mxu0 0
        %2404 = vmatpush1.bf16.xpose.msra.mxu0 0
        %2405 = vmatprep.subr.bf16.mxu0 0
        %2406 = vmatpush1.bf16.xpose.msra.mxu0 0
        %2407 = vmatprep.subr.bf16.mxu0 0
        %2408 = vmatpush1.bf16.xpose.msra.mxu0 0
        %2409 = vmatprep.subr.bf16.mxu0 0
        %2410 = vmatpush1.bf16.xpose.msra.mxu0 0
        %2411 = vmatprep.subr.bf16.mxu0 0
        %2412 = vmatpush1.bf16.xpose.msra.mxu0 0
        %2413 = vmatprep.subr.bf16.mxu0 0
        %2414 = vmatpush1.bf16.xpose.msra.mxu0 0
        %2415 = vmatprep.subr.bf16.mxu0 0
        %2416 = vmatpush1.bf16.xpose.msra.mxu0 0
        %2417 = vmatprep.mubr.bf16.mxu0 0
        %2418 = vmatmul.mubr.bf16.gmra.mrb[0].mxu0 %v2380
        %v2419 = vpop.f32.mrb[0].mxu0
        %v2420 = vadd.f32 %v2373, %v2419
        %v2421 = vpop.f32.mrb[0].mxu0
        %v2422 = vpop.f32.mrb[0].mxu0
        %v2423 = vadd.f32 %v2374, %v2422
        %v2424 = vpop.f32.mrb[0].mxu0
        %2425 = vdwg.mxu0
        %v2426 = vsel %vm1433, %v2420, -inf
        %2427 = vmax.xlane.f32.xlu0 %v2426
        %v2428 = vpop.xlane.xlu0 %2427
        %v2429 = vsel %vm1433, %v2423, -inf
        %2430 = vmax.xlane.f32.xlu0 %v2429
        %v2431 = vpop.xlane.xlu0 %2430
        %v2432 = vsub.f32 %v2420, %v2428
        %v2433 = vsub.f32 %v2423, %v2431
        %v2434 = vmul.f32 %v2432, 1.442695
        %v2435 = vpow.pop %v2434
        %v2436 = vmul.f32 %v2433, 1.442695
        %v2437 = vpow.pop %v2436
        %v2438 = vsel %vm1433, %v2435, 0.0
        %2439 = vadd.xlane.f32.xlu0 %v2438
        %v2440 = vpop.xlane.xlu0 %2439
        %v2441 = vsel %vm1433, %v2437, 0.0
        %2442 = vadd.xlane.f32.xlu0 %v2441
        %v2443 = vpop.xlane.xlu0 %2442
        %v2444 = vrcp.pop %v2440
        %v2445 = vrcp.pop %v2443
        %v2446 = vmul.f32 %v2435, %v2444
        %v2447 = vmul.f32 %v2437, %v2445
        %v2448 = vpack.c.bf16 %v2447, %v2446
        %2449 = vrot.lane.b32.xlu0 %v1382, 64
        %v2450 = vpop.permute.xlu0 %2449
        %v2453 = vsel %vm1433, %v2448, 0
        %2455 = vmatprep.subr.bf16.mxu0 0
        %2456 = vmatpush1.bf16.msra.mxu0 %v2450
        %2457 = vmatprep.subr.bf16.mxu0 0
        %2458 = vmatpush1.bf16.msra.mxu0 0
        %2459 = vmatprep.subr.bf16.mxu0 0
        %2460 = vmatpush1.bf16.msra.mxu0 0
        %2461 = vmatprep.subr.bf16.mxu0 0
        %2462 = vmatpush1.bf16.msra.mxu0 0
        %2463 = vmatprep.subr.bf16.mxu0 0
        %2464 = vmatpush1.bf16.msra.mxu0 0
        %2465 = vmatprep.subr.bf16.mxu0 0
        %2466 = vmatpush1.bf16.msra.mxu0 0
        %2467 = vmatprep.subr.bf16.mxu0 0
        %2468 = vmatpush1.bf16.msra.mxu0 0
        %2469 = vmatprep.subr.bf16.mxu0 0
        %2470 = vmatpush1.bf16.msra.mxu0 0
        %2471 = vmatprep.subr.bf16.mxu0 0
        %2472 = vmatpush1.bf16.msra.mxu0 0
        %2473 = vmatprep.subr.bf16.mxu0 0
        %2474 = vmatpush1.bf16.msra.mxu0 0
        %2475 = vmatprep.subr.bf16.mxu0 0
        %2476 = vmatpush1.bf16.msra.mxu0 0
        %2477 = vmatprep.subr.bf16.mxu0 0
        %2478 = vmatpush1.bf16.msra.mxu0 0
        %2479 = vmatprep.subr.bf16.mxu0 0
        %2480 = vmatpush1.bf16.msra.mxu0 0
        %2481 = vmatprep.subr.bf16.mxu0 0
        %2482 = vmatpush1.bf16.msra.mxu0 0
        %2483 = vmatprep.subr.bf16.mxu0 0
        %2484 = vmatpush1.bf16.msra.mxu0 0
        %2485 = vmatprep.subr.bf16.mxu0 0
        %2486 = vmatpush1.bf16.msra.mxu0 0
        %2487 = vmatprep.mubr.bf16.mxu0 0
        %2488 = vmatmul.mubr.bf16.gmra.mrb[0].mxu0 %v2453
        %v2489 = vpop.f32.mrb[0].mxu0
        %v2490 = vadd.f32 0.0, %v2489
        %v2491 = vpop.f32.mrb[0].mxu0
        %v2492 = vpop.f32.mrb[0].mxu0
        %v2493 = vadd.f32 0.0, %v2492
        %v2494 = vpop.f32.mrb[0].mxu0
        %2495 = vdwg.mxu0
        %s2496 = scalar_lea.vmem %s731, 144 [#allocation6]
        %v2497 = vld [vmem:[%s2496] sm:$0xff]
        %v2498 = vld [vmem:[%s2496 + $0x8] sm:$0xff]
        %2499 = vrot.lane.b32.xlu0 %v1380, 56
        %v2500 = vpop.permute.xlu0 %2499
        %2501 = vrot.lane.b32.xlu0 %v1381, 56
        %v2502 = vpop.permute.xlu0 %2501
        %v2504 = vsel %vm1385, %v2500, 0
        %v2507 = vsel %vm1385, %v2502, 0
        %2509 = vmatprep.subr.bf16.mxu0 0
        %2510 = vmatpush1.bf16.xpose.msra.mxu0 %v2507
        %2511 = vmatprep.subr.bf16.mxu0 0
        %2512 = vmatpush1.bf16.xpose.msra.mxu0 0
        %2513 = vmatprep.subr.bf16.mxu0 0
        %2514 = vmatpush1.bf16.xpose.msra.mxu0 0
        %2515 = vmatprep.subr.bf16.mxu0 0
        %2516 = vmatpush1.bf16.xpose.msra.mxu0 0
        %2517 = vmatprep.subr.bf16.mxu0 0
        %2518 = vmatpush1.bf16.xpose.msra.mxu0 0
        %2519 = vmatprep.subr.bf16.mxu0 0
        %2520 = vmatpush1.bf16.xpose.msra.mxu0 0
        %2521 = vmatprep.subr.bf16.mxu0 0
        %2522 = vmatpush1.bf16.xpose.msra.mxu0 0
        %2523 = vmatprep.subr.bf16.mxu0 0
        %2524 = vmatpush1.bf16.xpose.msra.mxu0 0
        %2525 = vmatprep.subr.bf16.mxu0 0
        %2526 = vmatpush1.bf16.xpose.msra.mxu0 0
        %2527 = vmatprep.subr.bf16.mxu0 0
        %2528 = vmatpush1.bf16.xpose.msra.mxu0 0
        %2529 = vmatprep.subr.bf16.mxu0 0
        %2530 = vmatpush1.bf16.xpose.msra.mxu0 0
        %2531 = vmatprep.subr.bf16.mxu0 0
        %2532 = vmatpush1.bf16.xpose.msra.mxu0 0
        %2533 = vmatprep.subr.bf16.mxu0 0
        %2534 = vmatpush1.bf16.xpose.msra.mxu0 0
        %2535 = vmatprep.subr.bf16.mxu0 0
        %2536 = vmatpush1.bf16.xpose.msra.mxu0 0
        %2537 = vmatprep.subr.bf16.mxu0 0
        %2538 = vmatpush1.bf16.xpose.msra.mxu0 0
        %2539 = vmatprep.subr.bf16.mxu0 0
        %2540 = vmatpush1.bf16.xpose.msra.mxu0 0
        %2541 = vmatprep.mubr.bf16.mxu0 0
        %2542 = vmatmul.mubr.bf16.gmra.mrb[0].mxu0 %v2504
        %v2543 = vpop.f32.mrb[0].mxu0
        %v2544 = vadd.f32 %v2497, %v2543
        %v2545 = vpop.f32.mrb[0].mxu0
        %v2546 = vpop.f32.mrb[0].mxu0
        %v2547 = vadd.f32 %v2498, %v2546
        %v2548 = vpop.f32.mrb[0].mxu0
        %2549 = vdwg.mxu0
        %v2550 = vsel %vm1433, %v2544, -inf
        %2551 = vmax.xlane.f32.xlu0 %v2550
        %v2552 = vpop.xlane.xlu0 %2551
        %v2553 = vsel %vm1433, %v2547, -inf
        %2554 = vmax.xlane.f32.xlu0 %v2553
        %v2555 = vpop.xlane.xlu0 %2554
        %v2556 = vsub.f32 %v2544, %v2552
        %v2557 = vsub.f32 %v2547, %v2555
        %v2558 = vmul.f32 %v2556, 1.442695
        %v2559 = vpow.pop %v2558
        %v2560 = vmul.f32 %v2557, 1.442695
        %v2561 = vpow.pop %v2560
        %v2562 = vsel %vm1433, %v2559, 0.0
        %2563 = vadd.xlane.f32.xlu0 %v2562
        %v2564 = vpop.xlane.xlu0 %2563
        %v2565 = vsel %vm1433, %v2561, 0.0
        %2566 = vadd.xlane.f32.xlu0 %v2565
        %v2567 = vpop.xlane.xlu0 %2566
        %v2568 = vrcp.pop %v2564
        %v2569 = vrcp.pop %v2567
        %v2570 = vmul.f32 %v2559, %v2568
        %v2571 = vmul.f32 %v2561, %v2569
        %v2572 = vpack.c.bf16 %v2571, %v2570
        %2573 = vrot.lane.b32.xlu0 %v1382, 56
        %v2574 = vpop.permute.xlu0 %2573
        %v2577 = vsel %vm1433, %v2572, 0
        %2579 = vmatprep.subr.bf16.mxu0 0
        %2580 = vmatpush1.bf16.msra.mxu0 %v2574
        %2581 = vmatprep.subr.bf16.mxu0 0
        %2582 = vmatpush1.bf16.msra.mxu0 0
        %2583 = vmatprep.subr.bf16.mxu0 0
        %2584 = vmatpush1.bf16.msra.mxu0 0
        %2585 = vmatprep.subr.bf16.mxu0 0
        %2586 = vmatpush1.bf16.msra.mxu0 0
        %2587 = vmatprep.subr.bf16.mxu0 0
        %2588 = vmatpush1.bf16.msra.mxu0 0
        %2589 = vmatprep.subr.bf16.mxu0 0
        %2590 = vmatpush1.bf16.msra.mxu0 0
        %2591 = vmatprep.subr.bf16.mxu0 0
        %2592 = vmatpush1.bf16.msra.mxu0 0
        %2593 = vmatprep.subr.bf16.mxu0 0
        %2594 = vmatpush1.bf16.msra.mxu0 0
        %2595 = vmatprep.subr.bf16.mxu0 0
        %2596 = vmatpush1.bf16.msra.mxu0 0
        %2597 = vmatprep.subr.bf16.mxu0 0
        %2598 = vmatpush1.bf16.msra.mxu0 0
        %2599 = vmatprep.subr.bf16.mxu0 0
        %2600 = vmatpush1.bf16.msra.mxu0 0
        %2601 = vmatprep.subr.bf16.mxu0 0
        %2602 = vmatpush1.bf16.msra.mxu0 0
        %2603 = vmatprep.subr.bf16.mxu0 0
        %2604 = vmatpush1.bf16.msra.mxu0 0
        %2605 = vmatprep.subr.bf16.mxu0 0
        %2606 = vmatpush1.bf16.msra.mxu0 0
        %2607 = vmatprep.subr.bf16.mxu0 0
        %2608 = vmatpush1.bf16.msra.mxu0 0
        %2609 = vmatprep.subr.bf16.mxu0 0
        %2610 = vmatpush1.bf16.msra.mxu0 0
        %2611 = vmatprep.mubr.bf16.mxu0 0
        %2612 = vmatmul.mubr.bf16.gmra.mrb[0].mxu0 %v2577
        %v2613 = vpop.f32.mrb[0].mxu0
        %v2614 = vadd.f32 0.0, %v2613
        %v2615 = vpop.f32.mrb[0].mxu0
        %v2616 = vpop.f32.mrb[0].mxu0
        %v2617 = vadd.f32 0.0, %v2616
        %v2618 = vpop.f32.mrb[0].mxu0
        %2619 = vdwg.mxu0
        %s2620 = scalar_lea.vmem %s731, 160 [#allocation6]
        %v2621 = vld [vmem:[%s2620] sm:$0xff]
        %v2622 = vld [vmem:[%s2620 + $0x8] sm:$0xff]
        %2623 = vrot.lane.b32.xlu0 %v1380, 48
        %v2624 = vpop.permute.xlu0 %2623
        %2625 = vrot.lane.b32.xlu0 %v1381, 48
        %v2626 = vpop.permute.xlu0 %2625
        %v2628 = vsel %vm1385, %v2624, 0
        %v2631 = vsel %vm1385, %v2626, 0
        %2633 = vmatprep.subr.bf16.mxu0 0
        %2634 = vmatpush1.bf16.xpose.msra.mxu0 %v2631
        %2635 = vmatprep.subr.bf16.mxu0 0
        %2636 = vmatpush1.bf16.xpose.msra.mxu0 0
        %2637 = vmatprep.subr.bf16.mxu0 0
        %2638 = vmatpush1.bf16.xpose.msra.mxu0 0
        %2639 = vmatprep.subr.bf16.mxu0 0
        %2640 = vmatpush1.bf16.xpose.msra.mxu0 0
        %2641 = vmatprep.subr.bf16.mxu0 0
        %2642 = vmatpush1.bf16.xpose.msra.mxu0 0
        %2643 = vmatprep.subr.bf16.mxu0 0
        %2644 = vmatpush1.bf16.xpose.msra.mxu0 0
        %2645 = vmatprep.subr.bf16.mxu0 0
        %2646 = vmatpush1.bf16.xpose.msra.mxu0 0
        %2647 = vmatprep.subr.bf16.mxu0 0
        %2648 = vmatpush1.bf16.xpose.msra.mxu0 0
        %2649 = vmatprep.subr.bf16.mxu0 0
        %2650 = vmatpush1.bf16.xpose.msra.mxu0 0
        %2651 = vmatprep.subr.bf16.mxu0 0
        %2652 = vmatpush1.bf16.xpose.msra.mxu0 0
        %2653 = vmatprep.subr.bf16.mxu0 0
        %2654 = vmatpush1.bf16.xpose.msra.mxu0 0
        %2655 = vmatprep.subr.bf16.mxu0 0
        %2656 = vmatpush1.bf16.xpose.msra.mxu0 0
        %2657 = vmatprep.subr.bf16.mxu0 0
        %2658 = vmatpush1.bf16.xpose.msra.mxu0 0
        %2659 = vmatprep.subr.bf16.mxu0 0
        %2660 = vmatpush1.bf16.xpose.msra.mxu0 0
        %2661 = vmatprep.subr.bf16.mxu0 0
        %2662 = vmatpush1.bf16.xpose.msra.mxu0 0
        %2663 = vmatprep.subr.bf16.mxu0 0
        %2664 = vmatpush1.bf16.xpose.msra.mxu0 0
        %2665 = vmatprep.mubr.bf16.mxu0 0
        %2666 = vmatmul.mubr.bf16.gmra.mrb[0].mxu0 %v2628
        %v2667 = vpop.f32.mrb[0].mxu0
        %v2668 = vadd.f32 %v2621, %v2667
        %v2669 = vpop.f32.mrb[0].mxu0
        %v2670 = vpop.f32.mrb[0].mxu0
        %v2671 = vadd.f32 %v2622, %v2670
        %v2672 = vpop.f32.mrb[0].mxu0
        %2673 = vdwg.mxu0
        %v2674 = vsel %vm1433, %v2668, -inf
        %2675 = vmax.xlane.f32.xlu0 %v2674
        %v2676 = vpop.xlane.xlu0 %2675
        %v2677 = vsel %vm1433, %v2671, -inf
        %2678 = vmax.xlane.f32.xlu0 %v2677
        %v2679 = vpop.xlane.xlu0 %2678
        %v2680 = vsub.f32 %v2668, %v2676
        %v2681 = vsub.f32 %v2671, %v2679
        %v2682 = vmul.f32 %v2680, 1.442695
        %v2683 = vpow.pop %v2682
        %v2684 = vmul.f32 %v2681, 1.442695
        %v2685 = vpow.pop %v2684
        %v2686 = vsel %vm1433, %v2683, 0.0
        %2687 = vadd.xlane.f32.xlu0 %v2686
        %v2688 = vpop.xlane.xlu0 %2687
        %v2689 = vsel %vm1433, %v2685, 0.0
        %2690 = vadd.xlane.f32.xlu0 %v2689
        %v2691 = vpop.xlane.xlu0 %2690
        %v2692 = vrcp.pop %v2688
        %v2693 = vrcp.pop %v2691
        %v2694 = vmul.f32 %v2683, %v2692
        %v2695 = vmul.f32 %v2685, %v2693
        %v2696 = vpack.c.bf16 %v2695, %v2694
        %2697 = vrot.lane.b32.xlu0 %v1382, 48
        %v2698 = vpop.permute.xlu0 %2697
        %v2701 = vsel %vm1433, %v2696, 0
        %2703 = vmatprep.subr.bf16.mxu0 0
        %2704 = vmatpush1.bf16.msra.mxu0 %v2698
        %2705 = vmatprep.subr.bf16.mxu0 0
        %2706 = vmatpush1.bf16.msra.mxu0 0
        %2707 = vmatprep.subr.bf16.mxu0 0
        %2708 = vmatpush1.bf16.msra.mxu0 0
        %2709 = vmatprep.subr.bf16.mxu0 0
        %2710 = vmatpush1.bf16.msra.mxu0 0
        %2711 = vmatprep.subr.bf16.mxu0 0
        %2712 = vmatpush1.bf16.msra.mxu0 0
        %2713 = vmatprep.subr.bf16.mxu0 0
        %2714 = vmatpush1.bf16.msra.mxu0 0
        %2715 = vmatprep.subr.bf16.mxu0 0
        %2716 = vmatpush1.bf16.msra.mxu0 0
        %2717 = vmatprep.subr.bf16.mxu0 0
        %2718 = vmatpush1.bf16.msra.mxu0 0
        %2719 = vmatprep.subr.bf16.mxu0 0
        %2720 = vmatpush1.bf16.msra.mxu0 0
        %2721 = vmatprep.subr.bf16.mxu0 0
        %2722 = vmatpush1.bf16.msra.mxu0 0
        %2723 = vmatprep.subr.bf16.mxu0 0
        %2724 = vmatpush1.bf16.msra.mxu0 0
        %2725 = vmatprep.subr.bf16.mxu0 0
        %2726 = vmatpush1.bf16.msra.mxu0 0
        %2727 = vmatprep.subr.bf16.mxu0 0
        %2728 = vmatpush1.bf16.msra.mxu0 0
        %2729 = vmatprep.subr.bf16.mxu0 0
        %2730 = vmatpush1.bf16.msra.mxu0 0
        %2731 = vmatprep.subr.bf16.mxu0 0
        %2732 = vmatpush1.bf16.msra.mxu0 0
        %2733 = vmatprep.subr.bf16.mxu0 0
        %2734 = vmatpush1.bf16.msra.mxu0 0
        %2735 = vmatprep.mubr.bf16.mxu0 0
        %2736 = vmatmul.mubr.bf16.gmra.mrb[0].mxu0 %v2701
        %v2737 = vpop.f32.mrb[0].mxu0
        %v2738 = vadd.f32 0.0, %v2737
        %v2739 = vpop.f32.mrb[0].mxu0
        %v2740 = vpop.f32.mrb[0].mxu0
        %v2741 = vadd.f32 0.0, %v2740
        %v2742 = vpop.f32.mrb[0].mxu0
        %2743 = vdwg.mxu0
        %s2744 = scalar_lea.vmem %s731, 176 [#allocation6]
        %v2745 = vld [vmem:[%s2744] sm:$0xff]
        %v2746 = vld [vmem:[%s2744 + $0x8] sm:$0xff]
        %2747 = vrot.lane.b32.xlu0 %v1380, 40
        %v2748 = vpop.permute.xlu0 %2747
        %2749 = vrot.lane.b32.xlu0 %v1381, 40
        %v2750 = vpop.permute.xlu0 %2749
        %v2752 = vsel %vm1385, %v2748, 0
        %v2755 = vsel %vm1385, %v2750, 0
        %2757 = vmatprep.subr.bf16.mxu0 0
        %2758 = vmatpush1.bf16.xpose.msra.mxu0 %v2755
        %2759 = vmatprep.subr.bf16.mxu0 0
        %2760 = vmatpush1.bf16.xpose.msra.mxu0 0
        %2761 = vmatprep.subr.bf16.mxu0 0
        %2762 = vmatpush1.bf16.xpose.msra.mxu0 0
        %2763 = vmatprep.subr.bf16.mxu0 0
        %2764 = vmatpush1.bf16.xpose.msra.mxu0 0
        %2765 = vmatprep.subr.bf16.mxu0 0
        %2766 = vmatpush1.bf16.xpose.msra.mxu0 0
        %2767 = vmatprep.subr.bf16.mxu0 0
        %2768 = vmatpush1.bf16.xpose.msra.mxu0 0
        %2769 = vmatprep.subr.bf16.mxu0 0
        %2770 = vmatpush1.bf16.xpose.msra.mxu0 0
        %2771 = vmatprep.subr.bf16.mxu0 0
        %2772 = vmatpush1.bf16.xpose.msra.mxu0 0
        %2773 = vmatprep.subr.bf16.mxu0 0
        %2774 = vmatpush1.bf16.xpose.msra.mxu0 0
        %2775 = vmatprep.subr.bf16.mxu0 0
        %2776 = vmatpush1.bf16.xpose.msra.mxu0 0
        %2777 = vmatprep.subr.bf16.mxu0 0
        %2778 = vmatpush1.bf16.xpose.msra.mxu0 0
        %2779 = vmatprep.subr.bf16.mxu0 0
        %2780 = vmatpush1.bf16.xpose.msra.mxu0 0
        %2781 = vmatprep.subr.bf16.mxu0 0
        %2782 = vmatpush1.bf16.xpose.msra.mxu0 0
        %2783 = vmatprep.subr.bf16.mxu0 0
        %2784 = vmatpush1.bf16.xpose.msra.mxu0 0
        %2785 = vmatprep.subr.bf16.mxu0 0
        %2786 = vmatpush1.bf16.xpose.msra.mxu0 0
        %2787 = vmatprep.subr.bf16.mxu0 0
        %2788 = vmatpush1.bf16.xpose.msra.mxu0 0
        %2789 = vmatprep.mubr.bf16.mxu0 0
        %2790 = vmatmul.mubr.bf16.gmra.mrb[0].mxu0 %v2752
        %v2791 = vpop.f32.mrb[0].mxu0
        %v2792 = vadd.f32 %v2745, %v2791
        %v2793 = vpop.f32.mrb[0].mxu0
        %v2794 = vpop.f32.mrb[0].mxu0
        %v2795 = vadd.f32 %v2746, %v2794
        %v2796 = vpop.f32.mrb[0].mxu0
        %2797 = vdwg.mxu0
        %v2798 = vsel %vm1433, %v2792, -inf
        %2799 = vmax.xlane.f32.xlu0 %v2798
        %v2800 = vpop.xlane.xlu0 %2799
        %v2801 = vsel %vm1433, %v2795, -inf
        %2802 = vmax.xlane.f32.xlu0 %v2801
        %v2803 = vpop.xlane.xlu0 %2802
        %v2804 = vsub.f32 %v2792, %v2800
        %v2805 = vsub.f32 %v2795, %v2803
        %v2806 = vmul.f32 %v2804, 1.442695
        %v2807 = vpow.pop %v2806
        %v2808 = vmul.f32 %v2805, 1.442695
        %v2809 = vpow.pop %v2808
        %v2810 = vsel %vm1433, %v2807, 0.0
        %2811 = vadd.xlane.f32.xlu0 %v2810
        %v2812 = vpop.xlane.xlu0 %2811
        %v2813 = vsel %vm1433, %v2809, 0.0
        %2814 = vadd.xlane.f32.xlu0 %v2813
        %v2815 = vpop.xlane.xlu0 %2814
        %v2816 = vrcp.pop %v2812
        %v2817 = vrcp.pop %v2815
        %v2818 = vmul.f32 %v2807, %v2816
        %v2819 = vmul.f32 %v2809, %v2817
        %v2820 = vpack.c.bf16 %v2819, %v2818
        %2821 = vrot.lane.b32.xlu0 %v1382, 40
        %v2822 = vpop.permute.xlu0 %2821
        %v2825 = vsel %vm1433, %v2820, 0
        %2827 = vmatprep.subr.bf16.mxu0 0
        %2828 = vmatpush1.bf16.msra.mxu0 %v2822
        %2829 = vmatprep.subr.bf16.mxu0 0
        %2830 = vmatpush1.bf16.msra.mxu0 0
        %2831 = vmatprep.subr.bf16.mxu0 0
        %2832 = vmatpush1.bf16.msra.mxu0 0
        %2833 = vmatprep.subr.bf16.mxu0 0
        %2834 = vmatpush1.bf16.msra.mxu0 0
        %2835 = vmatprep.subr.bf16.mxu0 0
        %2836 = vmatpush1.bf16.msra.mxu0 0
        %2837 = vmatprep.subr.bf16.mxu0 0
        %2838 = vmatpush1.bf16.msra.mxu0 0
        %2839 = vmatprep.subr.bf16.mxu0 0
        %2840 = vmatpush1.bf16.msra.mxu0 0
        %2841 = vmatprep.subr.bf16.mxu0 0
        %2842 = vmatpush1.bf16.msra.mxu0 0
        %2843 = vmatprep.subr.bf16.mxu0 0
        %2844 = vmatpush1.bf16.msra.mxu0 0
        %2845 = vmatprep.subr.bf16.mxu0 0
        %2846 = vmatpush1.bf16.msra.mxu0 0
        %2847 = vmatprep.subr.bf16.mxu0 0
        %2848 = vmatpush1.bf16.msra.mxu0 0
        %2849 = vmatprep.subr.bf16.mxu0 0
        %2850 = vmatpush1.bf16.msra.mxu0 0
        %2851 = vmatprep.subr.bf16.mxu0 0
        %2852 = vmatpush1.bf16.msra.mxu0 0
        %2853 = vmatprep.subr.bf16.mxu0 0
        %2854 = vmatpush1.bf16.msra.mxu0 0
        %2855 = vmatprep.subr.bf16.mxu0 0
        %2856 = vmatpush1.bf16.msra.mxu0 0
        %2857 = vmatprep.subr.bf16.mxu0 0
        %2858 = vmatpush1.bf16.msra.mxu0 0
        %2859 = vmatprep.mubr.bf16.mxu0 0
        %2860 = vmatmul.mubr.bf16.gmra.mrb[0].mxu0 %v2825
        %v2861 = vpop.f32.mrb[0].mxu0
        %v2862 = vadd.f32 0.0, %v2861
        %v2863 = vpop.f32.mrb[0].mxu0
        %v2864 = vpop.f32.mrb[0].mxu0
        %v2865 = vadd.f32 0.0, %v2864
        %v2866 = vpop.f32.mrb[0].mxu0
        %2867 = vdwg.mxu0
        %s2868 = scalar_lea.vmem %s731, 192 [#allocation6]
        %v2869 = vld [vmem:[%s2868] sm:$0xff]
        %v2870 = vld [vmem:[%s2868 + $0x8] sm:$0xff]
        %2871 = vrot.lane.b32.xlu0 %v1380, 32
        %v2872 = vpop.permute.xlu0 %2871
        %2873 = vrot.lane.b32.xlu0 %v1381, 32
        %v2874 = vpop.permute.xlu0 %2873
        %v2876 = vsel %vm1385, %v2872, 0
        %v2879 = vsel %vm1385, %v2874, 0
        %2881 = vmatprep.subr.bf16.mxu0 0
        %2882 = vmatpush1.bf16.xpose.msra.mxu0 %v2879
        %2883 = vmatprep.subr.bf16.mxu0 0
        %2884 = vmatpush1.bf16.xpose.msra.mxu0 0
        %2885 = vmatprep.subr.bf16.mxu0 0
        %2886 = vmatpush1.bf16.xpose.msra.mxu0 0
        %2887 = vmatprep.subr.bf16.mxu0 0
        %2888 = vmatpush1.bf16.xpose.msra.mxu0 0
        %2889 = vmatprep.subr.bf16.mxu0 0
        %2890 = vmatpush1.bf16.xpose.msra.mxu0 0
        %2891 = vmatprep.subr.bf16.mxu0 0
        %2892 = vmatpush1.bf16.xpose.msra.mxu0 0
        %2893 = vmatprep.subr.bf16.mxu0 0
        %2894 = vmatpush1.bf16.xpose.msra.mxu0 0
        %2895 = vmatprep.subr.bf16.mxu0 0
        %2896 = vmatpush1.bf16.xpose.msra.mxu0 0
        %2897 = vmatprep.subr.bf16.mxu0 0
        %2898 = vmatpush1.bf16.xpose.msra.mxu0 0
        %2899 = vmatprep.subr.bf16.mxu0 0
        %2900 = vmatpush1.bf16.xpose.msra.mxu0 0
        %2901 = vmatprep.subr.bf16.mxu0 0
        %2902 = vmatpush1.bf16.xpose.msra.mxu0 0
        %2903 = vmatprep.subr.bf16.mxu0 0
        %2904 = vmatpush1.bf16.xpose.msra.mxu0 0
        %2905 = vmatprep.subr.bf16.mxu0 0
        %2906 = vmatpush1.bf16.xpose.msra.mxu0 0
        %2907 = vmatprep.subr.bf16.mxu0 0
        %2908 = vmatpush1.bf16.xpose.msra.mxu0 0
        %2909 = vmatprep.subr.bf16.mxu0 0
        %2910 = vmatpush1.bf16.xpose.msra.mxu0 0
        %2911 = vmatprep.subr.bf16.mxu0 0
        %2912 = vmatpush1.bf16.xpose.msra.mxu0 0
        %2913 = vmatprep.mubr.bf16.mxu0 0
        %2914 = vmatmul.mubr.bf16.gmra.mrb[0].mxu0 %v2876
        %v2915 = vpop.f32.mrb[0].mxu0
        %v2916 = vadd.f32 %v2869, %v2915
        %v2917 = vpop.f32.mrb[0].mxu0
        %v2918 = vpop.f32.mrb[0].mxu0
        %v2919 = vadd.f32 %v2870, %v2918
        %v2920 = vpop.f32.mrb[0].mxu0
        %2921 = vdwg.mxu0
        %v2922 = vsel %vm1433, %v2916, -inf
        %2923 = vmax.xlane.f32.xlu0 %v2922
        %v2924 = vpop.xlane.xlu0 %2923
        %v2925 = vsel %vm1433, %v2919, -inf
        %2926 = vmax.xlane.f32.xlu0 %v2925
        %v2927 = vpop.xlane.xlu0 %2926
        %v2928 = vsub.f32 %v2916, %v2924
        %v2929 = vsub.f32 %v2919, %v2927
        %v2930 = vmul.f32 %v2928, 1.442695
        %v2931 = vpow.pop %v2930
        %v2932 = vmul.f32 %v2929, 1.442695
        %v2933 = vpow.pop %v2932
        %v2934 = vsel %vm1433, %v2931, 0.0
        %2935 = vadd.xlane.f32.xlu0 %v2934
        %v2936 = vpop.xlane.xlu0 %2935
        %v2937 = vsel %vm1433, %v2933, 0.0
        %2938 = vadd.xlane.f32.xlu0 %v2937
        %v2939 = vpop.xlane.xlu0 %2938
        %v2940 = vrcp.pop %v2936
        %v2941 = vrcp.pop %v2939
        %v2942 = vmul.f32 %v2931, %v2940
        %v2943 = vmul.f32 %v2933, %v2941
        %v2944 = vpack.c.bf16 %v2943, %v2942
        %2945 = vrot.lane.b32.xlu0 %v1382, 32
        %v2946 = vpop.permute.xlu0 %2945
        %v2949 = vsel %vm1433, %v2944, 0
        %2951 = vmatprep.subr.bf16.mxu0 0
        %2952 = vmatpush1.bf16.msra.mxu0 %v2946
        %2953 = vmatprep.subr.bf16.mxu0 0
        %2954 = vmatpush1.bf16.msra.mxu0 0
        %2955 = vmatprep.subr.bf16.mxu0 0
        %2956 = vmatpush1.bf16.msra.mxu0 0
        %2957 = vmatprep.subr.bf16.mxu0 0
        %2958 = vmatpush1.bf16.msra.mxu0 0
        %2959 = vmatprep.subr.bf16.mxu0 0
        %2960 = vmatpush1.bf16.msra.mxu0 0
        %2961 = vmatprep.subr.bf16.mxu0 0
        %2962 = vmatpush1.bf16.msra.mxu0 0
        %2963 = vmatprep.subr.bf16.mxu0 0
        %2964 = vmatpush1.bf16.msra.mxu0 0
        %2965 = vmatprep.subr.bf16.mxu0 0
        %2966 = vmatpush1.bf16.msra.mxu0 0
        %2967 = vmatprep.subr.bf16.mxu0 0
        %2968 = vmatpush1.bf16.msra.mxu0 0
        %2969 = vmatprep.subr.bf16.mxu0 0
        %2970 = vmatpush1.bf16.msra.mxu0 0
        %2971 = vmatprep.subr.bf16.mxu0 0
        %2972 = vmatpush1.bf16.msra.mxu0 0
        %2973 = vmatprep.subr.bf16.mxu0 0
        %2974 = vmatpush1.bf16.msra.mxu0 0
        %2975 = vmatprep.subr.bf16.mxu0 0
        %2976 = vmatpush1.bf16.msra.mxu0 0
        %2977 = vmatprep.subr.bf16.mxu0 0
        %2978 = vmatpush1.bf16.msra.mxu0 0
        %2979 = vmatprep.subr.bf16.mxu0 0
        %2980 = vmatpush1.bf16.msra.mxu0 0
        %2981 = vmatprep.subr.bf16.mxu0 0
        %2982 = vmatpush1.bf16.msra.mxu0 0
        %2983 = vmatprep.mubr.bf16.mxu0 0
        %2984 = vmatmul.mubr.bf16.gmra.mrb[0].mxu0 %v2949
        %v2985 = vpop.f32.mrb[0].mxu0
        %v2986 = vadd.f32 0.0, %v2985
        %v2987 = vpop.f32.mrb[0].mxu0
        %v2988 = vpop.f32.mrb[0].mxu0
        %v2989 = vadd.f32 0.0, %v2988
        %v2990 = vpop.f32.mrb[0].mxu0
        %2991 = vdwg.mxu0
        %s2992 = scalar_lea.vmem %s731, 208 [#allocation6]
        %v2993 = vld [vmem:[%s2992] sm:$0xff]
        %v2994 = vld [vmem:[%s2992 + $0x8] sm:$0xff]
        %2995 = vrot.lane.b32.xlu0 %v1380, 24
        %v2996 = vpop.permute.xlu0 %2995
        %2997 = vrot.lane.b32.xlu0 %v1381, 24
        %v2998 = vpop.permute.xlu0 %2997
        %v3000 = vsel %vm1385, %v2996, 0
        %v3003 = vsel %vm1385, %v2998, 0
        %3005 = vmatprep.subr.bf16.mxu0 0
        %3006 = vmatpush1.bf16.xpose.msra.mxu0 %v3003
        %3007 = vmatprep.subr.bf16.mxu0 0
        %3008 = vmatpush1.bf16.xpose.msra.mxu0 0
        %3009 = vmatprep.subr.bf16.mxu0 0
        %3010 = vmatpush1.bf16.xpose.msra.mxu0 0
        %3011 = vmatprep.subr.bf16.mxu0 0
        %3012 = vmatpush1.bf16.xpose.msra.mxu0 0
        %3013 = vmatprep.subr.bf16.mxu0 0
        %3014 = vmatpush1.bf16.xpose.msra.mxu0 0
        %3015 = vmatprep.subr.bf16.mxu0 0
        %3016 = vmatpush1.bf16.xpose.msra.mxu0 0
        %3017 = vmatprep.subr.bf16.mxu0 0
        %3018 = vmatpush1.bf16.xpose.msra.mxu0 0
        %3019 = vmatprep.subr.bf16.mxu0 0
        %3020 = vmatpush1.bf16.xpose.msra.mxu0 0
        %3021 = vmatprep.subr.bf16.mxu0 0
        %3022 = vmatpush1.bf16.xpose.msra.mxu0 0
        %3023 = vmatprep.subr.bf16.mxu0 0
        %3024 = vmatpush1.bf16.xpose.msra.mxu0 0
        %3025 = vmatprep.subr.bf16.mxu0 0
        %3026 = vmatpush1.bf16.xpose.msra.mxu0 0
        %3027 = vmatprep.subr.bf16.mxu0 0
        %3028 = vmatpush1.bf16.xpose.msra.mxu0 0
        %3029 = vmatprep.subr.bf16.mxu0 0
        %3030 = vmatpush1.bf16.xpose.msra.mxu0 0
        %3031 = vmatprep.subr.bf16.mxu0 0
        %3032 = vmatpush1.bf16.xpose.msra.mxu0 0
        %3033 = vmatprep.subr.bf16.mxu0 0
        %3034 = vmatpush1.bf16.xpose.msra.mxu0 0
        %3035 = vmatprep.subr.bf16.mxu0 0
        %3036 = vmatpush1.bf16.xpose.msra.mxu0 0
        %3037 = vmatprep.mubr.bf16.mxu0 0
        %3038 = vmatmul.mubr.bf16.gmra.mrb[0].mxu0 %v3000
        %v3039 = vpop.f32.mrb[0].mxu0
        %v3040 = vadd.f32 %v2993, %v3039
        %v3041 = vpop.f32.mrb[0].mxu0
        %v3042 = vpop.f32.mrb[0].mxu0
        %v3043 = vadd.f32 %v2994, %v3042
        %v3044 = vpop.f32.mrb[0].mxu0
        %3045 = vdwg.mxu0
        %v3046 = vsel %vm1433, %v3040, -inf
        %3047 = vmax.xlane.f32.xlu0 %v3046
        %v3048 = vpop.xlane.xlu0 %3047
        %v3049 = vsel %vm1433, %v3043, -inf
        %3050 = vmax.xlane.f32.xlu0 %v3049
        %v3051 = vpop.xlane.xlu0 %3050
        %v3052 = vsub.f32 %v3040, %v3048
        %v3053 = vsub.f32 %v3043, %v3051
        %v3054 = vmul.f32 %v3052, 1.442695
        %v3055 = vpow.pop %v3054
        %v3056 = vmul.f32 %v3053, 1.442695
        %v3057 = vpow.pop %v3056
        %v3058 = vsel %vm1433, %v3055, 0.0
        %3059 = vadd.xlane.f32.xlu0 %v3058
        %v3060 = vpop.xlane.xlu0 %3059
        %v3061 = vsel %vm1433, %v3057, 0.0
        %3062 = vadd.xlane.f32.xlu0 %v3061
        %v3063 = vpop.xlane.xlu0 %3062
        %v3064 = vrcp.pop %v3060
        %v3065 = vrcp.pop %v3063
        %v3066 = vmul.f32 %v3055, %v3064
        %v3067 = vmul.f32 %v3057, %v3065
        %v3068 = vpack.c.bf16 %v3067, %v3066
        %3069 = vrot.lane.b32.xlu0 %v1382, 24
        %v3070 = vpop.permute.xlu0 %3069
        %v3073 = vsel %vm1433, %v3068, 0
        %3075 = vmatprep.subr.bf16.mxu0 0
        %3076 = vmatpush1.bf16.msra.mxu0 %v3070
        %3077 = vmatprep.subr.bf16.mxu0 0
        %3078 = vmatpush1.bf16.msra.mxu0 0
        %3079 = vmatprep.subr.bf16.mxu0 0
        %3080 = vmatpush1.bf16.msra.mxu0 0
        %3081 = vmatprep.subr.bf16.mxu0 0
        %3082 = vmatpush1.bf16.msra.mxu0 0
        %3083 = vmatprep.subr.bf16.mxu0 0
        %3084 = vmatpush1.bf16.msra.mxu0 0
        %3085 = vmatprep.subr.bf16.mxu0 0
        %3086 = vmatpush1.bf16.msra.mxu0 0
        %3087 = vmatprep.subr.bf16.mxu0 0
        %3088 = vmatpush1.bf16.msra.mxu0 0
        %3089 = vmatprep.subr.bf16.mxu0 0
        %3090 = vmatpush1.bf16.msra.mxu0 0
        %3091 = vmatprep.subr.bf16.mxu0 0
        %3092 = vmatpush1.bf16.msra.mxu0 0
        %3093 = vmatprep.subr.bf16.mxu0 0
        %3094 = vmatpush1.bf16.msra.mxu0 0
        %3095 = vmatprep.subr.bf16.mxu0 0
        %3096 = vmatpush1.bf16.msra.mxu0 0
        %3097 = vmatprep.subr.bf16.mxu0 0
        %3098 = vmatpush1.bf16.msra.mxu0 0
        %3099 = vmatprep.subr.bf16.mxu0 0
        %3100 = vmatpush1.bf16.msra.mxu0 0
        %3101 = vmatprep.subr.bf16.mxu0 0
        %3102 = vmatpush1.bf16.msra.mxu0 0
        %3103 = vmatprep.subr.bf16.mxu0 0
        %3104 = vmatpush1.bf16.msra.mxu0 0
        %3105 = vmatprep.subr.bf16.mxu0 0
        %3106 = vmatpush1.bf16.msra.mxu0 0
        %3107 = vmatprep.mubr.bf16.mxu0 0
        %3108 = vmatmul.mubr.bf16.gmra.mrb[0].mxu0 %v3073
        %v3109 = vpop.f32.mrb[0].mxu0
        %v3110 = vadd.f32 0.0, %v3109
        %v3111 = vpop.f32.mrb[0].mxu0
        %v3112 = vpop.f32.mrb[0].mxu0
        %v3113 = vadd.f32 0.0, %v3112
        %v3114 = vpop.f32.mrb[0].mxu0
        %3115 = vdwg.mxu0
        %s3116 = scalar_lea.vmem %s731, 224 [#allocation6]
        %v3117 = vld [vmem:[%s3116] sm:$0xff]
        %v3118 = vld [vmem:[%s3116 + $0x8] sm:$0xff]
        %3119 = vrot.lane.b32.xlu0 %v1380, 16
        %v3120 = vpop.permute.xlu0 %3119
        %3121 = vrot.lane.b32.xlu0 %v1381, 16
        %v3122 = vpop.permute.xlu0 %3121
        %v3124 = vsel %vm1385, %v3120, 0
        %v3127 = vsel %vm1385, %v3122, 0
        %3129 = vmatprep.subr.bf16.mxu0 0
        %3130 = vmatpush1.bf16.xpose.msra.mxu0 %v3127
        %3131 = vmatprep.subr.bf16.mxu0 0
        %3132 = vmatpush1.bf16.xpose.msra.mxu0 0
        %3133 = vmatprep.subr.bf16.mxu0 0
        %3134 = vmatpush1.bf16.xpose.msra.mxu0 0
        %3135 = vmatprep.subr.bf16.mxu0 0
        %3136 = vmatpush1.bf16.xpose.msra.mxu0 0
        %3137 = vmatprep.subr.bf16.mxu0 0
        %3138 = vmatpush1.bf16.xpose.msra.mxu0 0
        %3139 = vmatprep.subr.bf16.mxu0 0
        %3140 = vmatpush1.bf16.xpose.msra.mxu0 0
        %3141 = vmatprep.subr.bf16.mxu0 0
        %3142 = vmatpush1.bf16.xpose.msra.mxu0 0
        %3143 = vmatprep.subr.bf16.mxu0 0
        %3144 = vmatpush1.bf16.xpose.msra.mxu0 0
        %3145 = vmatprep.subr.bf16.mxu0 0
        %3146 = vmatpush1.bf16.xpose.msra.mxu0 0
        %3147 = vmatprep.subr.bf16.mxu0 0
        %3148 = vmatpush1.bf16.xpose.msra.mxu0 0
        %3149 = vmatprep.subr.bf16.mxu0 0
        %3150 = vmatpush1.bf16.xpose.msra.mxu0 0
        %3151 = vmatprep.subr.bf16.mxu0 0
        %3152 = vmatpush1.bf16.xpose.msra.mxu0 0
        %3153 = vmatprep.subr.bf16.mxu0 0
        %3154 = vmatpush1.bf16.xpose.msra.mxu0 0
        %3155 = vmatprep.subr.bf16.mxu0 0
        %3156 = vmatpush1.bf16.xpose.msra.mxu0 0
        %3157 = vmatprep.subr.bf16.mxu0 0
        %3158 = vmatpush1.bf16.xpose.msra.mxu0 0
        %3159 = vmatprep.subr.bf16.mxu0 0
        %3160 = vmatpush1.bf16.xpose.msra.mxu0 0
        %3161 = vmatprep.mubr.bf16.mxu0 0
        %3162 = vmatmul.mubr.bf16.gmra.mrb[0].mxu0 %v3124
        %v3163 = vpop.f32.mrb[0].mxu0
        %v3164 = vadd.f32 %v3117, %v3163
        %v3165 = vpop.f32.mrb[0].mxu0
        %v3166 = vpop.f32.mrb[0].mxu0
        %v3167 = vadd.f32 %v3118, %v3166
        %v3168 = vpop.f32.mrb[0].mxu0
        %3169 = vdwg.mxu0
        %v3170 = vsel %vm1433, %v3164, -inf
        %3171 = vmax.xlane.f32.xlu0 %v3170
        %v3172 = vpop.xlane.xlu0 %3171
        %v3173 = vsel %vm1433, %v3167, -inf
        %3174 = vmax.xlane.f32.xlu0 %v3173
        %v3175 = vpop.xlane.xlu0 %3174
        %v3176 = vsub.f32 %v3164, %v3172
        %v3177 = vsub.f32 %v3167, %v3175
        %v3178 = vmul.f32 %v3176, 1.442695
        %v3179 = vpow.pop %v3178
        %v3180 = vmul.f32 %v3177, 1.442695
        %v3181 = vpow.pop %v3180
        %v3182 = vsel %vm1433, %v3179, 0.0
        %3183 = vadd.xlane.f32.xlu0 %v3182
        %v3184 = vpop.xlane.xlu0 %3183
        %v3185 = vsel %vm1433, %v3181, 0.0
        %3186 = vadd.xlane.f32.xlu0 %v3185
        %v3187 = vpop.xlane.xlu0 %3186
        %v3188 = vrcp.pop %v3184
        %v3189 = vrcp.pop %v3187
        %v3190 = vmul.f32 %v3179, %v3188
        %v3191 = vmul.f32 %v3181, %v3189
        %v3192 = vpack.c.bf16 %v3191, %v3190
        %3193 = vrot.lane.b32.xlu0 %v1382, 16
        %v3194 = vpop.permute.xlu0 %3193
        %v3197 = vsel %vm1433, %v3192, 0
        %3199 = vmatprep.subr.bf16.mxu0 0
        %3200 = vmatpush1.bf16.msra.mxu0 %v3194
        %3201 = vmatprep.subr.bf16.mxu0 0
        %3202 = vmatpush1.bf16.msra.mxu0 0
        %3203 = vmatprep.subr.bf16.mxu0 0
        %3204 = vmatpush1.bf16.msra.mxu0 0
        %3205 = vmatprep.subr.bf16.mxu0 0
        %3206 = vmatpush1.bf16.msra.mxu0 0
        %3207 = vmatprep.subr.bf16.mxu0 0
        %3208 = vmatpush1.bf16.msra.mxu0 0
        %3209 = vmatprep.subr.bf16.mxu0 0
        %3210 = vmatpush1.bf16.msra.mxu0 0
        %3211 = vmatprep.subr.bf16.mxu0 0
        %3212 = vmatpush1.bf16.msra.mxu0 0
        %3213 = vmatprep.subr.bf16.mxu0 0
        %3214 = vmatpush1.bf16.msra.mxu0 0
        %3215 = vmatprep.subr.bf16.mxu0 0
        %3216 = vmatpush1.bf16.msra.mxu0 0
        %3217 = vmatprep.subr.bf16.mxu0 0
        %3218 = vmatpush1.bf16.msra.mxu0 0
        %3219 = vmatprep.subr.bf16.mxu0 0
        %3220 = vmatpush1.bf16.msra.mxu0 0
        %3221 = vmatprep.subr.bf16.mxu0 0
        %3222 = vmatpush1.bf16.msra.mxu0 0
        %3223 = vmatprep.subr.bf16.mxu0 0
        %3224 = vmatpush1.bf16.msra.mxu0 0
        %3225 = vmatprep.subr.bf16.mxu0 0
        %3226 = vmatpush1.bf16.msra.mxu0 0
        %3227 = vmatprep.subr.bf16.mxu0 0
        %3228 = vmatpush1.bf16.msra.mxu0 0
        %3229 = vmatprep.subr.bf16.mxu0 0
        %3230 = vmatpush1.bf16.msra.mxu0 0
        %3231 = vmatprep.mubr.bf16.mxu0 0
        %3232 = vmatmul.mubr.bf16.gmra.mrb[0].mxu0 %v3197
        %v3233 = vpop.f32.mrb[0].mxu0
        %v3234 = vadd.f32 0.0, %v3233
        %v3235 = vpop.f32.mrb[0].mxu0
        %v3236 = vpop.f32.mrb[0].mxu0
        %v3237 = vadd.f32 0.0, %v3236
        %v3238 = vpop.f32.mrb[0].mxu0
        %3239 = vdwg.mxu0
        %s3240 = scalar_lea.vmem %s731, 240 [#allocation6]
        %v3241 = vld [vmem:[%s3240] sm:$0xff]
        %v3242 = vld [vmem:[%s3240 + $0x8] sm:$0xff]
        %3243 = vrot.lane.b32.xlu0 %v1380, 8
        %v3244 = vpop.permute.xlu0 %3243
        %3245 = vrot.lane.b32.xlu0 %v1381, 8
        %v3246 = vpop.permute.xlu0 %3245
        %v3248 = vsel %vm1385, %v3244, 0
        %v3251 = vsel %vm1385, %v3246, 0
        %3253 = vmatprep.subr.bf16.mxu0 0
        %3254 = vmatpush1.bf16.xpose.msra.mxu0 %v3251
        %3255 = vmatprep.subr.bf16.mxu0 0
        %3256 = vmatpush1.bf16.xpose.msra.mxu0 0
        %3257 = vmatprep.subr.bf16.mxu0 0
        %3258 = vmatpush1.bf16.xpose.msra.mxu0 0
        %3259 = vmatprep.subr.bf16.mxu0 0
        %3260 = vmatpush1.bf16.xpose.msra.mxu0 0
        %3261 = vmatprep.subr.bf16.mxu0 0
        %3262 = vmatpush1.bf16.xpose.msra.mxu0 0
        %3263 = vmatprep.subr.bf16.mxu0 0
        %3264 = vmatpush1.bf16.xpose.msra.mxu0 0
        %3265 = vmatprep.subr.bf16.mxu0 0
        %3266 = vmatpush1.bf16.xpose.msra.mxu0 0
        %3267 = vmatprep.subr.bf16.mxu0 0
        %3268 = vmatpush1.bf16.xpose.msra.mxu0 0
        %3269 = vmatprep.subr.bf16.mxu0 0
        %3270 = vmatpush1.bf16.xpose.msra.mxu0 0
        %3271 = vmatprep.subr.bf16.mxu0 0
        %3272 = vmatpush1.bf16.xpose.msra.mxu0 0
        %3273 = vmatprep.subr.bf16.mxu0 0
        %3274 = vmatpush1.bf16.xpose.msra.mxu0 0
        %3275 = vmatprep.subr.bf16.mxu0 0
        %3276 = vmatpush1.bf16.xpose.msra.mxu0 0
        %3277 = vmatprep.subr.bf16.mxu0 0
        %3278 = vmatpush1.bf16.xpose.msra.mxu0 0
        %3279 = vmatprep.subr.bf16.mxu0 0
        %3280 = vmatpush1.bf16.xpose.msra.mxu0 0
        %3281 = vmatprep.subr.bf16.mxu0 0
        %3282 = vmatpush1.bf16.xpose.msra.mxu0 0
        %3283 = vmatprep.subr.bf16.mxu0 0
        %3284 = vmatpush1.bf16.xpose.msra.mxu0 0
        %3285 = vmatprep.mubr.bf16.mxu0 0
        %3286 = vmatmul.mubr.bf16.gmra.mrb[0].mxu0 %v3248
        %v3287 = vpop.f32.mrb[0].mxu0
        %v3288 = vadd.f32 %v3241, %v3287
        %v3289 = vpop.f32.mrb[0].mxu0
        %v3290 = vpop.f32.mrb[0].mxu0
        %v3291 = vadd.f32 %v3242, %v3290
        %v3292 = vpop.f32.mrb[0].mxu0
        %3293 = vdwg.mxu0
        %v3294 = vsel %vm1433, %v3288, -inf
        %3295 = vmax.xlane.f32.xlu0 %v3294
        %v3296 = vpop.xlane.xlu0 %3295
        %v3297 = vsel %vm1433, %v3291, -inf
        %3298 = vmax.xlane.f32.xlu0 %v3297
        %v3299 = vpop.xlane.xlu0 %3298
        %v3300 = vsub.f32 %v3288, %v3296
        %v3301 = vsub.f32 %v3291, %v3299
        %v3302 = vmul.f32 %v3300, 1.442695
        %v3303 = vpow.pop %v3302
        %v3304 = vmul.f32 %v3301, 1.442695
        %v3305 = vpow.pop %v3304
        %v3306 = vsel %vm1433, %v3303, 0.0
        %3307 = vadd.xlane.f32.xlu0 %v3306
        %v3308 = vpop.xlane.xlu0 %3307
        %v3309 = vsel %vm1433, %v3305, 0.0
        %3310 = vadd.xlane.f32.xlu0 %v3309
        %v3311 = vpop.xlane.xlu0 %3310
        %v3312 = vrcp.pop %v3308
        %v3313 = vrcp.pop %v3311
        %v3314 = vmul.f32 %v3303, %v3312
        %v3315 = vmul.f32 %v3305, %v3313
        %v3316 = vpack.c.bf16 %v3315, %v3314
        %3317 = vrot.lane.b32.xlu0 %v1382, 8
        %v3318 = vpop.permute.xlu0 %3317
        %v3321 = vsel %vm1433, %v3316, 0
        %3323 = vmatprep.subr.bf16.mxu0 0
        %3324 = vmatpush1.bf16.msra.mxu0 %v3318
        %3325 = vmatprep.subr.bf16.mxu0 0
        %3326 = vmatpush1.bf16.msra.mxu0 0
        %3327 = vmatprep.subr.bf16.mxu0 0
        %3328 = vmatpush1.bf16.msra.mxu0 0
        %3329 = vmatprep.subr.bf16.mxu0 0
        %3330 = vmatpush1.bf16.msra.mxu0 0
        %3331 = vmatprep.subr.bf16.mxu0 0
        %3332 = vmatpush1.bf16.msra.mxu0 0
        %3333 = vmatprep.subr.bf16.mxu0 0
        %3334 = vmatpush1.bf16.msra.mxu0 0
        %3335 = vmatprep.subr.bf16.mxu0 0
        %3336 = vmatpush1.bf16.msra.mxu0 0
        %3337 = vmatprep.subr.bf16.mxu0 0
        %3338 = vmatpush1.bf16.msra.mxu0 0
        %3339 = vmatprep.subr.bf16.mxu0 0
        %3340 = vmatpush1.bf16.msra.mxu0 0
        %3341 = vmatprep.subr.bf16.mxu0 0
        %3342 = vmatpush1.bf16.msra.mxu0 0
        %3343 = vmatprep.subr.bf16.mxu0 0
        %3344 = vmatpush1.bf16.msra.mxu0 0
        %3345 = vmatprep.subr.bf16.mxu0 0
        %3346 = vmatpush1.bf16.msra.mxu0 0
        %3347 = vmatprep.subr.bf16.mxu0 0
        %3348 = vmatpush1.bf16.msra.mxu0 0
        %3349 = vmatprep.subr.bf16.mxu0 0
        %3350 = vmatpush1.bf16.msra.mxu0 0
        %3351 = vmatprep.subr.bf16.mxu0 0
        %3352 = vmatpush1.bf16.msra.mxu0 0
        %3353 = vmatprep.subr.bf16.mxu0 0
        %3354 = vmatpush1.bf16.msra.mxu0 0
        %3355 = vmatprep.mubr.bf16.mxu0 0
        %3356 = vmatmul.mubr.bf16.gmra.mrb[0].mxu0 %v3321
        %v3357 = vpop.f32.mrb[0].mxu0
        %v3358 = vadd.f32 0.0, %v3357
        %v3359 = vpop.f32.mrb[0].mxu0
        %v3360 = vpop.f32.mrb[0].mxu0
        %v3361 = vadd.f32 0.0, %v3360
        %v3362 = vpop.f32.mrb[0].mxu0
        %3363 = vdwg.mxu0
        %3366 = vrot.lane.b32.xlu0 %v1622, 8
        %v3367 = vpop.permute.xlu0 %3366
        %3368 = vrot.lane.b32.xlu0 %v1625, 8
        %v3369 = vpop.permute.xlu0 %3368
        %3374 = vrot.lane.b32.xlu0 %v1746, 16
        %v3375 = vpop.permute.xlu0 %3374
        %3376 = vrot.lane.b32.xlu0 %v1749, 16
        %v3377 = vpop.permute.xlu0 %3376
        %3382 = vrot.lane.b32.xlu0 %v1870, 24
        %v3383 = vpop.permute.xlu0 %3382
        %3384 = vrot.lane.b32.xlu0 %v1873, 24
        %v3385 = vpop.permute.xlu0 %3384
        %3390 = vrot.lane.b32.xlu0 %v1994, 32
        %v3391 = vpop.permute.xlu0 %3390
        %3392 = vrot.lane.b32.xlu0 %v1997, 32
        %v3393 = vpop.permute.xlu0 %3392
        %3398 = vrot.lane.b32.xlu0 %v2118, 40
        %v3399 = vpop.permute.xlu0 %3398
        %3400 = vrot.lane.b32.xlu0 %v2121, 40
        %v3401 = vpop.permute.xlu0 %3400
        %3406 = vrot.lane.b32.xlu0 %v2242, 48
        %v3407 = vpop.permute.xlu0 %3406
        %3408 = vrot.lane.b32.xlu0 %v2245, 48
        %v3409 = vpop.permute.xlu0 %3408
        %3414 = vrot.lane.b32.xlu0 %v2366, 56
        %v3415 = vpop.permute.xlu0 %3414
        %3416 = vrot.lane.b32.xlu0 %v2369, 56
        %v3417 = vpop.permute.xlu0 %3416
        %3422 = vrot.lane.b32.xlu0 %v2490, 64
        %v3423 = vpop.permute.xlu0 %3422
        %3424 = vrot.lane.b32.xlu0 %v2493, 64
        %v3425 = vpop.permute.xlu0 %3424
        %3430 = vrot.lane.b32.xlu0 %v2614, 72
        %v3431 = vpop.permute.xlu0 %3430
        %3432 = vrot.lane.b32.xlu0 %v2617, 72
        %v3433 = vpop.permute.xlu0 %3432
        %3438 = vrot.lane.b32.xlu0 %v2738, 80
        %v3439 = vpop.permute.xlu0 %3438
        %3440 = vrot.lane.b32.xlu0 %v2741, 80
        %v3441 = vpop.permute.xlu0 %3440
        %3446 = vrot.lane.b32.xlu0 %v2862, 88
        %v3447 = vpop.permute.xlu0 %3446
        %3448 = vrot.lane.b32.xlu0 %v2865, 88
        %v3449 = vpop.permute.xlu0 %3448
        %3454 = vrot.lane.b32.xlu0 %v2986, 96
        %v3455 = vpop.permute.xlu0 %3454
        %3456 = vrot.lane.b32.xlu0 %v2989, 96
        %v3457 = vpop.permute.xlu0 %3456
        %3462 = vrot.lane.b32.xlu0 %v3110, 104
        %v3463 = vpop.permute.xlu0 %3462
        %3464 = vrot.lane.b32.xlu0 %v3113, 104
        %v3465 = vpop.permute.xlu0 %3464
        %3470 = vrot.lane.b32.xlu0 %v3234, 112
        %v3471 = vpop.permute.xlu0 %3470
        %3472 = vrot.lane.b32.xlu0 %v3237, 112
        %v3473 = vpop.permute.xlu0 %3472
        %3478 = vrot.lane.b32.xlu0 %v3358, 120
        %v3479 = vpop.permute.xlu0 %3478
        %3480 = vrot.lane.b32.xlu0 %v3361, 120
        %v3481 = vpop.permute.xlu0 %3480
        %v3484 = vsel %vm1385, %v1495, %v3367
        %v3485 = vsel %vm1385, %v1498, %v3369
        %v3486 = vsel %vm1433, %v3484, %v3375
        %v3487 = vsel %vm1433, %v3485, %v3377
        %vm3488 = vcmask 195584
        %v3489 = vsel %vm3488, %v3486, %v3383
        %v3490 = vsel %vm3488, %v3487, %v3385
        %vm3491 = vcmask 261120
        %v3492 = vsel %vm3491, %v3489, %v3391
        %v3493 = vsel %vm3491, %v3490, %v3393
        %vm3494 = vcmask 326656
        %v3495 = vsel %vm3494, %v3492, %v3399
        %v3496 = vsel %vm3494, %v3493, %v3401
        %vm3497 = vcmask 392192
        %v3498 = vsel %vm3497, %v3495, %v3407
        %v3499 = vsel %vm3497, %v3496, %v3409
        %vm3500 = vcmask 457728
        %v3501 = vsel %vm3500, %v3498, %v3415
        %v3502 = vsel %vm3500, %v3499, %v3417
        %vm3503 = vcmask 523264
        %v3504 = vsel %vm3503, %v3501, %v3423
        %v3505 = vsel %vm3503, %v3502, %v3425
        %vm3506 = vcmask 588800
        %v3507 = vsel %vm3506, %v3504, %v3431
        %v3508 = vsel %vm3506, %v3505, %v3433
        %vm3509 = vcmask 654336
        %v3510 = vsel %vm3509, %v3507, %v3439
        %v3511 = vsel %vm3509, %v3508, %v3441
        %vm3512 = vcmask 719872
        %v3513 = vsel %vm3512, %v3510, %v3447
        %v3514 = vsel %vm3512, %v3511, %v3449
        %vm3515 = vcmask 785408
        %v3516 = vsel %vm3515, %v3513, %v3455
        %v3517 = vsel %vm3515, %v3514, %v3457
        %vm3518 = vcmask 850944
        %v3519 = vsel %vm3518, %v3516, %v3463
        %v3520 = vsel %vm3518, %v3517, %v3465
        %vm3521 = vcmask 916480
        %v3522 = vsel %vm3521, %v3519, %v3471
        %v3523 = vsel %vm3521, %v3520, %v3473
        %vm3524 = vcmask 982016
        %v3525 = vsel %vm3524, %v3522, %v3479
        %v3526 = vsel %vm3524, %v3523, %v3481
        %v3527 = vpack.c.bf16 %v3526, %v3525
        %v3528 = vld [vmem:[%s757] sm:$0xf]
        %v3529 = vld [vmem:[%s757 + $0x4] sm:$0xf]
        %v3530 = vld [vmem:[%s757 + $0x8] sm:$0xf]
        %v3531 = vld [vmem:[%s757 + $0xc] sm:$0xf]
        %v3532 = vld [vmem:[%s757 + $0x10] sm:$0xf]
        %v3533 = vld [vmem:[%s757 + $0x14] sm:$0xf]
        %v3534 = vld [vmem:[%s757 + $0x18] sm:$0xf]
        %v3535 = vld [vmem:[%s757 + $0x1c] sm:$0xf]
        %v3536 = vld [vmem:[%s757 + $0x20] sm:$0xf]
        %v3537 = vld [vmem:[%s757 + $0x24] sm:$0xf]
        %v3538 = vld [vmem:[%s757 + $0x28] sm:$0xf]
        %v3539 = vld [vmem:[%s757 + $0x2c] sm:$0xf]
        %v3540 = vld [vmem:[%s757 + $0x30] sm:$0xf]
        %v3541 = vld [vmem:[%s757 + $0x34] sm:$0xf]
        %v3542 = vld [vmem:[%s757 + $0x38] sm:$0xf]
        %v3543 = vld [vmem:[%s757 + $0x3c] sm:$0xf]
        %v3544 = vld [vmem:[%s881] sm:$0x1]
        %v3546 = vlaneseq
        %v3547 = vshrl.u32 %v3546, 7
        %v3548 = vsub.s32 0, %v3547
        %v3549 = vrot.slane %v3544, %v3548
        %v3567 = vunpack.c.l.b16 %v3528
        %v3568 = vunpack.c.l.b16 %v3529
        %v3569 = vunpack.c.l.b16 %v3530
        %v3570 = vunpack.c.l.b16 %v3531
        %v3571 = vunpack.c.l.b16 %v3532
        %v3572 = vunpack.c.l.b16 %v3533
        %v3573 = vunpack.c.l.b16 %v3534
        %v3574 = vunpack.c.l.b16 %v3535
        %v3575 = vunpack.c.l.b16 %v3536
        %v3576 = vunpack.c.l.b16 %v3537
        %v3577 = vunpack.c.l.b16 %v3538
        %v3578 = vunpack.c.l.b16 %v3539
        %v3579 = vunpack.c.l.b16 %v3540
        %v3580 = vunpack.c.l.b16 %v3541
        %v3581 = vunpack.c.l.b16 %v3542
        %v3582 = vunpack.c.l.b16 %v3543
        %v3583 = vpack.c.b16 %v3568, %v3567
        %v3584 = vpack.c.b16 %v3570, %v3569
        %v3585 = vpack.c.b16 %v3572, %v3571
        %v3586 = vpack.c.b16 %v3574, %v3573
        %v3587 = vpack.c.b16 %v3576, %v3575
        %v3588 = vpack.c.b16 %v3578, %v3577
        %v3589 = vpack.c.b16 %v3580, %v3579
        %v3590 = vpack.c.b16 %v3582, %v3581
        %3599 = vmatprep.subr.bf16.mxu0 0
        %3600 = vmatpush1.bf16.msra.mxu0 %v3583
        %3601 = vmatprep.subr.bf16.mxu0 0
        %3602 = vmatpush1.bf16.msra.mxu0 %v3584
        %3603 = vmatprep.subr.bf16.mxu0 0
        %3604 = vmatpush1.bf16.msra.mxu0 %v3585
        %3605 = vmatprep.subr.bf16.mxu0 0
        %3606 = vmatpush1.bf16.msra.mxu0 %v3586
        %3607 = vmatprep.subr.bf16.mxu0 0
        %3608 = vmatpush1.bf16.msra.mxu0 %v3587
        %3609 = vmatprep.subr.bf16.mxu0 0
        %3610 = vmatpush1.bf16.msra.mxu0 %v3588
        %3611 = vmatprep.subr.bf16.mxu0 0
        %3612 = vmatpush1.bf16.msra.mxu0 %v3589
        %3613 = vmatprep.subr.bf16.mxu0 0
        %3614 = vmatpush1.bf16.msra.mxu0 %v3590
        %3615 = vmatprep.subr.bf16.mxu0 0
        %3616 = vmatpush1.bf16.msra.mxu0 0
        %3617 = vmatprep.subr.bf16.mxu0 0
        %3618 = vmatpush1.bf16.msra.mxu0 0
        %3619 = vmatprep.subr.bf16.mxu0 0
        %3620 = vmatpush1.bf16.msra.mxu0 0
        %3621 = vmatprep.subr.bf16.mxu0 0
        %3622 = vmatpush1.bf16.msra.mxu0 0
        %3623 = vmatprep.subr.bf16.mxu0 0
        %3624 = vmatpush1.bf16.msra.mxu0 0
        %3625 = vmatprep.subr.bf16.mxu0 0
        %3626 = vmatpush1.bf16.msra.mxu0 0
        %3627 = vmatprep.subr.bf16.mxu0 0
        %3628 = vmatpush1.bf16.msra.mxu0 0
        %3629 = vmatprep.subr.bf16.mxu0 0
        %3630 = vmatpush1.bf16.msra.mxu0 0
        %3631 = vmatprep.mubr.bf16.mxu0 0
        %3632 = vmatmul.mubr.bf16.gmra.mrb[0].mxu0 %v3527
        %v3633 = vpop.f32.mrb[0].mxu0
        %v3634 = vadd.f32 %v3549, %v3633
        %v3635 = vpop.f32.mrb[0].mxu0
        %v3636 = vpop.f32.mrb[0].mxu0
        %v3637 = vadd.f32 %v3549, %v3636
        %v3638 = vpop.f32.mrb[0].mxu0
        %3639 = vdwg.mxu0
        %v3640 = vadd.f32 %v1090, %v3634
        %v3641 = vadd.f32 %v1091, %v3637
        %v3642 = vld [vmem:[%s884] sm:$0x1]
        %v3643 = vld [vmem:[%s887] sm:$0x1]
        %3644 = vadd.xlane.f32.xlu0 %v3640
        %v3645 = vpop.xlane.xlu0 %3644
        %3646 = vadd.xlane.f32.xlu0 %v3641
        %v3647 = vpop.xlane.xlu0 %3646
        %v3648 = vmul.f32 %v3645, %v1098
        %v3649 = vmul.f32 %v3647, %v1098
        %v3650 = vsub.f32 %v3640, %v3648
        %v3651 = vsub.f32 %v3641, %v3649
        %v3652 = vmul.f32 %v3650, %v3650
        %v3653 = vmul.f32 %v3651, %v3651
        %3654 = vadd.xlane.f32.xlu0 %v3652
        %v3655 = vpop.xlane.xlu0 %3654
        %3656 = vadd.xlane.f32.xlu0 %v3653
        %v3657 = vpop.xlane.xlu0 %3656
        %v3658 = vmul.f32 %v3655, %v1098
        %v3659 = vmul.f32 %v3657, %v1098
        %v3660 = vadd.f32 %v3658, 1e-05
        %v3661 = vadd.f32 %v3659, 1e-05
        %v3662 = vrsqrt.pop %v3660
        %v3663 = vrsqrt.pop %v3661
        %v3664 = vmul.f32 %v3650, %v3662
        %v3665 = vmul.f32 %v3651, %v3663
        %v3667 = vlaneseq
        %v3668 = vshrl.u32 %v3667, 7
        %v3669 = vsub.s32 0, %v3668
        %v3670 = vrot.slane %v3642, %v3669
        %v3672 = vmul.f32 %v3664, %v3670
        %v3673 = vmul.f32 %v3665, %v3670
        %v3675 = vlaneseq
        %v3676 = vshrl.u32 %v3675, 7
        %v3677 = vsub.s32 0, %v3676
        %v3678 = vrot.slane %v3643, %v3677
        %v3680 = vadd.f32 %v3672, %v3678
        %v3681 = vadd.f32 %v3673, %v3678
        %v3682 = vpack.c.bf16 %v3681, %v3680
        %v3683 = vld [vmem:[%s766] sm:$0xff]
        %v3684 = vld [vmem:[%s766 + $0x8] sm:$0xff]
        %v3685 = vld [vmem:[%s766 + $0x10] sm:$0xff]
        %v3686 = vld [vmem:[%s766 + $0x18] sm:$0xff]
        %v3687 = vld [vmem:[%s766 + $0x20] sm:$0xff]
        %v3688 = vld [vmem:[%s766 + $0x28] sm:$0xff]
        %v3689 = vld [vmem:[%s766 + $0x30] sm:$0xff]
        %v3690 = vld [vmem:[%s766 + $0x38] sm:$0xff]
        %v3691 = vld [vmem:[%s766 + $0x40] sm:$0xff]
        %v3692 = vld [vmem:[%s766 + $0x48] sm:$0xff]
        %v3693 = vld [vmem:[%s766 + $0x50] sm:$0xff]
        %v3694 = vld [vmem:[%s766 + $0x58] sm:$0xff]
        %v3695 = vld [vmem:[%s766 + $0x60] sm:$0xff]
        %v3696 = vld [vmem:[%s766 + $0x68] sm:$0xff]
        %v3697 = vld [vmem:[%s766 + $0x70] sm:$0xff]
        %v3698 = vld [vmem:[%s766 + $0x78] sm:$0xff]
        %v3699 = vld [vmem:[%s766 + $0x80] sm:$0xff]
        %v3700 = vld [vmem:[%s766 + $0x88] sm:$0xff]
        %v3701 = vld [vmem:[%s766 + $0x90] sm:$0xff]
        %v3702 = vld [vmem:[%s766 + $0x98] sm:$0xff]
        %v3703 = vld [vmem:[%s766 + $0xa0] sm:$0xff]
        %v3704 = vld [vmem:[%s766 + $0xa8] sm:$0xff]
        %v3705 = vld [vmem:[%s766 + $0xb0] sm:$0xff]
        %v3706 = vld [vmem:[%s766 + $0xb8] sm:$0xff]
        %v3707 = vld [vmem:[%s766 + $0xc0] sm:$0xff]
        %v3708 = vld [vmem:[%s766 + $0xc8] sm:$0xff]
        %v3709 = vld [vmem:[%s766 + $0xd0] sm:$0xff]
        %v3710 = vld [vmem:[%s766 + $0xd8] sm:$0xff]
        %v3711 = vld [vmem:[%s766 + $0xe0] sm:$0xff]
        %v3712 = vld [vmem:[%s766 + $0xe8] sm:$0xff]
        %v3713 = vld [vmem:[%s766 + $0xf0] sm:$0xff]
        %v3714 = vld [vmem:[%s766 + $0xf8] sm:$0xff]
        %v3715 = vld [vmem:[%s891] sm:$0xf]
        %v3717 = vlaneseq
        %v3718 = vshrl.u32 %v3717, 7
        %v3719 = vsub.s32 0, %v3718
        %v3720 = vrot.slane %v3715, %v3719
        %v3721 = vlaneseq
        %v3722 = vshrl.u32 %v3721, 7
        %v3723 = vsub.s32 1, %v3722
        %v3724 = vrot.slane %v3715, %v3723
        %v3725 = vlaneseq
        %v3726 = vshrl.u32 %v3725, 7
        %v3727 = vsub.s32 2, %v3726
        %v3728 = vrot.slane %v3715, %v3727
        %v3729 = vlaneseq
        %v3730 = vshrl.u32 %v3729, 7
        %v3731 = vsub.s32 3, %v3730
        %v3732 = vrot.slane %v3715, %v3731
        %v3769 = vunpack.c.l.b16 %v3683
        %v3770 = vunpack.c.h.b16 %v3683
        %v3771 = vunpack.c.l.b16 %v3684
        %v3772 = vunpack.c.h.b16 %v3684
        %v3773 = vunpack.c.l.b16 %v3685
        %v3774 = vunpack.c.h.b16 %v3685
        %v3775 = vunpack.c.l.b16 %v3686
        %v3776 = vunpack.c.h.b16 %v3686
        %v3777 = vunpack.c.l.b16 %v3687
        %v3778 = vunpack.c.h.b16 %v3687
        %v3779 = vunpack.c.l.b16 %v3688
        %v3780 = vunpack.c.h.b16 %v3688
        %v3781 = vunpack.c.l.b16 %v3689
        %v3782 = vunpack.c.h.b16 %v3689
        %v3783 = vunpack.c.l.b16 %v3690
        %v3784 = vunpack.c.h.b16 %v3690
        %v3785 = vunpack.c.l.b16 %v3691
        %v3786 = vunpack.c.h.b16 %v3691
        %v3787 = vunpack.c.l.b16 %v3692
        %v3788 = vunpack.c.h.b16 %v3692
        %v3789 = vunpack.c.l.b16 %v3693
        %v3790 = vunpack.c.h.b16 %v3693
        %v3791 = vunpack.c.l.b16 %v3694
        %v3792 = vunpack.c.h.b16 %v3694
        %v3793 = vunpack.c.l.b16 %v3695
        %v3794 = vunpack.c.h.b16 %v3695
        %v3795 = vunpack.c.l.b16 %v3696
        %v3796 = vunpack.c.h.b16 %v3696
        %v3797 = vunpack.c.l.b16 %v3697
        %v3798 = vunpack.c.h.b16 %v3697
        %v3799 = vunpack.c.l.b16 %v3698
        %v3800 = vunpack.c.h.b16 %v3698
        %v3801 = vunpack.c.l.b16 %v3699
        %v3802 = vunpack.c.h.b16 %v3699
        %v3803 = vunpack.c.l.b16 %v3700
        %v3804 = vunpack.c.h.b16 %v3700
        %v3805 = vunpack.c.l.b16 %v3701
        %v3806 = vunpack.c.h.b16 %v3701
        %v3807 = vunpack.c.l.b16 %v3702
        %v3808 = vunpack.c.h.b16 %v3702
        %v3809 = vunpack.c.l.b16 %v3703
        %v3810 = vunpack.c.h.b16 %v3703
        %v3811 = vunpack.c.l.b16 %v3704
        %v3812 = vunpack.c.h.b16 %v3704
        %v3813 = vunpack.c.l.b16 %v3705
        %v3814 = vunpack.c.h.b16 %v3705
        %v3815 = vunpack.c.l.b16 %v3706
        %v3816 = vunpack.c.h.b16 %v3706
        %v3817 = vunpack.c.l.b16 %v3707
        %v3818 = vunpack.c.h.b16 %v3707
        %v3819 = vunpack.c.l.b16 %v3708
        %v3820 = vunpack.c.h.b16 %v3708
        %v3821 = vunpack.c.l.b16 %v3709
        %v3822 = vunpack.c.h.b16 %v3709
        %v3823 = vunpack.c.l.b16 %v3710
        %v3824 = vunpack.c.h.b16 %v3710
        %v3825 = vunpack.c.l.b16 %v3711
        %v3826 = vunpack.c.h.b16 %v3711
        %v3827 = vunpack.c.l.b16 %v3712
        %v3828 = vunpack.c.h.b16 %v3712
        %v3829 = vunpack.c.l.b16 %v3713
        %v3830 = vunpack.c.h.b16 %v3713
        %v3831 = vunpack.c.l.b16 %v3714
        %v3832 = vunpack.c.h.b16 %v3714
        %v3833 = vpack.c.b16 %v3773, %v3769
        %v3834 = vpack.c.b16 %v3774, %v3770
        %v3835 = vpack.c.b16 %v3775, %v3771
        %v3836 = vpack.c.b16 %v3776, %v3772
        %v3837 = vpack.c.b16 %v3781, %v3777
        %v3838 = vpack.c.b16 %v3782, %v3778
        %v3839 = vpack.c.b16 %v3783, %v3779
        %v3840 = vpack.c.b16 %v3784, %v3780
        %v3841 = vpack.c.b16 %v3789, %v3785
        %v3842 = vpack.c.b16 %v3790, %v3786
        %v3843 = vpack.c.b16 %v3791, %v3787
        %v3844 = vpack.c.b16 %v3792, %v3788
        %v3845 = vpack.c.b16 %v3797, %v3793
        %v3846 = vpack.c.b16 %v3798, %v3794
        %v3847 = vpack.c.b16 %v3799, %v3795
        %v3848 = vpack.c.b16 %v3800, %v3796
        %v3849 = vpack.c.b16 %v3805, %v3801
        %v3850 = vpack.c.b16 %v3806, %v3802
        %v3851 = vpack.c.b16 %v3807, %v3803
        %v3852 = vpack.c.b16 %v3808, %v3804
        %v3853 = vpack.c.b16 %v3813, %v3809
        %v3854 = vpack.c.b16 %v3814, %v3810
        %v3855 = vpack.c.b16 %v3815, %v3811
        %v3856 = vpack.c.b16 %v3816, %v3812
        %v3857 = vpack.c.b16 %v3821, %v3817
        %v3858 = vpack.c.b16 %v3822, %v3818
        %v3859 = vpack.c.b16 %v3823, %v3819
        %v3860 = vpack.c.b16 %v3824, %v3820
        %v3861 = vpack.c.b16 %v3829, %v3825
        %v3862 = vpack.c.b16 %v3830, %v3826
        %v3863 = vpack.c.b16 %v3831, %v3827
        %v3864 = vpack.c.b16 %v3832, %v3828
        %3897 = vmatprep.subr.bf16.mxu0 %v3834
        %3898 = vmatpush1.bf16.msra.mxu0 %v3833
        %3899 = vmatprep.subr.bf16.mxu0 %v3838
        %3900 = vmatpush1.bf16.msra.mxu0 %v3837
        %3901 = vmatprep.subr.bf16.mxu0 %v3842
        %3902 = vmatpush1.bf16.msra.mxu0 %v3841
        %3903 = vmatprep.subr.bf16.mxu0 %v3846
        %3904 = vmatpush1.bf16.msra.mxu0 %v3845
        %3905 = vmatprep.subr.bf16.mxu0 %v3850
        %3906 = vmatpush1.bf16.msra.mxu0 %v3849
        %3907 = vmatprep.subr.bf16.mxu0 %v3854
        %3908 = vmatpush1.bf16.msra.mxu0 %v3853
        %3909 = vmatprep.subr.bf16.mxu0 %v3858
        %3910 = vmatpush1.bf16.msra.mxu0 %v3857
        %3911 = vmatprep.subr.bf16.mxu0 %v3862
        %3912 = vmatpush1.bf16.msra.mxu0 %v3861
        %3913 = vmatprep.subr.bf16.mxu0 0
        %3914 = vmatpush1.bf16.msra.mxu0 0
        %3915 = vmatprep.subr.bf16.mxu0 0
        %3916 = vmatpush1.bf16.msra.mxu0 0
        %3917 = vmatprep.subr.bf16.mxu0 0
        %3918 = vmatpush1.bf16.msra.mxu0 0
        %3919 = vmatprep.subr.bf16.mxu0 0
        %3920 = vmatpush1.bf16.msra.mxu0 0
        %3921 = vmatprep.subr.bf16.mxu0 0
        %3922 = vmatpush1.bf16.msra.mxu0 0
        %3923 = vmatprep.subr.bf16.mxu0 0
        %3924 = vmatpush1.bf16.msra.mxu0 0
        %3925 = vmatprep.subr.bf16.mxu0 0
        %3926 = vmatpush1.bf16.msra.mxu0 0
        %3927 = vmatprep.subr.bf16.mxu0 0
        %3928 = vmatpush1.bf16.msra.mxu0 0
        %3929 = vmatprep.mubr.bf16.mxu0 0
        %3930 = vmatmul.mubr.bf16.gmra.mrb[0].mxu0 %v3682
        %v3931 = vpop.f32.mrb[0].mxu0
        %v3932 = vadd.f32 %v3720, %v3931
        %v3933 = vpop.f32.mrb[0].mxu0
        %v3934 = vadd.f32 %v3724, %v3933
        %v3935 = vpop.f32.mrb[0].mxu0
        %v3936 = vadd.f32 %v3720, %v3935
        %v3937 = vpop.f32.mrb[0].mxu0
        %v3938 = vadd.f32 %v3724, %v3937
        %3939 = vdwg.mxu0
        %3940 = vmatprep.subr.bf16.mxu0 %v3836
        %3941 = vmatpush1.bf16.msra.mxu0 %v3835
        %3942 = vmatprep.subr.bf16.mxu0 %v3840
        %3943 = vmatpush1.bf16.msra.mxu0 %v3839
        %3944 = vmatprep.subr.bf16.mxu0 %v3844
        %3945 = vmatpush1.bf16.msra.mxu0 %v3843
        %3946 = vmatprep.subr.bf16.mxu0 %v3848
        %3947 = vmatpush1.bf16.msra.mxu0 %v3847
        %3948 = vmatprep.subr.bf16.mxu0 %v3852
        %3949 = vmatpush1.bf16.msra.mxu0 %v3851
        %3950 = vmatprep.subr.bf16.mxu0 %v3856
        %3951 = vmatpush1.bf16.msra.mxu0 %v3855
        %3952 = vmatprep.subr.bf16.mxu0 %v3860
        %3953 = vmatpush1.bf16.msra.mxu0 %v3859
        %3954 = vmatprep.subr.bf16.mxu0 %v3864
        %3955 = vmatpush1.bf16.msra.mxu0 %v3863
        %3956 = vmatprep.subr.bf16.mxu0 0
        %3957 = vmatpush1.bf16.msra.mxu0 0
        %3958 = vmatprep.subr.bf16.mxu0 0
        %3959 = vmatpush1.bf16.msra.mxu0 0
        %3960 = vmatprep.subr.bf16.mxu0 0
        %3961 = vmatpush1.bf16.msra.mxu0 0
        %3962 = vmatprep.subr.bf16.mxu0 0
        %3963 = vmatpush1.bf16.msra.mxu0 0
        %3964 = vmatprep.subr.bf16.mxu0 0
        %3965 = vmatpush1.bf16.msra.mxu0 0
        %3966 = vmatprep.subr.bf16.mxu0 0
        %3967 = vmatpush1.bf16.msra.mxu0 0
        %3968 = vmatprep.subr.bf16.mxu0 0
        %3969 = vmatpush1.bf16.msra.mxu0 0
        %3970 = vmatprep.subr.bf16.mxu0 0
        %3971 = vmatpush1.bf16.msra.mxu0 0
        %3972 = vmatprep.mubr.bf16.mxu0 0
        %3973 = vmatmul.mubr.bf16.gmra.mrb[0].mxu0 %v3682
        %v3974 = vpop.f32.mrb[0].mxu0
        %v3975 = vadd.f32 %v3728, %v3974
        %v3976 = vpop.f32.mrb[0].mxu0
        %v3977 = vadd.f32 %v3732, %v3976
        %v3978 = vpop.f32.mrb[0].mxu0
        %v3979 = vadd.f32 %v3728, %v3978
        %v3980 = vpop.f32.mrb[0].mxu0
        %v3981 = vadd.f32 %v3732, %v3980
        %3982 = vdwg.mxu0
        %v3983 = vmul.f32 %v3932, 0.5
        %v3984 = vmul.f32 %v3934, 0.5
        %v3985 = vmul.f32 %v3975, 0.5
        %v3986 = vmul.f32 %v3977, 0.5
        %v3987 = vmul.f32 %v3936, 0.5
        %v3988 = vmul.f32 %v3938, 0.5
        %v3989 = vmul.f32 %v3979, 0.5
        %v3990 = vmul.f32 %v3981, 0.5
        %v3991 = vmul.f32 %v3932, 0.70710677
        %v3992 = vmul.f32 %v3934, 0.70710677
        %v3993 = vmul.f32 %v3975, 0.70710677
        %v3994 = vmul.f32 %v3977, 0.70710677
        %v3995 = vmul.f32 %v3936, 0.70710677
        %v3996 = vmul.f32 %v3938, 0.70710677
        %v3997 = vmul.f32 %v3979, 0.70710677
        %v3998 = vmul.f32 %v3981, 0.70710677
        %v3999 = verf.f32.pop %v3991
        %v4000 = verf.f32.pop %v3992
        %v4001 = verf.f32.pop %v3993
        %v4002 = verf.f32.pop %v3994
        %v4003 = verf.f32.pop %v3995
        %v4004 = verf.f32.pop %v3996
        %v4005 = verf.f32.pop %v3997
        %v4006 = verf.f32.pop %v3998
        %v4007 = vadd.f32 %v3999, 1.0
        %v4008 = vadd.f32 %v4000, 1.0
        %v4009 = vadd.f32 %v4001, 1.0
        %v4010 = vadd.f32 %v4002, 1.0
        %v4011 = vadd.f32 %v4003, 1.0
        %v4012 = vadd.f32 %v4004, 1.0
        %v4013 = vadd.f32 %v4005, 1.0
        %v4014 = vadd.f32 %v4006, 1.0
        %v4015 = vmul.f32 %v3983, %v4007
        %v4016 = vmul.f32 %v3984, %v4008
        %v4017 = vmul.f32 %v3985, %v4009
        %v4018 = vmul.f32 %v3986, %v4010
        %v4019 = vmul.f32 %v3987, %v4011
        %v4020 = vmul.f32 %v3988, %v4012
        %v4021 = vmul.f32 %v3989, %v4013
        %v4022 = vmul.f32 %v3990, %v4014
        %v4023 = vpack.c.bf16 %v4019, %v4015
        %v4024 = vpack.c.bf16 %v4020, %v4016
        %v4025 = vpack.c.bf16 %v4021, %v4017
        %v4026 = vpack.c.bf16 %v4022, %v4018
        %v4027 = vld [vmem:[%s775] sm:$0xf]
        %v4028 = vld [vmem:[%s775 + $0x4] sm:$0xf]
        %v4029 = vld [vmem:[%s775 + $0x8] sm:$0xf]
        %v4030 = vld [vmem:[%s775 + $0xc] sm:$0xf]
        %v4031 = vld [vmem:[%s775 + $0x10] sm:$0xf]
        %v4032 = vld [vmem:[%s775 + $0x14] sm:$0xf]
        %v4033 = vld [vmem:[%s775 + $0x18] sm:$0xf]
        %v4034 = vld [vmem:[%s775 + $0x1c] sm:$0xf]
        %v4035 = vld [vmem:[%s775 + $0x20] sm:$0xf]
        %v4036 = vld [vmem:[%s775 + $0x24] sm:$0xf]
        %v4037 = vld [vmem:[%s775 + $0x28] sm:$0xf]
        %v4038 = vld [vmem:[%s775 + $0x2c] sm:$0xf]
        %v4039 = vld [vmem:[%s775 + $0x30] sm:$0xf]
        %v4040 = vld [vmem:[%s775 + $0x34] sm:$0xf]
        %v4041 = vld [vmem:[%s775 + $0x38] sm:$0xf]
        %v4042 = vld [vmem:[%s775 + $0x3c] sm:$0xf]
        %v4043 = vld [vmem:[%s775 + $0x40] sm:$0xf]
        %v4044 = vld [vmem:[%s775 + $0x44] sm:$0xf]
        %v4045 = vld [vmem:[%s775 + $0x48] sm:$0xf]
        %v4046 = vld [vmem:[%s775 + $0x4c] sm:$0xf]
        %v4047 = vld [vmem:[%s775 + $0x50] sm:$0xf]
        %v4048 = vld [vmem:[%s775 + $0x54] sm:$0xf]
        %v4049 = vld [vmem:[%s775 + $0x58] sm:$0xf]
        %v4050 = vld [vmem:[%s775 + $0x5c] sm:$0xf]
        %v4051 = vld [vmem:[%s775 + $0x60] sm:$0xf]
        %v4052 = vld [vmem:[%s775 + $0x64] sm:$0xf]
        %v4053 = vld [vmem:[%s775 + $0x68] sm:$0xf]
        %v4054 = vld [vmem:[%s775 + $0x6c] sm:$0xf]
        %v4055 = vld [vmem:[%s775 + $0x70] sm:$0xf]
        %v4056 = vld [vmem:[%s775 + $0x74] sm:$0xf]
        %v4057 = vld [vmem:[%s775 + $0x78] sm:$0xf]
        %v4058 = vld [vmem:[%s775 + $0x7c] sm:$0xf]
        %v4059 = vld [vmem:[%s775 + $0x80] sm:$0xf]
        %v4060 = vld [vmem:[%s775 + $0x84] sm:$0xf]
        %v4061 = vld [vmem:[%s775 + $0x88] sm:$0xf]
        %v4062 = vld [vmem:[%s775 + $0x8c] sm:$0xf]
        %v4063 = vld [vmem:[%s775 + $0x90] sm:$0xf]
        %v4064 = vld [vmem:[%s775 + $0x94] sm:$0xf]
        %v4065 = vld [vmem:[%s775 + $0x98] sm:$0xf]
        %v4066 = vld [vmem:[%s775 + $0x9c] sm:$0xf]
        %v4067 = vld [vmem:[%s775 + $0xa0] sm:$0xf]
        %v4068 = vld [vmem:[%s775 + $0xa4] sm:$0xf]
        %v4069 = vld [vmem:[%s775 + $0xa8] sm:$0xf]
        %v4070 = vld [vmem:[%s775 + $0xac] sm:$0xf]
        %v4071 = vld [vmem:[%s775 + $0xb0] sm:$0xf]
        %v4072 = vld [vmem:[%s775 + $0xb4] sm:$0xf]
        %v4073 = vld [vmem:[%s775 + $0xb8] sm:$0xf]
        %v4074 = vld [vmem:[%s775 + $0xbc] sm:$0xf]
        %v4075 = vld [vmem:[%s775 + $0xc0] sm:$0xf]
        %v4076 = vld [vmem:[%s775 + $0xc4] sm:$0xf]
        %v4077 = vld [vmem:[%s775 + $0xc8] sm:$0xf]
        %v4078 = vld [vmem:[%s775 + $0xcc] sm:$0xf]
        %v4079 = vld [vmem:[%s775 + $0xd0] sm:$0xf]
        %v4080 = vld [vmem:[%s775 + $0xd4] sm:$0xf]
        %v4081 = vld [vmem:[%s775 + $0xd8] sm:$0xf]
        %v4082 = vld [vmem:[%s775 + $0xdc] sm:$0xf]
        %v4083 = vld [vmem:[%s775 + $0xe0] sm:$0xf]
        %v4084 = vld [vmem:[%s775 + $0xe4] sm:$0xf]
        %v4085 = vld [vmem:[%s775 + $0xe8] sm:$0xf]
        %v4086 = vld [vmem:[%s775 + $0xec] sm:$0xf]
        %v4087 = vld [vmem:[%s775 + $0xf0] sm:$0xf]
        %v4088 = vld [vmem:[%s775 + $0xf4] sm:$0xf]
        %v4089 = vld [vmem:[%s775 + $0xf8] sm:$0xf]
        %v4090 = vld [vmem:[%s775 + $0xfc] sm:$0xf]
        %v4091 = vld [vmem:[%s894] sm:$0x1]
        %v4093 = vlaneseq
        %v4094 = vshrl.u32 %v4093, 7
        %v4095 = vsub.s32 0, %v4094
        %v4096 = vrot.slane %v4091, %v4095
        %v4162 = vunpack.c.l.b16 %v4027
        %v4163 = vunpack.c.l.b16 %v4028
        %v4164 = vunpack.c.l.b16 %v4029
        %v4165 = vunpack.c.l.b16 %v4030
        %v4166 = vunpack.c.l.b16 %v4031
        %v4167 = vunpack.c.l.b16 %v4032
        %v4168 = vunpack.c.l.b16 %v4033
        %v4169 = vunpack.c.l.b16 %v4034
        %v4170 = vunpack.c.l.b16 %v4035
        %v4171 = vunpack.c.l.b16 %v4036
        %v4172 = vunpack.c.l.b16 %v4037
        %v4173 = vunpack.c.l.b16 %v4038
        %v4174 = vunpack.c.l.b16 %v4039
        %v4175 = vunpack.c.l.b16 %v4040
        %v4176 = vunpack.c.l.b16 %v4041
        %v4177 = vunpack.c.l.b16 %v4042
        %v4178 = vunpack.c.l.b16 %v4043
        %v4179 = vunpack.c.l.b16 %v4044
        %v4180 = vunpack.c.l.b16 %v4045
        %v4181 = vunpack.c.l.b16 %v4046
        %v4182 = vunpack.c.l.b16 %v4047
        %v4183 = vunpack.c.l.b16 %v4048
        %v4184 = vunpack.c.l.b16 %v4049
        %v4185 = vunpack.c.l.b16 %v4050
        %v4186 = vunpack.c.l.b16 %v4051
        %v4187 = vunpack.c.l.b16 %v4052
        %v4188 = vunpack.c.l.b16 %v4053
        %v4189 = vunpack.c.l.b16 %v4054
        %v4190 = vunpack.c.l.b16 %v4055
        %v4191 = vunpack.c.l.b16 %v4056
        %v4192 = vunpack.c.l.b16 %v4057
        %v4193 = vunpack.c.l.b16 %v4058
        %v4194 = vunpack.c.l.b16 %v4059
        %v4195 = vunpack.c.l.b16 %v4060
        %v4196 = vunpack.c.l.b16 %v4061
        %v4197 = vunpack.c.l.b16 %v4062
        %v4198 = vunpack.c.l.b16 %v4063
        %v4199 = vunpack.c.l.b16 %v4064
        %v4200 = vunpack.c.l.b16 %v4065
        %v4201 = vunpack.c.l.b16 %v4066
        %v4202 = vunpack.c.l.b16 %v4067
        %v4203 = vunpack.c.l.b16 %v4068
        %v4204 = vunpack.c.l.b16 %v4069
        %v4205 = vunpack.c.l.b16 %v4070
        %v4206 = vunpack.c.l.b16 %v4071
        %v4207 = vunpack.c.l.b16 %v4072
        %v4208 = vunpack.c.l.b16 %v4073
        %v4209 = vunpack.c.l.b16 %v4074
        %v4210 = vunpack.c.l.b16 %v4075
        %v4211 = vunpack.c.l.b16 %v4076
        %v4212 = vunpack.c.l.b16 %v4077
        %v4213 = vunpack.c.l.b16 %v4078
        %v4214 = vunpack.c.l.b16 %v4079
        %v4215 = vunpack.c.l.b16 %v4080
        %v4216 = vunpack.c.l.b16 %v4081
        %v4217 = vunpack.c.l.b16 %v4082
        %v4218 = vunpack.c.l.b16 %v4083
        %v4219 = vunpack.c.l.b16 %v4084
        %v4220 = vunpack.c.l.b16 %v4085
        %v4221 = vunpack.c.l.b16 %v4086
        %v4222 = vunpack.c.l.b16 %v4087
        %v4223 = vunpack.c.l.b16 %v4088
        %v4224 = vunpack.c.l.b16 %v4089
        %v4225 = vunpack.c.l.b16 %v4090
        %v4226 = vpack.c.b16 %v4163, %v4162
        %v4227 = vpack.c.b16 %v4165, %v4164
        %v4228 = vpack.c.b16 %v4167, %v4166
        %v4229 = vpack.c.b16 %v4169, %v4168
        %v4230 = vpack.c.b16 %v4171, %v4170
        %v4231 = vpack.c.b16 %v4173, %v4172
        %v4232 = vpack.c.b16 %v4175, %v4174
        %v4233 = vpack.c.b16 %v4177, %v4176
        %v4234 = vpack.c.b16 %v4179, %v4178
        %v4235 = vpack.c.b16 %v4181, %v4180
        %v4236 = vpack.c.b16 %v4183, %v4182
        %v4237 = vpack.c.b16 %v4185, %v4184
        %v4238 = vpack.c.b16 %v4187, %v4186
        %v4239 = vpack.c.b16 %v4189, %v4188
        %v4240 = vpack.c.b16 %v4191, %v4190
        %v4241 = vpack.c.b16 %v4193, %v4192
        %v4242 = vpack.c.b16 %v4195, %v4194
        %v4243 = vpack.c.b16 %v4197, %v4196
        %v4244 = vpack.c.b16 %v4199, %v4198
        %v4245 = vpack.c.b16 %v4201, %v4200
        %v4246 = vpack.c.b16 %v4203, %v4202
        %v4247 = vpack.c.b16 %v4205, %v4204
        %v4248 = vpack.c.b16 %v4207, %v4206
        %v4249 = vpack.c.b16 %v4209, %v4208
        %v4250 = vpack.c.b16 %v4211, %v4210
        %v4251 = vpack.c.b16 %v4213, %v4212
        %v4252 = vpack.c.b16 %v4215, %v4214
        %v4253 = vpack.c.b16 %v4217, %v4216
        %v4254 = vpack.c.b16 %v4219, %v4218
        %v4255 = vpack.c.b16 %v4221, %v4220
        %v4256 = vpack.c.b16 %v4223, %v4222
        %v4257 = vpack.c.b16 %v4225, %v4224
        %4290 = vmatprep.subr.bf16.mxu0 0
        %4291 = vmatpush1.bf16.msra.mxu0 %v4226
        %4292 = vmatprep.subr.bf16.mxu0 0
        %4293 = vmatpush1.bf16.msra.mxu0 %v4227
        %4294 = vmatprep.subr.bf16.mxu0 0
        %4295 = vmatpush1.bf16.msra.mxu0 %v4228
        %4296 = vmatprep.subr.bf16.mxu0 0
        %4297 = vmatpush1.bf16.msra.mxu0 %v4229
        %4298 = vmatprep.subr.bf16.mxu0 0
        %4299 = vmatpush1.bf16.msra.mxu0 %v4230
        %4300 = vmatprep.subr.bf16.mxu0 0
        %4301 = vmatpush1.bf16.msra.mxu0 %v4231
        %4302 = vmatprep.subr.bf16.mxu0 0
        %4303 = vmatpush1.bf16.msra.mxu0 %v4232
        %4304 = vmatprep.subr.bf16.mxu0 0
        %4305 = vmatpush1.bf16.msra.mxu0 %v4233
        %4306 = vmatprep.subr.bf16.mxu0 0
        %4307 = vmatpush1.bf16.msra.mxu0 %v4234
        %4308 = vmatprep.subr.bf16.mxu0 0
        %4309 = vmatpush1.bf16.msra.mxu0 %v4235
        %4310 = vmatprep.subr.bf16.mxu0 0
        %4311 = vmatpush1.bf16.msra.mxu0 %v4236
        %4312 = vmatprep.subr.bf16.mxu0 0
        %4313 = vmatpush1.bf16.msra.mxu0 %v4237
        %4314 = vmatprep.subr.bf16.mxu0 0
        %4315 = vmatpush1.bf16.msra.mxu0 %v4238
        %4316 = vmatprep.subr.bf16.mxu0 0
        %4317 = vmatpush1.bf16.msra.mxu0 %v4239
        %4318 = vmatprep.subr.bf16.mxu0 0
        %4319 = vmatpush1.bf16.msra.mxu0 %v4240
        %4320 = vmatprep.subr.bf16.mxu0 0
        %4321 = vmatpush1.bf16.msra.mxu0 %v4241
        %4322 = vmatprep.mubr.bf16.mxu0 %v4024
        %4323 = vmatmul.mubr.bf16.gmra.mrb[0].mxu0 %v4023
        %v4324 = vpop.f32.mrb[0].mxu0
        %v4325 = vadd.f32 %v4096, %v4324
        %v4326 = vpop.f32.mrb[0].mxu0
        %v4327 = vpop.f32.mrb[0].mxu0
        %v4328 = vadd.f32 %v4096, %v4327
        %v4329 = vpop.f32.mrb[0].mxu0
        %4330 = vdwg.mxu0
        %4331 = vmatprep.subr.bf16.mxu0 0
        %4332 = vmatpush1.bf16.msra.mxu0 %v4242
        %4333 = vmatprep.subr.bf16.mxu0 0
        %4334 = vmatpush1.bf16.msra.mxu0 %v4243
        %4335 = vmatprep.subr.bf16.mxu0 0
        %4336 = vmatpush1.bf16.msra.mxu0 %v4244
        %4337 = vmatprep.subr.bf16.mxu0 0
        %4338 = vmatpush1.bf16.msra.mxu0 %v4245
        %4339 = vmatprep.subr.bf16.mxu0 0
        %4340 = vmatpush1.bf16.msra.mxu0 %v4246
        %4341 = vmatprep.subr.bf16.mxu0 0
        %4342 = vmatpush1.bf16.msra.mxu0 %v4247
        %4343 = vmatprep.subr.bf16.mxu0 0
        %4344 = vmatpush1.bf16.msra.mxu0 %v4248
        %4345 = vmatprep.subr.bf16.mxu0 0
        %4346 = vmatpush1.bf16.msra.mxu0 %v4249
        %4347 = vmatprep.subr.bf16.mxu0 0
        %4348 = vmatpush1.bf16.msra.mxu0 %v4250
        %4349 = vmatprep.subr.bf16.mxu0 0
        %4350 = vmatpush1.bf16.msra.mxu0 %v4251
        %4351 = vmatprep.subr.bf16.mxu0 0
        %4352 = vmatpush1.bf16.msra.mxu0 %v4252
        %4353 = vmatprep.subr.bf16.mxu0 0
        %4354 = vmatpush1.bf16.msra.mxu0 %v4253
        %4355 = vmatprep.subr.bf16.mxu0 0
        %4356 = vmatpush1.bf16.msra.mxu0 %v4254
        %4357 = vmatprep.subr.bf16.mxu0 0
        %4358 = vmatpush1.bf16.msra.mxu0 %v4255
        %4359 = vmatprep.subr.bf16.mxu0 0
        %4360 = vmatpush1.bf16.msra.mxu0 %v4256
        %4361 = vmatprep.subr.bf16.mxu0 0
        %4362 = vmatpush1.bf16.msra.mxu0 %v4257
        %4363 = vmatprep.mubr.bf16.mxu0 %v4026
        %4364 = vmatmul.mubr.bf16.gmra.mrb[0].mxu0 %v4025
        %v4365 = vpop.f32.mrb[0].mxu0
        %v4366 = vadd.f32 %v4325, %v4365
        %v4367 = vpop.f32.mrb[0].mxu0
        %v4368 = vpop.f32.mrb[0].mxu0
        %v4369 = vadd.f32 %v4328, %v4368
        %v4370 = vpop.f32.mrb[0].mxu0
        %4371 = vdwg.mxu0
        %v4372 = vadd.f32 %v3640, %v4366
        %v4373 = vadd.f32 %v3641, %v4369
        %4374 = vst [vmem:[#allocation2] sm:$0xff] %v4372
        %4375 = vst [vmem:[#allocation2 + $0x8] sm:$0xff] %v4373
        %p4376 = scmp.eq.s32.totalorder %s43, 1
        // Predicated region
        $region125: #{tpu_custom_call.1} parent=87 // pred_check
          %p4377 = pneg %p4376
        $region126: #{tpu_custom_call.1} parent=87 // pred_check_branch
          %4379 = sbr.rel (%p4377) target = $region128
        $region127: #{tpu_custom_call.1} parent=87 // pred_region
          %v4380 = vld [vmem:[%s15] sm:$0x1]
          %v4381 = vld [vmem:[%s16] sm:$0x1]
          %4382 = vadd.xlane.f32.xlu0 %v4372
          %v4383 = vpop.xlane.xlu0 %4382
          %4384 = vadd.xlane.f32.xlu0 %v4373
          %v4385 = vpop.xlane.xlu0 %4384
          %v4386 = vmul.f32 %v4383, %v1098
          %v4387 = vmul.f32 %v4385, %v1098
          %v4388 = vsub.f32 %v4372, %v4386
          %v4389 = vsub.f32 %v4373, %v4387
          %v4390 = vmul.f32 %v4388, %v4388
          %v4391 = vmul.f32 %v4389, %v4389
          %4392 = vadd.xlane.f32.xlu0 %v4390
          %v4393 = vpop.xlane.xlu0 %4392
          %4394 = vadd.xlane.f32.xlu0 %v4391
          %v4395 = vpop.xlane.xlu0 %4394
          %v4396 = vmul.f32 %v4393, %v1098
          %v4397 = vmul.f32 %v4395, %v1098
          %v4398 = vadd.f32 %v4396, 1e-05
          %v4399 = vadd.f32 %v4397, 1e-05
          %v4400 = vrsqrt.pop %v4398
          %v4401 = vrsqrt.pop %v4399
          %v4402 = vmul.f32 %v4388, %v4400
          %v4403 = vmul.f32 %v4389, %v4401
          %v4405 = vlaneseq
          %v4406 = vshrl.u32 %v4405, 7
          %v4407 = vsub.s32 0, %v4406
          %v4408 = vrot.slane %v4380, %v4407
          %v4410 = vmul.f32 %v4402, %v4408
          %v4411 = vmul.f32 %v4403, %v4408
          %v4413 = vlaneseq
          %v4414 = vshrl.u32 %v4413, 7
          %v4415 = vsub.s32 0, %v4414
          %v4416 = vrot.slane %v4381, %v4415
          %v4418 = vadd.f32 %v4410, %v4416
          %v4419 = vadd.f32 %v4411, %v4416
          %4420 = vst [vmem:[%s872] sm:$0xff] %v4418
          %4421 = vst [vmem:[%s872 + $0x8] sm:$0xff] %v4419
        $region128: #{tpu_custom_call.1} parent=87 // pred_fallthru
          _
        %s4422 = sand.u32 %s480, 1
        %s4423 = scalar_lea.sflag [#allocation5], %s4422
        %s4424 = sand.u32 %s480, 1
        %s4425 = smul.addr %s4424, 16
        %s4426 = scalar_lea.vmem [#allocation15], %s4425
        // Predicated region
        $region129: #{tpu_custom_call.1} parent=87 // pred_check
          %p4427 = pneg %p490
        $region130: #{tpu_custom_call.1} parent=87 // pred_check_branch
          %4429 = sbr.rel (%p4427) target = $region132
        $region131: #{tpu_custom_call.1} parent=87 // pred_region
          %s4431 = ssub.s32 256, 256
          %4432 = vsyncadd %s4423, %s4431
          %s4433 = smul.addr %s42, 2
          %s4434 = smul.addr %s4433, 128
          %s4435 = scalar_lea.hbm %s17, %s4434
          %s4436 = sshll.u32 %s4426, 4
          %s4437 = int_to_ptr.vmem [resolvable:$true] %s4436
          %4442 = dma.vmem_to_hbm [thread:$0]  %s4437, 256, %s4435, %s4423, 128, 128, 8
        $region132: #{tpu_custom_call.1} parent=87 // pred_fallthru
          _
      $region88: #{tpu_custom_call.1} parent=5 // pred_fallthru
        _
      %p4443 = scmp.le.s32.totalorder 2, %s33
      // Predicated region
      $region133: #{tpu_custom_call.1} parent=5 // pred_check
        %p4444 = pneg %p4443
      $region134: #{tpu_custom_call.1} parent=5 // pred_check_branch
        %4446 = sbr.rel (%p4444) target = $region136
      $region135: #{tpu_custom_call.1} parent=5 // pred_region
        %s4447 = ssub.s32 %s33, 2
        // Predicated region
        $region137: #{tpu_custom_call.1} parent=135 // pred_check
          %p4448 = pneg %p496
        $region138: #{tpu_custom_call.1} parent=135 // pred_check_branch
          %4450 = sbr.rel (%p4448) target = $region140
        $region139: #{tpu_custom_call.1} parent=135 // pred_region
          %s4451 = sand.u32 %s481, 1
          %s4452 = scalar_lea.sflag [#allocation5], %s4451
          %s4453 = sand.u32 %s481, 1
          %s4454 = smul.addr %s4453, 16
          %s4455 = scalar_lea.vmem [#allocation15], %s4454
          %4456 = dma.done %s4452, 256
        $region140: #{tpu_custom_call.1} parent=135 // pred_fallthru
          _
      $region136: #{tpu_custom_call.1} parent=5 // pred_fallthru
        _
    $region6: #{tpu_custom_call.1} parent=1 // loop_footer
      %s37 = sadd.s32 1, %s33
    $region7: #{tpu_custom_call.1} parent=1 // loop_footer_branch
      %32 = sbr.rel target = $region3
    $region8: #{tpu_custom_call.1} parent=1 // loop_exit
      _
    %4457 = vsyncpa [#allocation4], 1
    %s4458 = scalar_lea.sflag [#allocation4], 1
    %4459 = vsyncpa %s4458, 1
    %4460 = vsyncpa [#allocation7], 1
    %s4461 = scalar_lea.sflag [#allocation7], 1
    %4462 = vsyncpa %s4461, 1
    %4463 = vsyncpa [#allocation10], 1
    %4464 = vsyncpa [#allocation5], 1
    %s4465 = scalar_lea.sflag [#allocation5], 1
    %4466 = vsyncpa %s4465, 1

</llo_original>
